<compile_context>
chip_gen: v7x
topology: tpu7x:2x2x1
jax: 0.10.0
libtpu: 0.0.40
codegen_flags: <defaults>
</compile_context>

<pallas_src>
import jax
import jax.numpy as jnp
from jax.experimental import pallas as pl
from jax.experimental.pallas import tpu as pltpu

IN_FEATURES = 784
HID1 = 1024
HID2 = 64
OUT_FEATURES = 10

_BATCH_TILE = 128          # batch tile for the large-batch path
_TILED_THRESHOLD = 256     # below this, grid=() (launch overhead dominates)


def mlp_kernel(x_ref, w1_ref, b1_ref, w2_ref, b2_ref, w3_ref, b3_ref, o_ref):
    # x arrives f32; cast to bf16 only at the MXU input. Weights are already
    # bf16. All accumulation + bias + ReLU happens in f32.
    x = x_ref[...].astype(jnp.bfloat16)

    # Layer 1: (TM,784)bf16 @ (784,1024)bf16 -> f32 acc, + b1, ReLU
    h1 = jnp.dot(x, w1_ref[...], preferred_element_type=jnp.float32)
    h1 = jnp.maximum(h1 + b1_ref[...], 0.0)

    # Layer 2: (TM,1024)bf16 @ (1024,64)bf16 -> f32 acc, + b2, ReLU
    h2 = jnp.dot(h1.astype(jnp.bfloat16), w2_ref[...],
                 preferred_element_type=jnp.float32)
    h2 = jnp.maximum(h2 + b2_ref[...], 0.0)

    # Layer 3: (TM,64)bf16 @ (64,10)bf16 -> f32 acc, + b3
    out = jnp.dot(h2.astype(jnp.bfloat16), w3_ref[...],
                  preferred_element_type=jnp.float32)
    o_ref[...] = (out + b3_ref[...]).astype(o_ref.dtype)


@jax.jit
def relu_network_forward(x_nchw, params):
    """x_nchw: (B, 1, 28, 28) float32. params: bf16 weights, f32 biases.
    Returns logits (B, 10) float32."""
    w1, b1, w2, b2, w3, b3 = params
    B = x_nchw.shape[0]
    x = x_nchw.reshape(B, -1)  # nn.Flatten: row-major over (C,H,W) -> (B, 784)

    out_shape = jax.ShapeDtypeStruct((B, OUT_FEATURES), jnp.float32)

    if B < _TILED_THRESHOLD:
        # Small batch: single fused call, no grid steps, everything resident.
        def full(arr):
            return pl.BlockSpec(arr.shape, lambda: (0,) * arr.ndim)

        return pl.pallas_call(
            mlp_kernel,
            out_shape=out_shape,
            grid=(),
            in_specs=[full(x), full(w1), full(b1), full(w2), full(b2),
                      full(w3), full(b3)],
            out_specs=pl.BlockSpec((B, OUT_FEATURES), lambda: (0, 0)),
            compiler_params=pltpu.CompilerParams(vmem_limit_bytes=16 << 20),
        )(x, w1, b1, w2, b2, w3, b3)

    # Large batch: tile the batch; weights/biases pinned to block 0 so they are
    # DMA'd once and stay VMEM-resident while batch tiles pipeline.
    tm = _BATCH_TILE

    def pinned(arr):
        return pl.BlockSpec(arr.shape, lambda i: (0,) * arr.ndim)

    return pl.pallas_call(
        mlp_kernel,
        out_shape=out_shape,
        grid=(pl.cdiv(B, tm),),
        in_specs=[pl.BlockSpec((tm, IN_FEATURES), lambda i: (i, 0)),
                  pinned(w1), pinned(b1), pinned(w2), pinned(b2),
                  pinned(w3), pinned(b3)],
        out_specs=pl.BlockSpec((tm, OUT_FEATURES), lambda i: (i, 0)),
        compiler_params=pltpu.CompilerParams(
            dimension_semantics=("parallel",),
            vmem_limit_bytes=32 << 20),
    )(x, w1, b1, w2, b2, w3, b3)


def init_params(key):
    """Deterministic init matching torch.nn.Linear default (Kaiming-uniform:
    U(-1/sqrt(fan_in), 1/sqrt(fan_in)) for both weight and bias).

    Weights are downcast to bf16 ONCE here (the kernel's MXU operand dtype);
    biases stay f32 for the f32 epilogue."""
    def linear(k, fan_in, fan_out):
        kw, kb = jax.random.split(k)
        bound = 1.0 / jnp.sqrt(fan_in)
        # stored as (in, out) so the kernel computes x @ w
        w = jax.random.uniform(kw, (fan_in, fan_out), jnp.float32, -bound, bound)
        b = jax.random.uniform(kb, (1, fan_out), jnp.float32, -bound, bound)
        return w.astype(jnp.bfloat16), b

    k1, k2, k3 = jax.random.split(key, 3)
    w1, b1 = linear(k1, IN_FEATURES, HID1)
    w2, b2 = linear(k2, HID1, HID2)
    w3, b3 = linear(k3, HID2, OUT_FEATURES)
    return (w1, b1, w2, b2, w3, b3)


def reference_forward(x_nchw, params):
    """Pure-JAX reference with the same math as the kernel (bf16 matmul
    operands, f32 accumulation + epilogue)."""
    w1, b1, w2, b2, w3, b3 = params
    x = x_nchw.reshape(x_nchw.shape[0], -1).astype(jnp.bfloat16)
    h1 = jnp.dot(x, w1, preferred_element_type=jnp.float32)
    h1 = jnp.maximum(h1 + b1, 0.0)
    h2 = jnp.dot(h1.astype(jnp.bfloat16), w2, preferred_element_type=jnp.float32)
    h2 = jnp.maximum(h2 + b2, 0.0)
    out = jnp.dot(h2.astype(jnp.bfloat16), w3, preferred_element_type=jnp.float32)
    return out + b3


if __name__ == "__main__":
    key = jax.random.PRNGKey(0)
    k_x, k_p, k_x2 = jax.random.split(key, 3)
    params = init_params(k_p)

    # Small-batch path (grid=()): MNIST-like B=8.
    B = 8
    x = jax.random.normal(k_x, (B, 1, 28, 28), jnp.float32)
    logits = relu_network_forward(x, params)
    logits = jax.block_until_ready(logits)
    ref = reference_forward(x, params)
    assert logits.shape == (B, OUT_FEATURES)
    assert jnp.allclose(logits, ref, atol=1e-2, rtol=1e-2), \
        "small-batch mismatch vs JAX reference"

    # Batch-tiled path (grid=(B/128,), weights pinned VMEM-resident).
    B2 = 256
    x2 = jax.random.normal(k_x2, (B2, 1, 28, 28), jnp.float32)
    logits2 = relu_network_forward(x2, params)
    logits2 = jax.block_until_ready(logits2)
    ref2 = reference_forward(x2, params)
    assert logits2.shape == (B2, OUT_FEATURES)
    assert jnp.allclose(logits2, ref2, atol=1e-2, rtol=1e-2), \
        "tiled-batch mismatch vs JAX reference"

    print("KERNEL_OK")
</pallas_src>

<mosaic_0001>
module attributes {stable_mosaic.version = 11 : i64} {
  func.func @mlp_kernel(%arg0: memref<8x784xf32, #tpu.memory_space<vmem>>, %arg1: memref<784x1024xbf16, #tpu.memory_space<vmem>>, %arg2: memref<1x1024xf32, #tpu.memory_space<vmem>>, %arg3: memref<1024x64xbf16, #tpu.memory_space<vmem>>, %arg4: memref<1x64xf32, #tpu.memory_space<vmem>>, %arg5: memref<64x10xbf16, #tpu.memory_space<vmem>>, %arg6: memref<1x10xf32, #tpu.memory_space<vmem>>, %arg7: memref<8x10xf32, #tpu.memory_space<vmem>>) attributes {dimension_semantics = [], scalar_prefetch = 0 : i64, scratch_operands = 0 : i64, tpu.core_type = #tpu.core_type<tc>} {
    %c0 = arith.constant 0 : index
    %c0_0 = arith.constant 0 : index
    %0 = vector.load %arg0[%c0, %c0_0] : memref<8x784xf32, #tpu.memory_space<vmem>>, vector<8x784xf32>
    %1 = arith.truncf %0 : vector<8x784xf32> to vector<8x784xbf16>
    %c0_1 = arith.constant 0 : index
    %c0_2 = arith.constant 0 : index
    %2 = vector.load %arg1[%c0_1, %c0_2] : memref<784x1024xbf16, #tpu.memory_space<vmem>>, vector<784x1024xbf16>
    %cst = arith.constant dense<0.000000e+00> : vector<8x1024xf32>
    %3 = tpu.matmul %1, %2, %cst {dimension_numbers = #tpu.dot_dimension_numbers<[1], [0], [0], [1], [0, 0, 1, 1], [], []>} : vector<8x784xbf16>, vector<784x1024xbf16>, vector<8x1024xf32> -> vector<8x1024xf32>
    %c0_3 = arith.constant 0 : index
    %c0_4 = arith.constant 0 : index
    %4 = vector.load %arg2[%c0_3, %c0_4] : memref<1x1024xf32, #tpu.memory_space<vmem>>, vector<1x1024xf32>
    %5 = vector.broadcast %4 : vector<1x1024xf32> to vector<8x1024xf32>
    %6 = arith.addf %3, %5 : vector<8x1024xf32>
    %cst_5 = arith.constant 0.000000e+00 : f32
    %7 = vector.broadcast %cst_5 : f32 to vector<8x1024xf32>
    %8 = arith.maximumf %6, %7 : vector<8x1024xf32>
    %9 = arith.truncf %8 : vector<8x1024xf32> to vector<8x1024xbf16>
    %c0_6 = arith.constant 0 : index
    %c0_7 = arith.constant 0 : index
    %10 = vector.load %arg3[%c0_6, %c0_7] : memref<1024x64xbf16, #tpu.memory_space<vmem>>, vector<1024x64xbf16>
    %cst_8 = arith.constant dense<0.000000e+00> : vector<8x64xf32>
    %11 = tpu.matmul %9, %10, %cst_8 {dimension_numbers = #tpu.dot_dimension_numbers<[1], [0], [0], [1], [0, 0, 1, 1], [], []>} : vector<8x1024xbf16>, vector<1024x64xbf16>, vector<8x64xf32> -> vector<8x64xf32>
    %c0_9 = arith.constant 0 : index
    %c0_10 = arith.constant 0 : index
    %12 = vector.load %arg4[%c0_9, %c0_10] : memref<1x64xf32, #tpu.memory_space<vmem>>, vector<1x64xf32>
    %13 = vector.broadcast %12 : vector<1x64xf32> to vector<8x64xf32>
    %14 = arith.addf %11, %13 : vector<8x64xf32>
    %cst_11 = arith.constant 0.000000e+00 : f32
    %15 = vector.broadcast %cst_11 : f32 to vector<8x64xf32>
    %16 = arith.maximumf %14, %15 : vector<8x64xf32>
    %17 = arith.truncf %16 : vector<8x64xf32> to vector<8x64xbf16>
    %c0_12 = arith.constant 0 : index
    %c0_13 = arith.constant 0 : index
    %18 = vector.load %arg5[%c0_12, %c0_13] : memref<64x10xbf16, #tpu.memory_space<vmem>>, vector<64x10xbf16>
    %cst_14 = arith.constant dense<0.000000e+00> : vector<8x10xf32>
    %19 = tpu.matmul %17, %18, %cst_14 {dimension_numbers = #tpu.dot_dimension_numbers<[1], [0], [0], [1], [0, 0, 1, 1], [], []>} : vector<8x64xbf16>, vector<64x10xbf16>, vector<8x10xf32> -> vector<8x10xf32>
    %c0_15 = arith.constant 0 : index
    %c0_16 = arith.constant 0 : index
    %20 = vector.load %arg6[%c0_15, %c0_16] : memref<1x10xf32, #tpu.memory_space<vmem>>, vector<1x10xf32>
    %21 = vector.broadcast %20 : vector<1x10xf32> to vector<8x10xf32>
    %22 = arith.addf %19, %21 : vector<8x10xf32>
    %c0_17 = arith.constant 0 : index
    %c0_18 = arith.constant 0 : index
    %23 = vector.load %arg7[%c0_17, %c0_18] : memref<8x10xf32, #tpu.memory_space<vmem>>, vector<8x10xf32>
    tpu.vector_store %arg7[%c0_17, %c0_18], %22 {strides = array<i32>} : memref<8x10xf32, #tpu.memory_space<vmem>>, vector<8x10xf32>,
    return
  }
}

</mosaic_0001>

<llo_original>
// kernel: relu_network_forward.1
$region0: #{relu_network_forward.1}
  #allocation0 [shape = 'u32[]', space=smem, size = 0x4, offset = 0x4, fixed_abs, tag = 'smem constant byte address 0x4 - core index']
  #allocation1 [shape = 'u32[144,128]{1,0:T(1,128)}', space=vmem, size = 0x12000, scoped, tag = 'internal scratch']
  %s0 = inlined_call_operand.vmem [shape: f32[8,784], index: 0, kind: input, shape index: {}]
  %s1 = inlined_call_operand.hbm [shape: bf16[784,1024], index: 1, kind: input, shape index: {}]
  %s2 = inlined_call_operand.hbm [shape: f32[1,1024], index: 2, kind: input, shape index: {}]
  %s3 = inlined_call_operand.vmem [shape: bf16[1024,64], index: 3, kind: input, shape index: {}]
  %s4 = inlined_call_operand.hbm [shape: f32[1,64], index: 4, kind: input, shape index: {}]
  %s5 = inlined_call_operand.vmem [shape: bf16[64,10], index: 5, kind: input, shape index: {}]
  %s6 = inlined_call_operand.hbm [shape: f32[1,10], index: 6, kind: input, shape index: {}]
  %s7 = inlined_call_operand.hbm [shape: f32[8,10], index: 7, kind: output, shape index: {}]
  %s8 = sld [smem:[#allocation0]]
  $region54: #{relu_network_forward.1} parent=0
    _
  %s10 = ssub.s32 1, %s8
  %s11 = scalar_select 0, %s10, %s8
  $region1: #{relu_network_forward.1} parent=0
    #allocation2 [shape = 'u8[1605632]{0}', space=vmem, size = 0x188000, scoped, tag = 'input window, operand 1, single buffered']
    #allocation3 [shape = 's32[1]{0}', space=sflag, size = 0x4, scoped, tag = 'scoped memory for relu_network_forward.1']
    #allocation4 [shape = 's32[1]{0}', space=sflag, size = 0x4, scoped, tag = 'scoped memory for relu_network_forward.1']
    #allocation5 [shape = 'u8[4096]{0}', space=vmem, size = 0x1000, scoped, tag = 'input window, operand 2, single buffered']
    #allocation6 [shape = 's32[1]{0}', space=sflag, size = 0x4, scoped, tag = 'scoped memory for relu_network_forward.1']
    #allocation7 [shape = 'u8[512]{0}', space=vmem, size = 0x400, scoped, tag = 'input window, operand 4, single buffered']
    #allocation8 [shape = 'u8[512]{0}', space=vmem, size = 0x400, scoped, tag = 'input window, operand 6, single buffered']
    #allocation9 [shape = 's32[1]{0}', space=sflag, size = 0x4, scoped, tag = 'scoped memory for relu_network_forward.1']
    #allocation10 [shape = 'u8[4096]{0}', space=vmem, size = 0x1000, scoped, tag = 'output window, operand 0, single buffered']
    %12 = vsyncpa [#allocation3], 0
    %13 = vsyncpa [#allocation6], 0
    %14 = vsyncpa [#allocation9], 0
    %15 = vsyncpa [#allocation4], 0
    // Predicated region
    $region2: #{relu_network_forward.1} parent=1 // pred_check
      _
    $region3: #{relu_network_forward.1} parent=1 // pred_check_branch
      %17 = sbr.rel (0) target = $region5
    $region4: #{relu_network_forward.1} parent=1 // pred_region
      _
    $region5: #{relu_network_forward.1} parent=1 // pred_fallthru
      _
    // Predicated region
    $region6: #{relu_network_forward.1} parent=1 // pred_check
      _
    $region7: #{relu_network_forward.1} parent=1 // pred_check_branch
      %19 = sbr.rel (0) target = $region9
    $region8: #{relu_network_forward.1} parent=1 // pred_region
      %s21 = ssub.s32 50176, 50176
      %22 = vsyncadd [#allocation3], %s21
      %s23 = sshll.u32 [#allocation2], 4
      %s24 = int_to_ptr.vmem [resolvable:$true] %s23
      %29 = dma.hbm_to_vmem [thread:$0]  %s1, 50176, %s24, [#allocation3], 512, 512, 32
    $region9: #{relu_network_forward.1} parent=1 // pred_fallthru
      _
    // Predicated region
    $region10: #{relu_network_forward.1} parent=1 // pred_check
      _
    $region11: #{relu_network_forward.1} parent=1 // pred_check_branch
      %31 = sbr.rel (0) target = $region13
    $region12: #{relu_network_forward.1} parent=1 // pred_region
      %s33 = ssub.s32 128, 128
      %34 = vsyncadd [#allocation6], %s33
      %s36 = sshll.u32 [#allocation5], 4
      %s37 = int_to_ptr.vmem [resolvable:$true] %s36
      %39 = dma.hbm_to_vmem [thread:$0]  %s2, 128, %s37, [#allocation6]
    $region13: #{relu_network_forward.1} parent=1 // pred_fallthru
      _
    // Predicated region
    $region14: #{relu_network_forward.1} parent=1 // pred_check
      _
    $region15: #{relu_network_forward.1} parent=1 // pred_check_branch
      %41 = sbr.rel (0) target = $region17
    $region16: #{relu_network_forward.1} parent=1 // pred_region
      _
    $region17: #{relu_network_forward.1} parent=1 // pred_fallthru
      _
    // Predicated region
    $region18: #{relu_network_forward.1} parent=1 // pred_check
      _
    $region19: #{relu_network_forward.1} parent=1 // pred_check_branch
      %43 = sbr.rel (0) target = $region21
    $region20: #{relu_network_forward.1} parent=1 // pred_region
      %s45 = ssub.s32 16, 16
      %46 = vsyncadd [#allocation6], %s45
      %s48 = sshll.u32 [#allocation7], 4
      %s49 = int_to_ptr.vmem [resolvable:$true] %s48
      %51 = dma.hbm_to_vmem [thread:$0]  %s4, 16, %s49, [#allocation6]
    $region21: #{relu_network_forward.1} parent=1 // pred_fallthru
      _
    // Predicated region
    $region22: #{relu_network_forward.1} parent=1 // pred_check
      _
    $region23: #{relu_network_forward.1} parent=1 // pred_check_branch
      %53 = sbr.rel (0) target = $region25
    $region24: #{relu_network_forward.1} parent=1 // pred_region
      _
    $region25: #{relu_network_forward.1} parent=1 // pred_fallthru
      _
    // Predicated region
    $region26: #{relu_network_forward.1} parent=1 // pred_check
      _
    $region27: #{relu_network_forward.1} parent=1 // pred_check_branch
      %55 = sbr.rel (0) target = $region29
    $region28: #{relu_network_forward.1} parent=1 // pred_region
      %s57 = ssub.s32 16, 16
      %58 = vsyncadd [#allocation9], %s57
      %s60 = sshll.u32 [#allocation8], 4
      %s61 = int_to_ptr.vmem [resolvable:$true] %s60
      %63 = dma.hbm_to_vmem [thread:$0]  %s6, 16, %s61, [#allocation9]
    $region29: #{relu_network_forward.1} parent=1 // pred_fallthru
      _
    // Predicated region
    $region30: #{relu_network_forward.1} parent=1 // pred_check
      _
    $region31: #{relu_network_forward.1} parent=1 // pred_check_branch
      %65 = sbr.rel (0) target = $region33
    $region32: #{relu_network_forward.1} parent=1 // pred_region
      %66 = dma.done [#allocation3], 50176
    $region33: #{relu_network_forward.1} parent=1 // pred_fallthru
      _
    // Predicated region
    $region34: #{relu_network_forward.1} parent=1 // pred_check
      _
    $region35: #{relu_network_forward.1} parent=1 // pred_check_branch
      %68 = sbr.rel (0) target = $region37
    $region36: #{relu_network_forward.1} parent=1 // pred_region
      %69 = dma.done [#allocation6], 128
    $region37: #{relu_network_forward.1} parent=1 // pred_fallthru
      _
    // Predicated region
    $region38: #{relu_network_forward.1} parent=1 // pred_check
      _
    $region39: #{relu_network_forward.1} parent=1 // pred_check_branch
      %71 = sbr.rel (0) target = $region41
    $region40: #{relu_network_forward.1} parent=1 // pred_region
      %72 = dma.done [#allocation6], 16
    $region41: #{relu_network_forward.1} parent=1 // pred_fallthru
      _
    // Predicated region
    $region42: #{relu_network_forward.1} parent=1 // pred_check
      _
    $region43: #{relu_network_forward.1} parent=1 // pred_check_branch
      %74 = sbr.rel (0) target = $region45
    $region44: #{relu_network_forward.1} parent=1 // pred_region
      %75 = dma.done [#allocation9], 16
    $region45: #{relu_network_forward.1} parent=1 // pred_fallthru
      _
    %v77 = vld [vmem:[%s0] sm:$0xff]
    %v78 = vld [vmem:[%s0 + $0x8] sm:$0xff]
    %v79 = vld [vmem:[%s0 + $0x10] sm:$0xff]
    %v80 = vld [vmem:[%s0 + $0x18] sm:$0xff]
    %v81 = vld [vmem:[%s0 + $0x20] sm:$0xff]
    %v82 = vld [vmem:[%s0 + $0x28] sm:$0xff]
    %v83 = vld [vmem:[%s0 + $0x30] sm:$0xff]
    %v84 = vpack.c.bf16 %v77, %v77
    %v85 = vpack.c.bf16 %v78, %v78
    %v86 = vpack.c.bf16 %v79, %v79
    %v87 = vpack.c.bf16 %v80, %v80
    %v88 = vpack.c.bf16 %v81, %v81
    %v89 = vpack.c.bf16 %v82, %v82
    %v90 = vpack.c.bf16 %v83, %v83
    %v91 = vld [vmem:[#allocation2] sm:$0xff]
    %v92 = vld [vmem:[#allocation2 + $0x8] sm:$0xff]
    %v93 = vld [vmem:[#allocation2 + $0x10] sm:$0xff]
    %v94 = vld [vmem:[#allocation2 + $0x18] sm:$0xff]
    %v95 = vld [vmem:[#allocation2 + $0x20] sm:$0xff]
    %v96 = vld [vmem:[#allocation2 + $0x28] sm:$0xff]
    %v97 = vld [vmem:[#allocation2 + $0x30] sm:$0xff]
    %v98 = vld [vmem:[#allocation2 + $0x38] sm:$0xff]
    %v99 = vld [vmem:[#allocation2 + $0x40] sm:$0xff]
    %v100 = vld [vmem:[#allocation2 + $0x48] sm:$0xff]
    %v101 = vld [vmem:[#allocation2 + $0x50] sm:$0xff]
    %v102 = vld [vmem:[#allocation2 + $0x58] sm:$0xff]
    %v103 = vld [vmem:[#allocation2 + $0x60] sm:$0xff]
    %v104 = vld [vmem:[#allocation2 + $0x68] sm:$0xff]
    %v105 = vld [vmem:[#allocation2 + $0x70] sm:$0xff]
    %v106 = vld [vmem:[#allocation2 + $0x78] sm:$0xff]
    %v107 = vld [vmem:[#allocation2 + $0x80] sm:$0xff]
    %v108 = vld [vmem:[#allocation2 + $0x88] sm:$0xff]
    %v109 = vld [vmem:[#allocation2 + $0x90] sm:$0xff]
    %v110 = vld [vmem:[#allocation2 + $0x98] sm:$0xff]
    %v111 = vld [vmem:[#allocation2 + $0xa0] sm:$0xff]
    %v112 = vld [vmem:[#allocation2 + $0xa8] sm:$0xff]
    %v113 = vld [vmem:[#allocation2 + $0xb0] sm:$0xff]
    %v114 = vld [vmem:[#allocation2 + $0xb8] sm:$0xff]
    %v115 = vld [vmem:[#allocation2 + $0xc0] sm:$0xff]
    %v116 = vld [vmem:[#allocation2 + $0xc8] sm:$0xff]
    %v117 = vld [vmem:[#allocation2 + $0xd0] sm:$0xff]
    %v118 = vld [vmem:[#allocation2 + $0xd8] sm:$0xff]
    %v119 = vld [vmem:[#allocation2 + $0xe0] sm:$0xff]
    %v120 = vld [vmem:[#allocation2 + $0xe8] sm:$0xff]
    %v121 = vld [vmem:[#allocation2 + $0xf0] sm:$0xff]
    %v122 = vld [vmem:[#allocation2 + $0xf8] sm:$0xff]
    %v123 = vld [vmem:[#allocation2 + $0x100] sm:$0xff]
    %v124 = vld [vmem:[#allocation2 + $0x108] sm:$0xff]
    %v125 = vld [vmem:[#allocation2 + $0x110] sm:$0xff]
    %v126 = vld [vmem:[#allocation2 + $0x118] sm:$0xff]
    %v127 = vld [vmem:[#allocation2 + $0x120] sm:$0xff]
    %v128 = vld [vmem:[#allocation2 + $0x128] sm:$0xff]
    %v129 = vld [vmem:[#allocation2 + $0x130] sm:$0xff]
    %v130 = vld [vmem:[#allocation2 + $0x138] sm:$0xff]
    %v131 = vld [vmem:[#allocation2 + $0x140] sm:$0xff]
    %v132 = vld [vmem:[#allocation2 + $0x148] sm:$0xff]
    %v133 = vld [vmem:[#allocation2 + $0x150] sm:$0xff]
    %v134 = vld [vmem:[#allocation2 + $0x158] sm:$0xff]
    %v135 = vld [vmem:[#allocation2 + $0x160] sm:$0xff]
    %v136 = vld [vmem:[#allocation2 + $0x168] sm:$0xff]
    %v137 = vld [vmem:[#allocation2 + $0x170] sm:$0xff]
    %v138 = vld [vmem:[#allocation2 + $0x178] sm:$0xff]
    %v139 = vld [vmem:[#allocation2 + $0x180] sm:$0xff]
    %v140 = vld [vmem:[#allocation2 + $0x188] sm:$0xff]
    %v141 = vld [vmem:[#allocation2 + $0x190] sm:$0xff]
    %v142 = vld [vmem:[#allocation2 + $0x198] sm:$0xff]
    %v143 = vld [vmem:[#allocation2 + $0x1a0] sm:$0xff]
    %v144 = vld [vmem:[#allocation2 + $0x1a8] sm:$0xff]
    %v145 = vld [vmem:[#allocation2 + $0x1b0] sm:$0xff]
    %v146 = vld [vmem:[#allocation2 + $0x1b8] sm:$0xff]
    %v147 = vld [vmem:[#allocation2 + $0x1c0] sm:$0xff]
    %v148 = vld [vmem:[#allocation2 + $0x1c8] sm:$0xff]
    %v149 = vld [vmem:[#allocation2 + $0x1d0] sm:$0xff]
    %v150 = vld [vmem:[#allocation2 + $0x1d8] sm:$0xff]
    %v151 = vld [vmem:[#allocation2 + $0x1e0] sm:$0xff]
    %v152 = vld [vmem:[#allocation2 + $0x1e8] sm:$0xff]
    %v153 = vld [vmem:[#allocation2 + $0x1f0] sm:$0xff]
    %v154 = vld [vmem:[#allocation2 + $0x1f8] sm:$0xff]
    %v155 = vld [vmem:[#allocation2 + $0x200] sm:$0xff]
    %v156 = vld [vmem:[#allocation2 + $0x208] sm:$0xff]
    %v157 = vld [vmem:[#allocation2 + $0x210] sm:$0xff]
    %v158 = vld [vmem:[#allocation2 + $0x218] sm:$0xff]
    %v159 = vld [vmem:[#allocation2 + $0x220] sm:$0xff]
    %v160 = vld [vmem:[#allocation2 + $0x228] sm:$0xff]
    %v161 = vld [vmem:[#allocation2 + $0x230] sm:$0xff]
    %v162 = vld [vmem:[#allocation2 + $0x238] sm:$0xff]
    %v163 = vld [vmem:[#allocation2 + $0x240] sm:$0xff]
    %v164 = vld [vmem:[#allocation2 + $0x248] sm:$0xff]
    %v165 = vld [vmem:[#allocation2 + $0x250] sm:$0xff]
    %v166 = vld [vmem:[#allocation2 + $0x258] sm:$0xff]
    %v167 = vld [vmem:[#allocation2 + $0x260] sm:$0xff]
    %v168 = vld [vmem:[#allocation2 + $0x268] sm:$0xff]
    %v169 = vld [vmem:[#allocation2 + $0x270] sm:$0xff]
    %v170 = vld [vmem:[#allocation2 + $0x278] sm:$0xff]
    %v171 = vld [vmem:[#allocation2 + $0x280] sm:$0xff]
    %v172 = vld [vmem:[#allocation2 + $0x288] sm:$0xff]
    %v173 = vld [vmem:[#allocation2 + $0x290] sm:$0xff]
    %v174 = vld [vmem:[#allocation2 + $0x298] sm:$0xff]
    %v175 = vld [vmem:[#allocation2 + $0x2a0] sm:$0xff]
    %v176 = vld [vmem:[#allocation2 + $0x2a8] sm:$0xff]
    %v177 = vld [vmem:[#allocation2 + $0x2b0] sm:$0xff]
    %v178 = vld [vmem:[#allocation2 + $0x2b8] sm:$0xff]
    %v179 = vld [vmem:[#allocation2 + $0x2c0] sm:$0xff]
    %v180 = vld [vmem:[#allocation2 + $0x2c8] sm:$0xff]
    %v181 = vld [vmem:[#allocation2 + $0x2d0] sm:$0xff]
    %v182 = vld [vmem:[#allocation2 + $0x2d8] sm:$0xff]
    %v183 = vld [vmem:[#allocation2 + $0x2e0] sm:$0xff]
    %v184 = vld [vmem:[#allocation2 + $0x2e8] sm:$0xff]
    %v185 = vld [vmem:[#allocation2 + $0x2f0] sm:$0xff]
    %v186 = vld [vmem:[#allocation2 + $0x2f8] sm:$0xff]
    %v187 = vld [vmem:[#allocation2 + $0x300] sm:$0xff]
    %v188 = vld [vmem:[#allocation2 + $0x308] sm:$0xff]
    %v189 = vld [vmem:[#allocation2 + $0x310] sm:$0xff]
    %v190 = vld [vmem:[#allocation2 + $0x318] sm:$0xff]
    %v191 = vld [vmem:[#allocation2 + $0x320] sm:$0xff]
    %v192 = vld [vmem:[#allocation2 + $0x328] sm:$0xff]
    %v193 = vld [vmem:[#allocation2 + $0x330] sm:$0xff]
    %v194 = vld [vmem:[#allocation2 + $0x338] sm:$0xff]
    %v195 = vld [vmem:[#allocation2 + $0x340] sm:$0xff]
    %v196 = vld [vmem:[#allocation2 + $0x348] sm:$0xff]
    %v197 = vld [vmem:[#allocation2 + $0x350] sm:$0xff]
    %v198 = vld [vmem:[#allocation2 + $0x358] sm:$0xff]
    %v199 = vld [vmem:[#allocation2 + $0x360] sm:$0xff]
    %v200 = vld [vmem:[#allocation2 + $0x368] sm:$0xff]
    %v201 = vld [vmem:[#allocation2 + $0x370] sm:$0xff]
    %v202 = vld [vmem:[#allocation2 + $0x378] sm:$0xff]
    %v203 = vld [vmem:[#allocation2 + $0x380] sm:$0xff]
    %v204 = vld [vmem:[#allocation2 + $0x388] sm:$0xff]
    %v205 = vld [vmem:[#allocation2 + $0x390] sm:$0xff]
    %v206 = vld [vmem:[#allocation2 + $0x398] sm:$0xff]
    %v207 = vld [vmem:[#allocation2 + $0x3a0] sm:$0xff]
    %v208 = vld [vmem:[#allocation2 + $0x3a8] sm:$0xff]
    %v209 = vld [vmem:[#allocation2 + $0x3b0] sm:$0xff]
    %v210 = vld [vmem:[#allocation2 + $0x3b8] sm:$0xff]
    %v211 = vld [vmem:[#allocation2 + $0x3c0] sm:$0xff]
    %v212 = vld [vmem:[#allocation2 + $0x3c8] sm:$0xff]
    %v213 = vld [vmem:[#allocation2 + $0x3d0] sm:$0xff]
    %v214 = vld [vmem:[#allocation2 + $0x3d8] sm:$0xff]
    %v215 = vld [vmem:[#allocation2 + $0x3e0] sm:$0xff]
    %v216 = vld [vmem:[#allocation2 + $0x3e8] sm:$0xff]
    %v217 = vld [vmem:[#allocation2 + $0x3f0] sm:$0xff]
    %v218 = vld [vmem:[#allocation2 + $0x3f8] sm:$0xff]
    %v219 = vld [vmem:[#allocation2 + $0x400] sm:$0xff]
    %v220 = vld [vmem:[#allocation2 + $0x408] sm:$0xff]
    %v221 = vld [vmem:[#allocation2 + $0x410] sm:$0xff]
    %v222 = vld [vmem:[#allocation2 + $0x418] sm:$0xff]
    %v223 = vld [vmem:[#allocation2 + $0x420] sm:$0xff]
    %v224 = vld [vmem:[#allocation2 + $0x428] sm:$0xff]
    %v225 = vld [vmem:[#allocation2 + $0x430] sm:$0xff]
    %v226 = vld [vmem:[#allocation2 + $0x438] sm:$0xff]
    %v227 = vld [vmem:[#allocation2 + $0x440] sm:$0xff]
    %v228 = vld [vmem:[#allocation2 + $0x448] sm:$0xff]
    %v229 = vld [vmem:[#allocation2 + $0x450] sm:$0xff]
    %v230 = vld [vmem:[#allocation2 + $0x458] sm:$0xff]
    %v231 = vld [vmem:[#allocation2 + $0x460] sm:$0xff]
    %v232 = vld [vmem:[#allocation2 + $0x468] sm:$0xff]
    %v233 = vld [vmem:[#allocation2 + $0x470] sm:$0xff]
    %v234 = vld [vmem:[#allocation2 + $0x478] sm:$0xff]
    %v235 = vld [vmem:[#allocation2 + $0x480] sm:$0xff]
    %v236 = vld [vmem:[#allocation2 + $0x488] sm:$0xff]
    %v237 = vld [vmem:[#allocation2 + $0x490] sm:$0xff]
    %v238 = vld [vmem:[#allocation2 + $0x498] sm:$0xff]
    %v239 = vld [vmem:[#allocation2 + $0x4a0] sm:$0xff]
    %v240 = vld [vmem:[#allocation2 + $0x4a8] sm:$0xff]
    %v241 = vld [vmem:[#allocation2 + $0x4b0] sm:$0xff]
    %v242 = vld [vmem:[#allocation2 + $0x4b8] sm:$0xff]
    %v243 = vld [vmem:[#allocation2 + $0x4c0] sm:$0xff]
    %v244 = vld [vmem:[#allocation2 + $0x4c8] sm:$0xff]
    %v245 = vld [vmem:[#allocation2 + $0x4d0] sm:$0xff]
    %v246 = vld [vmem:[#allocation2 + $0x4d8] sm:$0xff]
    %v247 = vld [vmem:[#allocation2 + $0x4e0] sm:$0xff]
    %v248 = vld [vmem:[#allocation2 + $0x4e8] sm:$0xff]
    %v249 = vld [vmem:[#allocation2 + $0x4f0] sm:$0xff]
    %v250 = vld [vmem:[#allocation2 + $0x4f8] sm:$0xff]
    %v251 = vld [vmem:[#allocation2 + $0x500] sm:$0xff]
    %v252 = vld [vmem:[#allocation2 + $0x508] sm:$0xff]
    %v253 = vld [vmem:[#allocation2 + $0x510] sm:$0xff]
    %v254 = vld [vmem:[#allocation2 + $0x518] sm:$0xff]
    %v255 = vld [vmem:[#allocation2 + $0x520] sm:$0xff]
    %v256 = vld [vmem:[#allocation2 + $0x528] sm:$0xff]
    %v257 = vld [vmem:[#allocation2 + $0x530] sm:$0xff]
    %v258 = vld [vmem:[#allocation2 + $0x538] sm:$0xff]
    %v259 = vld [vmem:[#allocation2 + $0x540] sm:$0xff]
    %v260 = vld [vmem:[#allocation2 + $0x548] sm:$0xff]
    %v261 = vld [vmem:[#allocation2 + $0x550] sm:$0xff]
    %v262 = vld [vmem:[#allocation2 + $0x558] sm:$0xff]
    %v263 = vld [vmem:[#allocation2 + $0x560] sm:$0xff]
    %v264 = vld [vmem:[#allocation2 + $0x568] sm:$0xff]
    %v265 = vld [vmem:[#allocation2 + $0x570] sm:$0xff]
    %v266 = vld [vmem:[#allocation2 + $0x578] sm:$0xff]
    %v267 = vld [vmem:[#allocation2 + $0x580] sm:$0xff]
    %v268 = vld [vmem:[#allocation2 + $0x588] sm:$0xff]
    %v269 = vld [vmem:[#allocation2 + $0x590] sm:$0xff]
    %v270 = vld [vmem:[#allocation2 + $0x598] sm:$0xff]
    %v271 = vld [vmem:[#allocation2 + $0x5a0] sm:$0xff]
    %v272 = vld [vmem:[#allocation2 + $0x5a8] sm:$0xff]
    %v273 = vld [vmem:[#allocation2 + $0x5b0] sm:$0xff]
    %v274 = vld [vmem:[#allocation2 + $0x5b8] sm:$0xff]
    %v275 = vld [vmem:[#allocation2 + $0x5c0] sm:$0xff]
    %v276 = vld [vmem:[#allocation2 + $0x5c8] sm:$0xff]
    %v277 = vld [vmem:[#allocation2 + $0x5d0] sm:$0xff]
    %v278 = vld [vmem:[#allocation2 + $0x5d8] sm:$0xff]
    %v279 = vld [vmem:[#allocation2 + $0x5e0] sm:$0xff]
    %v280 = vld [vmem:[#allocation2 + $0x5e8] sm:$0xff]
    %v281 = vld [vmem:[#allocation2 + $0x5f0] sm:$0xff]
    %v282 = vld [vmem:[#allocation2 + $0x5f8] sm:$0xff]
    %v283 = vld [vmem:[#allocation2 + $0x600] sm:$0xff]
    %v284 = vld [vmem:[#allocation2 + $0x608] sm:$0xff]
    %v285 = vld [vmem:[#allocation2 + $0x610] sm:$0xff]
    %v286 = vld [vmem:[#allocation2 + $0x618] sm:$0xff]
    %v287 = vld [vmem:[#allocation2 + $0x620] sm:$0xff]
    %v288 = vld [vmem:[#allocation2 + $0x628] sm:$0xff]
    %v289 = vld [vmem:[#allocation2 + $0x630] sm:$0xff]
    %v290 = vld [vmem:[#allocation2 + $0x638] sm:$0xff]
    %v291 = vld [vmem:[#allocation2 + $0x640] sm:$0xff]
    %v292 = vld [vmem:[#allocation2 + $0x648] sm:$0xff]
    %v293 = vld [vmem:[#allocation2 + $0x650] sm:$0xff]
    %v294 = vld [vmem:[#allocation2 + $0x658] sm:$0xff]
    %v295 = vld [vmem:[#allocation2 + $0x660] sm:$0xff]
    %v296 = vld [vmem:[#allocation2 + $0x668] sm:$0xff]
    %v297 = vld [vmem:[#allocation2 + $0x670] sm:$0xff]
    %v298 = vld [vmem:[#allocation2 + $0x678] sm:$0xff]
    %v299 = vld [vmem:[#allocation2 + $0x680] sm:$0xff]
    %v300 = vld [vmem:[#allocation2 + $0x688] sm:$0xff]
    %v301 = vld [vmem:[#allocation2 + $0x690] sm:$0xff]
    %v302 = vld [vmem:[#allocation2 + $0x698] sm:$0xff]
    %v303 = vld [vmem:[#allocation2 + $0x6a0] sm:$0xff]
    %v304 = vld [vmem:[#allocation2 + $0x6a8] sm:$0xff]
    %v305 = vld [vmem:[#allocation2 + $0x6b0] sm:$0xff]
    %v306 = vld [vmem:[#allocation2 + $0x6b8] sm:$0xff]
    %v307 = vld [vmem:[#allocation2 + $0x6c0] sm:$0xff]
    %v308 = vld [vmem:[#allocation2 + $0x6c8] sm:$0xff]
    %v309 = vld [vmem:[#allocation2 + $0x6d0] sm:$0xff]
    %v310 = vld [vmem:[#allocation2 + $0x6d8] sm:$0xff]
    %v311 = vld [vmem:[#allocation2 + $0x6e0] sm:$0xff]
    %v312 = vld [vmem:[#allocation2 + $0x6e8] sm:$0xff]
    %v313 = vld [vmem:[#allocation2 + $0x6f0] sm:$0xff]
    %v314 = vld [vmem:[#allocation2 + $0x6f8] sm:$0xff]
    %v315 = vld [vmem:[#allocation2 + $0x700] sm:$0xff]
    %v316 = vld [vmem:[#allocation2 + $0x708] sm:$0xff]
    %v317 = vld [vmem:[#allocation2 + $0x710] sm:$0xff]
    %v318 = vld [vmem:[#allocation2 + $0x718] sm:$0xff]
    %v319 = vld [vmem:[#allocation2 + $0x720] sm:$0xff]
    %v320 = vld [vmem:[#allocation2 + $0x728] sm:$0xff]
    %v321 = vld [vmem:[#allocation2 + $0x730] sm:$0xff]
    %v322 = vld [vmem:[#allocation2 + $0x738] sm:$0xff]
    %v323 = vld [vmem:[#allocation2 + $0x740] sm:$0xff]
    %v324 = vld [vmem:[#allocation2 + $0x748] sm:$0xff]
    %v325 = vld [vmem:[#allocation2 + $0x750] sm:$0xff]
    %v326 = vld [vmem:[#allocation2 + $0x758] sm:$0xff]
    %v327 = vld [vmem:[#allocation2 + $0x760] sm:$0xff]
    %v328 = vld [vmem:[#allocation2 + $0x768] sm:$0xff]
    %v329 = vld [vmem:[#allocation2 + $0x770] sm:$0xff]
    %v330 = vld [vmem:[#allocation2 + $0x778] sm:$0xff]
    %v331 = vld [vmem:[#allocation2 + $0x780] sm:$0xff]
    %v332 = vld [vmem:[#allocation2 + $0x788] sm:$0xff]
    %v333 = vld [vmem:[#allocation2 + $0x790] sm:$0xff]
    %v334 = vld [vmem:[#allocation2 + $0x798] sm:$0xff]
    %v335 = vld [vmem:[#allocation2 + $0x7a0] sm:$0xff]
    %v336 = vld [vmem:[#allocation2 + $0x7a8] sm:$0xff]
    %v337 = vld [vmem:[#allocation2 + $0x7b0] sm:$0xff]
    %v338 = vld [vmem:[#allocation2 + $0x7b8] sm:$0xff]
    %v339 = vld [vmem:[#allocation2 + $0x7c0] sm:$0xff]
    %v340 = vld [vmem:[#allocation2 + $0x7c8] sm:$0xff]
    %v341 = vld [vmem:[#allocation2 + $0x7d0] sm:$0xff]
    %v342 = vld [vmem:[#allocation2 + $0x7d8] sm:$0xff]
    %v343 = vld [vmem:[#allocation2 + $0x7e0] sm:$0xff]
    %v344 = vld [vmem:[#allocation2 + $0x7e8] sm:$0xff]
    %v345 = vld [vmem:[#allocation2 + $0x7f0] sm:$0xff]
    %v346 = vld [vmem:[#allocation2 + $0x7f8] sm:$0xff]
    %v347 = vld [vmem:[#allocation2 + $0x800] sm:$0xff]
    %v348 = vld [vmem:[#allocation2 + $0x808] sm:$0xff]
    %v349 = vld [vmem:[#allocation2 + $0x810] sm:$0xff]
    %v350 = vld [vmem:[#allocation2 + $0x818] sm:$0xff]
    %v351 = vld [vmem:[#allocation2 + $0x820] sm:$0xff]
    %v352 = vld [vmem:[#allocation2 + $0x828] sm:$0xff]
    %v353 = vld [vmem:[#allocation2 + $0x830] sm:$0xff]
    %v354 = vld [vmem:[#allocation2 + $0x838] sm:$0xff]
    %v355 = vld [vmem:[#allocation2 + $0x840] sm:$0xff]
    %v356 = vld [vmem:[#allocation2 + $0x848] sm:$0xff]
    %v357 = vld [vmem:[#allocation2 + $0x850] sm:$0xff]
    %v358 = vld [vmem:[#allocation2 + $0x858] sm:$0xff]
    %v359 = vld [vmem:[#allocation2 + $0x860] sm:$0xff]
    %v360 = vld [vmem:[#allocation2 + $0x868] sm:$0xff]
    %v361 = vld [vmem:[#allocation2 + $0x870] sm:$0xff]
    %v362 = vld [vmem:[#allocation2 + $0x878] sm:$0xff]
    %v363 = vld [vmem:[#allocation2 + $0x880] sm:$0xff]
    %v364 = vld [vmem:[#allocation2 + $0x888] sm:$0xff]
    %v365 = vld [vmem:[#allocation2 + $0x890] sm:$0xff]
    %v366 = vld [vmem:[#allocation2 + $0x898] sm:$0xff]
    %v367 = vld [vmem:[#allocation2 + $0x8a0] sm:$0xff]
    %v368 = vld [vmem:[#allocation2 + $0x8a8] sm:$0xff]
    %v369 = vld [vmem:[#allocation2 + $0x8b0] sm:$0xff]
    %v370 = vld [vmem:[#allocation2 + $0x8b8] sm:$0xff]
    %v371 = vld [vmem:[#allocation2 + $0x8c0] sm:$0xff]
    %v372 = vld [vmem:[#allocation2 + $0x8c8] sm:$0xff]
    %v373 = vld [vmem:[#allocation2 + $0x8d0] sm:$0xff]
    %v374 = vld [vmem:[#allocation2 + $0x8d8] sm:$0xff]
    %v375 = vld [vmem:[#allocation2 + $0x8e0] sm:$0xff]
    %v376 = vld [vmem:[#allocation2 + $0x8e8] sm:$0xff]
    %v377 = vld [vmem:[#allocation2 + $0x8f0] sm:$0xff]
    %v378 = vld [vmem:[#allocation2 + $0x8f8] sm:$0xff]
    %v379 = vld [vmem:[#allocation2 + $0x900] sm:$0xff]
    %v380 = vld [vmem:[#allocation2 + $0x908] sm:$0xff]
    %v381 = vld [vmem:[#allocation2 + $0x910] sm:$0xff]
    %v382 = vld [vmem:[#allocation2 + $0x918] sm:$0xff]
    %v383 = vld [vmem:[#allocation2 + $0x920] sm:$0xff]
    %v384 = vld [vmem:[#allocation2 + $0x928] sm:$0xff]
    %v385 = vld [vmem:[#allocation2 + $0x930] sm:$0xff]
    %v386 = vld [vmem:[#allocation2 + $0x938] sm:$0xff]
    %v387 = vld [vmem:[#allocation2 + $0x940] sm:$0xff]
    %v388 = vld [vmem:[#allocation2 + $0x948] sm:$0xff]
    %v389 = vld [vmem:[#allocation2 + $0x950] sm:$0xff]
    %v390 = vld [vmem:[#allocation2 + $0x958] sm:$0xff]
    %v391 = vld [vmem:[#allocation2 + $0x960] sm:$0xff]
    %v392 = vld [vmem:[#allocation2 + $0x968] sm:$0xff]
    %v393 = vld [vmem:[#allocation2 + $0x970] sm:$0xff]
    %v394 = vld [vmem:[#allocation2 + $0x978] sm:$0xff]
    %v395 = vld [vmem:[#allocation2 + $0x980] sm:$0xff]
    %v396 = vld [vmem:[#allocation2 + $0x988] sm:$0xff]
    %v397 = vld [vmem:[#allocation2 + $0x990] sm:$0xff]
    %v398 = vld [vmem:[#allocation2 + $0x998] sm:$0xff]
    %v399 = vld [vmem:[#allocation2 + $0x9a0] sm:$0xff]
    %v400 = vld [vmem:[#allocation2 + $0x9a8] sm:$0xff]
    %v401 = vld [vmem:[#allocation2 + $0x9b0] sm:$0xff]
    %v402 = vld [vmem:[#allocation2 + $0x9b8] sm:$0xff]
    %v403 = vld [vmem:[#allocation2 + $0x9c0] sm:$0xff]
    %v404 = vld [vmem:[#allocation2 + $0x9c8] sm:$0xff]
    %v405 = vld [vmem:[#allocation2 + $0x9d0] sm:$0xff]
    %v406 = vld [vmem:[#allocation2 + $0x9d8] sm:$0xff]
    %v407 = vld [vmem:[#allocation2 + $0x9e0] sm:$0xff]
    %v408 = vld [vmem:[#allocation2 + $0x9e8] sm:$0xff]
    %v409 = vld [vmem:[#allocation2 + $0x9f0] sm:$0xff]
    %v410 = vld [vmem:[#allocation2 + $0x9f8] sm:$0xff]
    %v411 = vld [vmem:[#allocation2 + $0xa00] sm:$0xff]
    %v412 = vld [vmem:[#allocation2 + $0xa08] sm:$0xff]
    %v413 = vld [vmem:[#allocation2 + $0xa10] sm:$0xff]
    %v414 = vld [vmem:[#allocation2 + $0xa18] sm:$0xff]
    %v415 = vld [vmem:[#allocation2 + $0xa20] sm:$0xff]
    %v416 = vld [vmem:[#allocation2 + $0xa28] sm:$0xff]
    %v417 = vld [vmem:[#allocation2 + $0xa30] sm:$0xff]
    %v418 = vld [vmem:[#allocation2 + $0xa38] sm:$0xff]
    %v419 = vld [vmem:[#allocation2 + $0xa40] sm:$0xff]
    %v420 = vld [vmem:[#allocation2 + $0xa48] sm:$0xff]
    %v421 = vld [vmem:[#allocation2 + $0xa50] sm:$0xff]
    %v422 = vld [vmem:[#allocation2 + $0xa58] sm:$0xff]
    %v423 = vld [vmem:[#allocation2 + $0xa60] sm:$0xff]
    %v424 = vld [vmem:[#allocation2 + $0xa68] sm:$0xff]
    %v425 = vld [vmem:[#allocation2 + $0xa70] sm:$0xff]
    %v426 = vld [vmem:[#allocation2 + $0xa78] sm:$0xff]
    %v427 = vld [vmem:[#allocation2 + $0xa80] sm:$0xff]
    %v428 = vld [vmem:[#allocation2 + $0xa88] sm:$0xff]
    %v429 = vld [vmem:[#allocation2 + $0xa90] sm:$0xff]
    %v430 = vld [vmem:[#allocation2 + $0xa98] sm:$0xff]
    %v431 = vld [vmem:[#allocation2 + $0xaa0] sm:$0xff]
    %v432 = vld [vmem:[#allocation2 + $0xaa8] sm:$0xff]
    %v433 = vld [vmem:[#allocation2 + $0xab0] sm:$0xff]
    %v434 = vld [vmem:[#allocation2 + $0xab8] sm:$0xff]
    %v435 = vld [vmem:[#allocation2 + $0xac0] sm:$0xff]
    %v436 = vld [vmem:[#allocation2 + $0xac8] sm:$0xff]
    %v437 = vld [vmem:[#allocation2 + $0xad0] sm:$0xff]
    %v438 = vld [vmem:[#allocation2 + $0xad8] sm:$0xff]
    %v439 = vld [vmem:[#allocation2 + $0xae0] sm:$0xff]
    %v440 = vld [vmem:[#allocation2 + $0xae8] sm:$0xff]
    %v441 = vld [vmem:[#allocation2 + $0xaf0] sm:$0xff]
    %v442 = vld [vmem:[#allocation2 + $0xaf8] sm:$0xff]
    %v443 = vld [vmem:[#allocation2 + $0xb00] sm:$0xff]
    %v444 = vld [vmem:[#allocation2 + $0xb08] sm:$0xff]
    %v445 = vld [vmem:[#allocation2 + $0xb10] sm:$0xff]
    %v446 = vld [vmem:[#allocation2 + $0xb18] sm:$0xff]
    %v447 = vld [vmem:[#allocation2 + $0xb20] sm:$0xff]
    %v448 = vld [vmem:[#allocation2 + $0xb28] sm:$0xff]
    %v449 = vld [vmem:[#allocation2 + $0xb30] sm:$0xff]
    %v450 = vld [vmem:[#allocation2 + $0xb38] sm:$0xff]
    %v451 = vld [vmem:[#allocation2 + $0xb40] sm:$0xff]
    %v452 = vld [vmem:[#allocation2 + $0xb48] sm:$0xff]
    %v453 = vld [vmem:[#allocation2 + $0xb50] sm:$0xff]
    %v454 = vld [vmem:[#allocation2 + $0xb58] sm:$0xff]
    %v455 = vld [vmem:[#allocation2 + $0xb60] sm:$0xff]
    %v456 = vld [vmem:[#allocation2 + $0xb68] sm:$0xff]
    %v457 = vld [vmem:[#allocation2 + $0xb70] sm:$0xff]
    %v458 = vld [vmem:[#allocation2 + $0xb78] sm:$0xff]
    %v459 = vld [vmem:[#allocation2 + $0xb80] sm:$0xff]
    %v460 = vld [vmem:[#allocation2 + $0xb88] sm:$0xff]
    %v461 = vld [vmem:[#allocation2 + $0xb90] sm:$0xff]
    %v462 = vld [vmem:[#allocation2 + $0xb98] sm:$0xff]
    %v463 = vld [vmem:[#allocation2 + $0xba0] sm:$0xff]
    %v464 = vld [vmem:[#allocation2 + $0xba8] sm:$0xff]
    %v465 = vld [vmem:[#allocation2 + $0xbb0] sm:$0xff]
    %v466 = vld [vmem:[#allocation2 + $0xbb8] sm:$0xff]
    %v467 = vld [vmem:[#allocation2 + $0xbc0] sm:$0xff]
    %v468 = vld [vmem:[#allocation2 + $0xbc8] sm:$0xff]
    %v469 = vld [vmem:[#allocation2 + $0xbd0] sm:$0xff]
    %v470 = vld [vmem:[#allocation2 + $0xbd8] sm:$0xff]
    %v471 = vld [vmem:[#allocation2 + $0xbe0] sm:$0xff]
    %v472 = vld [vmem:[#allocation2 + $0xbe8] sm:$0xff]
    %v473 = vld [vmem:[#allocation2 + $0xbf0] sm:$0xff]
    %v474 = vld [vmem:[#allocation2 + $0xbf8] sm:$0xff]
    %v475 = vld [vmem:[#allocation2 + $0xc00] sm:$0xff]
    %v476 = vld [vmem:[#allocation2 + $0xc08] sm:$0xff]
    %v477 = vld [vmem:[#allocation2 + $0xc10] sm:$0xff]
    %v478 = vld [vmem:[#allocation2 + $0xc18] sm:$0xff]
    %v479 = vld [vmem:[#allocation2 + $0xc20] sm:$0xff]
    %v480 = vld [vmem:[#allocation2 + $0xc28] sm:$0xff]
    %v481 = vld [vmem:[#allocation2 + $0xc30] sm:$0xff]
    %v482 = vld [vmem:[#allocation2 + $0xc38] sm:$0xff]
    %v483 = vld [vmem:[#allocation5] sm:$0xff]
    %v485 = vlaneseq
    %v486 = vshrl.u32 %v485, 7
    %v487 = vsub.s32 0, %v486
    %v488 = vrot.slane %v483, %v487
    %v489 = vlaneseq
    %v490 = vshrl.u32 %v489, 7
    %v491 = vsub.s32 1, %v490
    %v492 = vrot.slane %v483, %v491
    %v493 = vlaneseq
    %v494 = vshrl.u32 %v493, 7
    %v495 = vsub.s32 2, %v494
    %v496 = vrot.slane %v483, %v495
    %v497 = vlaneseq
    %v498 = vshrl.u32 %v497, 7
    %v499 = vsub.s32 3, %v498
    %v500 = vrot.slane %v483, %v499
    %v501 = vlaneseq
    %v502 = vshrl.u32 %v501, 7
    %v503 = vsub.s32 4, %v502
    %v504 = vrot.slane %v483, %v503
    %v505 = vlaneseq
    %v506 = vshrl.u32 %v505, 7
    %v507 = vsub.s32 5, %v506
    %v508 = vrot.slane %v483, %v507
    %v509 = vlaneseq
    %v510 = vshrl.u32 %v509, 7
    %v511 = vsub.s32 6, %v510
    %v512 = vrot.slane %v483, %v511
    %v513 = vlaneseq
    %v514 = vshrl.u32 %v513, 7
    %v515 = vsub.s32 7, %v514
    %v516 = vrot.slane %v483, %v515
    %v917 = vunpack.c.l.b16 %v91
    %v918 = vunpack.c.h.b16 %v91
    %v919 = vunpack.c.l.b16 %v92
    %v920 = vunpack.c.h.b16 %v92
    %v921 = vunpack.c.l.b16 %v93
    %v922 = vunpack.c.h.b16 %v93
    %v923 = vunpack.c.l.b16 %v94
    %v924 = vunpack.c.h.b16 %v94
    %v925 = vunpack.c.l.b16 %v95
    %v926 = vunpack.c.h.b16 %v95
    %v927 = vunpack.c.l.b16 %v96
    %v928 = vunpack.c.h.b16 %v96
    %v929 = vunpack.c.l.b16 %v97
    %v930 = vunpack.c.h.b16 %v97
    %v931 = vunpack.c.l.b16 %v98
    %v932 = vunpack.c.h.b16 %v98
    %v933 = vunpack.c.l.b16 %v99
    %v934 = vunpack.c.h.b16 %v99
    %v935 = vunpack.c.l.b16 %v100
    %v936 = vunpack.c.h.b16 %v100
    %v937 = vunpack.c.l.b16 %v101
    %v938 = vunpack.c.h.b16 %v101
    %v939 = vunpack.c.l.b16 %v102
    %v940 = vunpack.c.h.b16 %v102
    %v941 = vunpack.c.l.b16 %v103
    %v942 = vunpack.c.h.b16 %v103
    %v943 = vunpack.c.l.b16 %v104
    %v944 = vunpack.c.h.b16 %v104
    %v945 = vunpack.c.l.b16 %v105
    %v946 = vunpack.c.h.b16 %v105
    %v947 = vunpack.c.l.b16 %v106
    %v948 = vunpack.c.h.b16 %v106
    %v949 = vunpack.c.l.b16 %v107
    %v950 = vunpack.c.h.b16 %v107
    %v951 = vunpack.c.l.b16 %v108
    %v952 = vunpack.c.h.b16 %v108
    %v953 = vunpack.c.l.b16 %v109
    %v954 = vunpack.c.h.b16 %v109
    %v955 = vunpack.c.l.b16 %v110
    %v956 = vunpack.c.h.b16 %v110
    %v957 = vunpack.c.l.b16 %v111
    %v958 = vunpack.c.h.b16 %v111
    %v959 = vunpack.c.l.b16 %v112
    %v960 = vunpack.c.h.b16 %v112
    %v961 = vunpack.c.l.b16 %v113
    %v962 = vunpack.c.h.b16 %v113
    %v963 = vunpack.c.l.b16 %v114
    %v964 = vunpack.c.h.b16 %v114
    %v965 = vunpack.c.l.b16 %v115
    %v966 = vunpack.c.h.b16 %v115
    %v967 = vunpack.c.l.b16 %v116
    %v968 = vunpack.c.h.b16 %v116
    %v969 = vunpack.c.l.b16 %v117
    %v970 = vunpack.c.h.b16 %v117
    %v971 = vunpack.c.l.b16 %v118
    %v972 = vunpack.c.h.b16 %v118
    %v973 = vunpack.c.l.b16 %v119
    %v974 = vunpack.c.h.b16 %v119
    %v975 = vunpack.c.l.b16 %v120
    %v976 = vunpack.c.h.b16 %v120
    %v977 = vunpack.c.l.b16 %v121
    %v978 = vunpack.c.h.b16 %v121
    %v979 = vunpack.c.l.b16 %v122
    %v980 = vunpack.c.h.b16 %v122
    %v981 = vunpack.c.l.b16 %v123
    %v982 = vunpack.c.h.b16 %v123
    %v983 = vunpack.c.l.b16 %v124
    %v984 = vunpack.c.h.b16 %v124
    %v985 = vunpack.c.l.b16 %v125
    %v986 = vunpack.c.h.b16 %v125
    %v987 = vunpack.c.l.b16 %v126
    %v988 = vunpack.c.h.b16 %v126
    %v989 = vunpack.c.l.b16 %v127
    %v990 = vunpack.c.h.b16 %v127
    %v991 = vunpack.c.l.b16 %v128
    %v992 = vunpack.c.h.b16 %v128
    %v993 = vunpack.c.l.b16 %v129
    %v994 = vunpack.c.h.b16 %v129
    %v995 = vunpack.c.l.b16 %v130
    %v996 = vunpack.c.h.b16 %v130
    %v997 = vunpack.c.l.b16 %v131
    %v998 = vunpack.c.h.b16 %v131
    %v999 = vunpack.c.l.b16 %v132
    %v1000 = vunpack.c.h.b16 %v132
    %v1001 = vunpack.c.l.b16 %v133
    %v1002 = vunpack.c.h.b16 %v133
    %v1003 = vunpack.c.l.b16 %v134
    %v1004 = vunpack.c.h.b16 %v134
    %v1005 = vunpack.c.l.b16 %v135
    %v1006 = vunpack.c.h.b16 %v135
    %v1007 = vunpack.c.l.b16 %v136
    %v1008 = vunpack.c.h.b16 %v136
    %v1009 = vunpack.c.l.b16 %v137
    %v1010 = vunpack.c.h.b16 %v137
    %v1011 = vunpack.c.l.b16 %v138
    %v1012 = vunpack.c.h.b16 %v138
    %v1013 = vunpack.c.l.b16 %v139
    %v1014 = vunpack.c.h.b16 %v139
    %v1015 = vunpack.c.l.b16 %v140
    %v1016 = vunpack.c.h.b16 %v140
    %v1017 = vunpack.c.l.b16 %v141
    %v1018 = vunpack.c.h.b16 %v141
    %v1019 = vunpack.c.l.b16 %v142
    %v1020 = vunpack.c.h.b16 %v142
    %v1021 = vunpack.c.l.b16 %v143
    %v1022 = vunpack.c.h.b16 %v143
    %v1023 = vunpack.c.l.b16 %v144
    %v1024 = vunpack.c.h.b16 %v144
    %v1025 = vunpack.c.l.b16 %v145
    %v1026 = vunpack.c.h.b16 %v145
    %v1027 = vunpack.c.l.b16 %v146
    %v1028 = vunpack.c.h.b16 %v146
    %v1029 = vunpack.c.l.b16 %v147
    %v1030 = vunpack.c.h.b16 %v147
    %v1031 = vunpack.c.l.b16 %v148
    %v1032 = vunpack.c.h.b16 %v148
    %v1033 = vunpack.c.l.b16 %v149
    %v1034 = vunpack.c.h.b16 %v149
    %v1035 = vunpack.c.l.b16 %v150
    %v1036 = vunpack.c.h.b16 %v150
    %v1037 = vunpack.c.l.b16 %v151
    %v1038 = vunpack.c.h.b16 %v151
    %v1039 = vunpack.c.l.b16 %v152
    %v1040 = vunpack.c.h.b16 %v152
    %v1041 = vunpack.c.l.b16 %v153
    %v1042 = vunpack.c.h.b16 %v153
    %v1043 = vunpack.c.l.b16 %v154
    %v1044 = vunpack.c.h.b16 %v154
    %v1045 = vunpack.c.l.b16 %v155
    %v1046 = vunpack.c.h.b16 %v155
    %v1047 = vunpack.c.l.b16 %v156
    %v1048 = vunpack.c.h.b16 %v156
    %v1049 = vunpack.c.l.b16 %v157
    %v1050 = vunpack.c.h.b16 %v157
    %v1051 = vunpack.c.l.b16 %v158
    %v1052 = vunpack.c.h.b16 %v158
    %v1053 = vunpack.c.l.b16 %v159
    %v1054 = vunpack.c.h.b16 %v159
    %v1055 = vunpack.c.l.b16 %v160
    %v1056 = vunpack.c.h.b16 %v160
    %v1057 = vunpack.c.l.b16 %v161
    %v1058 = vunpack.c.h.b16 %v161
    %v1059 = vunpack.c.l.b16 %v162
    %v1060 = vunpack.c.h.b16 %v162
    %v1061 = vunpack.c.l.b16 %v163
    %v1062 = vunpack.c.h.b16 %v163
    %v1063 = vunpack.c.l.b16 %v164
    %v1064 = vunpack.c.h.b16 %v164
    %v1065 = vunpack.c.l.b16 %v165
    %v1066 = vunpack.c.h.b16 %v165
    %v1067 = vunpack.c.l.b16 %v166
    %v1068 = vunpack.c.h.b16 %v166
    %v1069 = vunpack.c.l.b16 %v167
    %v1070 = vunpack.c.h.b16 %v167
    %v1071 = vunpack.c.l.b16 %v168
    %v1072 = vunpack.c.h.b16 %v168
    %v1073 = vunpack.c.l.b16 %v169
    %v1074 = vunpack.c.h.b16 %v169
    %v1075 = vunpack.c.l.b16 %v170
    %v1076 = vunpack.c.h.b16 %v170
    %v1077 = vunpack.c.l.b16 %v171
    %v1078 = vunpack.c.h.b16 %v171
    %v1079 = vunpack.c.l.b16 %v172
    %v1080 = vunpack.c.h.b16 %v172
    %v1081 = vunpack.c.l.b16 %v173
    %v1082 = vunpack.c.h.b16 %v173
    %v1083 = vunpack.c.l.b16 %v174
    %v1084 = vunpack.c.h.b16 %v174
    %v1085 = vunpack.c.l.b16 %v175
    %v1086 = vunpack.c.h.b16 %v175
    %v1087 = vunpack.c.l.b16 %v176
    %v1088 = vunpack.c.h.b16 %v176
    %v1089 = vunpack.c.l.b16 %v177
    %v1090 = vunpack.c.h.b16 %v177
    %v1091 = vunpack.c.l.b16 %v178
    %v1092 = vunpack.c.h.b16 %v178
    %v1093 = vunpack.c.l.b16 %v179
    %v1094 = vunpack.c.h.b16 %v179
    %v1095 = vunpack.c.l.b16 %v180
    %v1096 = vunpack.c.h.b16 %v180
    %v1097 = vunpack.c.l.b16 %v181
    %v1098 = vunpack.c.h.b16 %v181
    %v1099 = vunpack.c.l.b16 %v182
    %v1100 = vunpack.c.h.b16 %v182
    %v1101 = vunpack.c.l.b16 %v183
    %v1102 = vunpack.c.h.b16 %v183
    %v1103 = vunpack.c.l.b16 %v184
    %v1104 = vunpack.c.h.b16 %v184
    %v1105 = vunpack.c.l.b16 %v185
    %v1106 = vunpack.c.h.b16 %v185
    %v1107 = vunpack.c.l.b16 %v186
    %v1108 = vunpack.c.h.b16 %v186
    %v1109 = vunpack.c.l.b16 %v187
    %v1110 = vunpack.c.h.b16 %v187
    %v1111 = vunpack.c.l.b16 %v188
    %v1112 = vunpack.c.h.b16 %v188
    %v1113 = vunpack.c.l.b16 %v189
    %v1114 = vunpack.c.h.b16 %v189
    %v1115 = vunpack.c.l.b16 %v190
    %v1116 = vunpack.c.h.b16 %v190
    %v1117 = vunpack.c.l.b16 %v191
    %v1118 = vunpack.c.h.b16 %v191
    %v1119 = vunpack.c.l.b16 %v192
    %v1120 = vunpack.c.h.b16 %v192
    %v1121 = vunpack.c.l.b16 %v193
    %v1122 = vunpack.c.h.b16 %v193
    %v1123 = vunpack.c.l.b16 %v194
    %v1124 = vunpack.c.h.b16 %v194
    %v1125 = vunpack.c.l.b16 %v195
    %v1126 = vunpack.c.h.b16 %v195
    %v1127 = vunpack.c.l.b16 %v196
    %v1128 = vunpack.c.h.b16 %v196
    %v1129 = vunpack.c.l.b16 %v197
    %v1130 = vunpack.c.h.b16 %v197
    %v1131 = vunpack.c.l.b16 %v198
    %v1132 = vunpack.c.h.b16 %v198
    %v1133 = vunpack.c.l.b16 %v199
    %v1134 = vunpack.c.h.b16 %v199
    %v1135 = vunpack.c.l.b16 %v200
    %v1136 = vunpack.c.h.b16 %v200
    %v1137 = vunpack.c.l.b16 %v201
    %v1138 = vunpack.c.h.b16 %v201
    %v1139 = vunpack.c.l.b16 %v202
    %v1140 = vunpack.c.h.b16 %v202
    %v1141 = vunpack.c.l.b16 %v203
    %v1142 = vunpack.c.h.b16 %v203
    %v1143 = vunpack.c.l.b16 %v204
    %v1144 = vunpack.c.h.b16 %v204
    %v1145 = vunpack.c.l.b16 %v205
    %v1146 = vunpack.c.h.b16 %v205
    %v1147 = vunpack.c.l.b16 %v206
    %v1148 = vunpack.c.h.b16 %v206
    %v1149 = vunpack.c.l.b16 %v207
    %v1150 = vunpack.c.h.b16 %v207
    %v1151 = vunpack.c.l.b16 %v208
    %v1152 = vunpack.c.h.b16 %v208
    %v1153 = vunpack.c.l.b16 %v209
    %v1154 = vunpack.c.h.b16 %v209
    %v1155 = vunpack.c.l.b16 %v210
    %v1156 = vunpack.c.h.b16 %v210
    %v1157 = vunpack.c.l.b16 %v211
    %v1158 = vunpack.c.h.b16 %v211
    %v1159 = vunpack.c.l.b16 %v212
    %v1160 = vunpack.c.h.b16 %v212
    %v1161 = vunpack.c.l.b16 %v213
    %v1162 = vunpack.c.h.b16 %v213
    %v1163 = vunpack.c.l.b16 %v214
    %v1164 = vunpack.c.h.b16 %v214
    %v1165 = vunpack.c.l.b16 %v215
    %v1166 = vunpack.c.h.b16 %v215
    %v1167 = vunpack.c.l.b16 %v216
    %v1168 = vunpack.c.h.b16 %v216
    %v1169 = vunpack.c.l.b16 %v217
    %v1170 = vunpack.c.h.b16 %v217
    %v1171 = vunpack.c.l.b16 %v218
    %v1172 = vunpack.c.h.b16 %v218
    %v1173 = vunpack.c.l.b16 %v219
    %v1174 = vunpack.c.h.b16 %v219
    %v1175 = vunpack.c.l.b16 %v220
    %v1176 = vunpack.c.h.b16 %v220
    %v1177 = vunpack.c.l.b16 %v221
    %v1178 = vunpack.c.h.b16 %v221
    %v1179 = vunpack.c.l.b16 %v222
    %v1180 = vunpack.c.h.b16 %v222
    %v1181 = vunpack.c.l.b16 %v223
    %v1182 = vunpack.c.h.b16 %v223
    %v1183 = vunpack.c.l.b16 %v224
    %v1184 = vunpack.c.h.b16 %v224
    %v1185 = vunpack.c.l.b16 %v225
    %v1186 = vunpack.c.h.b16 %v225
    %v1187 = vunpack.c.l.b16 %v226
    %v1188 = vunpack.c.h.b16 %v226
    %v1189 = vunpack.c.l.b16 %v227
    %v1190 = vunpack.c.h.b16 %v227
    %v1191 = vunpack.c.l.b16 %v228
    %v1192 = vunpack.c.h.b16 %v228
    %v1193 = vunpack.c.l.b16 %v229
    %v1194 = vunpack.c.h.b16 %v229
    %v1195 = vunpack.c.l.b16 %v230
    %v1196 = vunpack.c.h.b16 %v230
    %v1197 = vunpack.c.l.b16 %v231
    %v1198 = vunpack.c.h.b16 %v231
    %v1199 = vunpack.c.l.b16 %v232
    %v1200 = vunpack.c.h.b16 %v232
    %v1201 = vunpack.c.l.b16 %v233
    %v1202 = vunpack.c.h.b16 %v233
    %v1203 = vunpack.c.l.b16 %v234
    %v1204 = vunpack.c.h.b16 %v234
    %v1205 = vunpack.c.l.b16 %v235
    %v1206 = vunpack.c.h.b16 %v235
    %v1207 = vunpack.c.l.b16 %v236
    %v1208 = vunpack.c.h.b16 %v236
    %v1209 = vunpack.c.l.b16 %v237
    %v1210 = vunpack.c.h.b16 %v237
    %v1211 = vunpack.c.l.b16 %v238
    %v1212 = vunpack.c.h.b16 %v238
    %v1213 = vunpack.c.l.b16 %v239
    %v1214 = vunpack.c.h.b16 %v239
    %v1215 = vunpack.c.l.b16 %v240
    %v1216 = vunpack.c.h.b16 %v240
    %v1217 = vunpack.c.l.b16 %v241
    %v1218 = vunpack.c.h.b16 %v241
    %v1219 = vunpack.c.l.b16 %v242
    %v1220 = vunpack.c.h.b16 %v242
    %v1221 = vunpack.c.l.b16 %v243
    %v1222 = vunpack.c.h.b16 %v243
    %v1223 = vunpack.c.l.b16 %v244
    %v1224 = vunpack.c.h.b16 %v244
    %v1225 = vunpack.c.l.b16 %v245
    %v1226 = vunpack.c.h.b16 %v245
    %v1227 = vunpack.c.l.b16 %v246
    %v1228 = vunpack.c.h.b16 %v246
    %v1229 = vunpack.c.l.b16 %v247
    %v1230 = vunpack.c.h.b16 %v247
    %v1231 = vunpack.c.l.b16 %v248
    %v1232 = vunpack.c.h.b16 %v248
    %v1233 = vunpack.c.l.b16 %v249
    %v1234 = vunpack.c.h.b16 %v249
    %v1235 = vunpack.c.l.b16 %v250
    %v1236 = vunpack.c.h.b16 %v250
    %v1237 = vunpack.c.l.b16 %v251
    %v1238 = vunpack.c.h.b16 %v251
    %v1239 = vunpack.c.l.b16 %v252
    %v1240 = vunpack.c.h.b16 %v252
    %v1241 = vunpack.c.l.b16 %v253
    %v1242 = vunpack.c.h.b16 %v253
    %v1243 = vunpack.c.l.b16 %v254
    %v1244 = vunpack.c.h.b16 %v254
    %v1245 = vunpack.c.l.b16 %v255
    %v1246 = vunpack.c.h.b16 %v255
    %v1247 = vunpack.c.l.b16 %v256
    %v1248 = vunpack.c.h.b16 %v256
    %v1249 = vunpack.c.l.b16 %v257
    %v1250 = vunpack.c.h.b16 %v257
    %v1251 = vunpack.c.l.b16 %v258
    %v1252 = vunpack.c.h.b16 %v258
    %v1253 = vunpack.c.l.b16 %v259
    %v1254 = vunpack.c.h.b16 %v259
    %v1255 = vunpack.c.l.b16 %v260
    %v1256 = vunpack.c.h.b16 %v260
    %v1257 = vunpack.c.l.b16 %v261
    %v1258 = vunpack.c.h.b16 %v261
    %v1259 = vunpack.c.l.b16 %v262
    %v1260 = vunpack.c.h.b16 %v262
    %v1261 = vunpack.c.l.b16 %v263
    %v1262 = vunpack.c.h.b16 %v263
    %v1263 = vunpack.c.l.b16 %v264
    %v1264 = vunpack.c.h.b16 %v264
    %v1265 = vunpack.c.l.b16 %v265
    %v1266 = vunpack.c.h.b16 %v265
    %v1267 = vunpack.c.l.b16 %v266
    %v1268 = vunpack.c.h.b16 %v266
    %v1269 = vunpack.c.l.b16 %v267
    %v1270 = vunpack.c.h.b16 %v267
    %v1271 = vunpack.c.l.b16 %v268
    %v1272 = vunpack.c.h.b16 %v268
    %v1273 = vunpack.c.l.b16 %v269
    %v1274 = vunpack.c.h.b16 %v269
    %v1275 = vunpack.c.l.b16 %v270
    %v1276 = vunpack.c.h.b16 %v270
    %v1277 = vunpack.c.l.b16 %v271
    %v1278 = vunpack.c.h.b16 %v271
    %v1279 = vunpack.c.l.b16 %v272
    %v1280 = vunpack.c.h.b16 %v272
    %v1281 = vunpack.c.l.b16 %v273
    %v1282 = vunpack.c.h.b16 %v273
    %v1283 = vunpack.c.l.b16 %v274
    %v1284 = vunpack.c.h.b16 %v274
    %v1285 = vunpack.c.l.b16 %v275
    %v1286 = vunpack.c.h.b16 %v275
    %v1287 = vunpack.c.l.b16 %v276
    %v1288 = vunpack.c.h.b16 %v276
    %v1289 = vunpack.c.l.b16 %v277
    %v1290 = vunpack.c.h.b16 %v277
    %v1291 = vunpack.c.l.b16 %v278
    %v1292 = vunpack.c.h.b16 %v278
    %v1293 = vunpack.c.l.b16 %v279
    %v1294 = vunpack.c.h.b16 %v279
    %v1295 = vunpack.c.l.b16 %v280
    %v1296 = vunpack.c.h.b16 %v280
    %v1297 = vunpack.c.l.b16 %v281
    %v1298 = vunpack.c.h.b16 %v281
    %v1299 = vunpack.c.l.b16 %v282
    %v1300 = vunpack.c.h.b16 %v282
    %v1301 = vunpack.c.l.b16 %v283
    %v1302 = vunpack.c.h.b16 %v283
    %v1303 = vunpack.c.l.b16 %v284
    %v1304 = vunpack.c.h.b16 %v284
    %v1305 = vunpack.c.l.b16 %v285
    %v1306 = vunpack.c.h.b16 %v285
    %v1307 = vunpack.c.l.b16 %v286
    %v1308 = vunpack.c.h.b16 %v286
    %v1309 = vunpack.c.l.b16 %v287
    %v1310 = vunpack.c.h.b16 %v287
    %v1311 = vunpack.c.l.b16 %v288
    %v1312 = vunpack.c.h.b16 %v288
    %v1313 = vunpack.c.l.b16 %v289
    %v1314 = vunpack.c.h.b16 %v289
    %v1315 = vunpack.c.l.b16 %v290
    %v1316 = vunpack.c.h.b16 %v290
    %v1317 = vunpack.c.l.b16 %v291
    %v1318 = vunpack.c.h.b16 %v291
    %v1319 = vunpack.c.l.b16 %v292
    %v1320 = vunpack.c.h.b16 %v292
    %v1321 = vunpack.c.l.b16 %v293
    %v1322 = vunpack.c.h.b16 %v293
    %v1323 = vunpack.c.l.b16 %v294
    %v1324 = vunpack.c.h.b16 %v294
    %v1325 = vunpack.c.l.b16 %v295
    %v1326 = vunpack.c.h.b16 %v295
    %v1327 = vunpack.c.l.b16 %v296
    %v1328 = vunpack.c.h.b16 %v296
    %v1329 = vunpack.c.l.b16 %v297
    %v1330 = vunpack.c.h.b16 %v297
    %v1331 = vunpack.c.l.b16 %v298
    %v1332 = vunpack.c.h.b16 %v298
    %v1333 = vunpack.c.l.b16 %v299
    %v1334 = vunpack.c.h.b16 %v299
    %v1335 = vunpack.c.l.b16 %v300
    %v1336 = vunpack.c.h.b16 %v300
    %v1337 = vunpack.c.l.b16 %v301
    %v1338 = vunpack.c.h.b16 %v301
    %v1339 = vunpack.c.l.b16 %v302
    %v1340 = vunpack.c.h.b16 %v302
    %v1341 = vunpack.c.l.b16 %v303
    %v1342 = vunpack.c.h.b16 %v303
    %v1343 = vunpack.c.l.b16 %v304
    %v1344 = vunpack.c.h.b16 %v304
    %v1345 = vunpack.c.l.b16 %v305
    %v1346 = vunpack.c.h.b16 %v305
    %v1347 = vunpack.c.l.b16 %v306
    %v1348 = vunpack.c.h.b16 %v306
    %v1349 = vunpack.c.l.b16 %v307
    %v1350 = vunpack.c.h.b16 %v307
    %v1351 = vunpack.c.l.b16 %v308
    %v1352 = vunpack.c.h.b16 %v308
    %v1353 = vunpack.c.l.b16 %v309
    %v1354 = vunpack.c.h.b16 %v309
    %v1355 = vunpack.c.l.b16 %v310
    %v1356 = vunpack.c.h.b16 %v310
    %v1357 = vunpack.c.l.b16 %v311
    %v1358 = vunpack.c.h.b16 %v311
    %v1359 = vunpack.c.l.b16 %v312
    %v1360 = vunpack.c.h.b16 %v312
    %v1361 = vunpack.c.l.b16 %v313
    %v1362 = vunpack.c.h.b16 %v313
    %v1363 = vunpack.c.l.b16 %v314
    %v1364 = vunpack.c.h.b16 %v314
    %v1365 = vunpack.c.l.b16 %v315
    %v1366 = vunpack.c.h.b16 %v315
    %v1367 = vunpack.c.l.b16 %v316
    %v1368 = vunpack.c.h.b16 %v316
    %v1369 = vunpack.c.l.b16 %v317
    %v1370 = vunpack.c.h.b16 %v317
    %v1371 = vunpack.c.l.b16 %v318
    %v1372 = vunpack.c.h.b16 %v318
    %v1373 = vunpack.c.l.b16 %v319
    %v1374 = vunpack.c.h.b16 %v319
    %v1375 = vunpack.c.l.b16 %v320
    %v1376 = vunpack.c.h.b16 %v320
    %v1377 = vunpack.c.l.b16 %v321
    %v1378 = vunpack.c.h.b16 %v321
    %v1379 = vunpack.c.l.b16 %v322
    %v1380 = vunpack.c.h.b16 %v322
    %v1381 = vunpack.c.l.b16 %v323
    %v1382 = vunpack.c.h.b16 %v323
    %v1383 = vunpack.c.l.b16 %v324
    %v1384 = vunpack.c.h.b16 %v324
    %v1385 = vunpack.c.l.b16 %v325
    %v1386 = vunpack.c.h.b16 %v325
    %v1387 = vunpack.c.l.b16 %v326
    %v1388 = vunpack.c.h.b16 %v326
    %v1389 = vunpack.c.l.b16 %v327
    %v1390 = vunpack.c.h.b16 %v327
    %v1391 = vunpack.c.l.b16 %v328
    %v1392 = vunpack.c.h.b16 %v328
    %v1393 = vunpack.c.l.b16 %v329
    %v1394 = vunpack.c.h.b16 %v329
    %v1395 = vunpack.c.l.b16 %v330
    %v1396 = vunpack.c.h.b16 %v330
    %v1397 = vunpack.c.l.b16 %v331
    %v1398 = vunpack.c.h.b16 %v331
    %v1399 = vunpack.c.l.b16 %v332
    %v1400 = vunpack.c.h.b16 %v332
    %v1401 = vunpack.c.l.b16 %v333
    %v1402 = vunpack.c.h.b16 %v333
    %v1403 = vunpack.c.l.b16 %v334
    %v1404 = vunpack.c.h.b16 %v334
    %v1405 = vunpack.c.l.b16 %v335
    %v1406 = vunpack.c.h.b16 %v335
    %v1407 = vunpack.c.l.b16 %v336
    %v1408 = vunpack.c.h.b16 %v336
    %v1409 = vunpack.c.l.b16 %v337
    %v1410 = vunpack.c.h.b16 %v337
    %v1411 = vunpack.c.l.b16 %v338
    %v1412 = vunpack.c.h.b16 %v338
    %v1413 = vunpack.c.l.b16 %v339
    %v1414 = vunpack.c.h.b16 %v339
    %v1415 = vunpack.c.l.b16 %v340
    %v1416 = vunpack.c.h.b16 %v340
    %v1417 = vunpack.c.l.b16 %v341
    %v1418 = vunpack.c.h.b16 %v341
    %v1419 = vunpack.c.l.b16 %v342
    %v1420 = vunpack.c.h.b16 %v342
    %v1421 = vunpack.c.l.b16 %v343
    %v1422 = vunpack.c.h.b16 %v343
    %v1423 = vunpack.c.l.b16 %v344
    %v1424 = vunpack.c.h.b16 %v344
    %v1425 = vunpack.c.l.b16 %v345
    %v1426 = vunpack.c.h.b16 %v345
    %v1427 = vunpack.c.l.b16 %v346
    %v1428 = vunpack.c.h.b16 %v346
    %v1429 = vunpack.c.l.b16 %v347
    %v1430 = vunpack.c.h.b16 %v347
    %v1431 = vunpack.c.l.b16 %v348
    %v1432 = vunpack.c.h.b16 %v348
    %v1433 = vunpack.c.l.b16 %v349
    %v1434 = vunpack.c.h.b16 %v349
    %v1435 = vunpack.c.l.b16 %v350
    %v1436 = vunpack.c.h.b16 %v350
    %v1437 = vunpack.c.l.b16 %v351
    %v1438 = vunpack.c.h.b16 %v351
    %v1439 = vunpack.c.l.b16 %v352
    %v1440 = vunpack.c.h.b16 %v352
    %v1441 = vunpack.c.l.b16 %v353
    %v1442 = vunpack.c.h.b16 %v353
    %v1443 = vunpack.c.l.b16 %v354
    %v1444 = vunpack.c.h.b16 %v354
    %v1445 = vunpack.c.l.b16 %v355
    %v1446 = vunpack.c.h.b16 %v355
    %v1447 = vunpack.c.l.b16 %v356
    %v1448 = vunpack.c.h.b16 %v356
    %v1449 = vunpack.c.l.b16 %v357
    %v1450 = vunpack.c.h.b16 %v357
    %v1451 = vunpack.c.l.b16 %v358
    %v1452 = vunpack.c.h.b16 %v358
    %v1453 = vunpack.c.l.b16 %v359
    %v1454 = vunpack.c.h.b16 %v359
    %v1455 = vunpack.c.l.b16 %v360
    %v1456 = vunpack.c.h.b16 %v360
    %v1457 = vunpack.c.l.b16 %v361
    %v1458 = vunpack.c.h.b16 %v361
    %v1459 = vunpack.c.l.b16 %v362
    %v1460 = vunpack.c.h.b16 %v362
    %v1461 = vunpack.c.l.b16 %v363
    %v1462 = vunpack.c.h.b16 %v363
    %v1463 = vunpack.c.l.b16 %v364
    %v1464 = vunpack.c.h.b16 %v364
    %v1465 = vunpack.c.l.b16 %v365
    %v1466 = vunpack.c.h.b16 %v365
    %v1467 = vunpack.c.l.b16 %v366
    %v1468 = vunpack.c.h.b16 %v366
    %v1469 = vunpack.c.l.b16 %v367
    %v1470 = vunpack.c.h.b16 %v367
    %v1471 = vunpack.c.l.b16 %v368
    %v1472 = vunpack.c.h.b16 %v368
    %v1473 = vunpack.c.l.b16 %v369
    %v1474 = vunpack.c.h.b16 %v369
    %v1475 = vunpack.c.l.b16 %v370
    %v1476 = vunpack.c.h.b16 %v370
    %v1477 = vunpack.c.l.b16 %v371
    %v1478 = vunpack.c.h.b16 %v371
    %v1479 = vunpack.c.l.b16 %v372
    %v1480 = vunpack.c.h.b16 %v372
    %v1481 = vunpack.c.l.b16 %v373
    %v1482 = vunpack.c.h.b16 %v373
    %v1483 = vunpack.c.l.b16 %v374
    %v1484 = vunpack.c.h.b16 %v374
    %v1485 = vunpack.c.l.b16 %v375
    %v1486 = vunpack.c.h.b16 %v375
    %v1487 = vunpack.c.l.b16 %v376
    %v1488 = vunpack.c.h.b16 %v376
    %v1489 = vunpack.c.l.b16 %v377
    %v1490 = vunpack.c.h.b16 %v377
    %v1491 = vunpack.c.l.b16 %v378
    %v1492 = vunpack.c.h.b16 %v378
    %v1493 = vunpack.c.l.b16 %v379
    %v1494 = vunpack.c.h.b16 %v379
    %v1495 = vunpack.c.l.b16 %v380
    %v1496 = vunpack.c.h.b16 %v380
    %v1497 = vunpack.c.l.b16 %v381
    %v1498 = vunpack.c.h.b16 %v381
    %v1499 = vunpack.c.l.b16 %v382
    %v1500 = vunpack.c.h.b16 %v382
    %v1501 = vunpack.c.l.b16 %v383
    %v1502 = vunpack.c.h.b16 %v383
    %v1503 = vunpack.c.l.b16 %v384
    %v1504 = vunpack.c.h.b16 %v384
    %v1505 = vunpack.c.l.b16 %v385
    %v1506 = vunpack.c.h.b16 %v385
    %v1507 = vunpack.c.l.b16 %v386
    %v1508 = vunpack.c.h.b16 %v386
    %v1509 = vunpack.c.l.b16 %v387
    %v1510 = vunpack.c.h.b16 %v387
    %v1511 = vunpack.c.l.b16 %v388
    %v1512 = vunpack.c.h.b16 %v388
    %v1513 = vunpack.c.l.b16 %v389
    %v1514 = vunpack.c.h.b16 %v389
    %v1515 = vunpack.c.l.b16 %v390
    %v1516 = vunpack.c.h.b16 %v390
    %v1517 = vunpack.c.l.b16 %v391
    %v1518 = vunpack.c.h.b16 %v391
    %v1519 = vunpack.c.l.b16 %v392
    %v1520 = vunpack.c.h.b16 %v392
    %v1521 = vunpack.c.l.b16 %v393
    %v1522 = vunpack.c.h.b16 %v393
    %v1523 = vunpack.c.l.b16 %v394
    %v1524 = vunpack.c.h.b16 %v394
    %v1525 = vunpack.c.l.b16 %v395
    %v1526 = vunpack.c.h.b16 %v395
    %v1527 = vunpack.c.l.b16 %v396
    %v1528 = vunpack.c.h.b16 %v396
    %v1529 = vunpack.c.l.b16 %v397
    %v1530 = vunpack.c.h.b16 %v397
    %v1531 = vunpack.c.l.b16 %v398
    %v1532 = vunpack.c.h.b16 %v398
    %v1533 = vunpack.c.l.b16 %v399
    %v1534 = vunpack.c.h.b16 %v399
    %v1535 = vunpack.c.l.b16 %v400
    %v1536 = vunpack.c.h.b16 %v400
    %v1537 = vunpack.c.l.b16 %v401
    %v1538 = vunpack.c.h.b16 %v401
    %v1539 = vunpack.c.l.b16 %v402
    %v1540 = vunpack.c.h.b16 %v402
    %v1541 = vunpack.c.l.b16 %v403
    %v1542 = vunpack.c.h.b16 %v403
    %v1543 = vunpack.c.l.b16 %v404
    %v1544 = vunpack.c.h.b16 %v404
    %v1545 = vunpack.c.l.b16 %v405
    %v1546 = vunpack.c.h.b16 %v405
    %v1547 = vunpack.c.l.b16 %v406
    %v1548 = vunpack.c.h.b16 %v406
    %v1549 = vunpack.c.l.b16 %v407
    %v1550 = vunpack.c.h.b16 %v407
    %v1551 = vunpack.c.l.b16 %v408
    %v1552 = vunpack.c.h.b16 %v408
    %v1553 = vunpack.c.l.b16 %v409
    %v1554 = vunpack.c.h.b16 %v409
    %v1555 = vunpack.c.l.b16 %v410
    %v1556 = vunpack.c.h.b16 %v410
    %v1557 = vunpack.c.l.b16 %v411
    %v1558 = vunpack.c.h.b16 %v411
    %v1559 = vunpack.c.l.b16 %v412
    %v1560 = vunpack.c.h.b16 %v412
    %v1561 = vunpack.c.l.b16 %v413
    %v1562 = vunpack.c.h.b16 %v413
    %v1563 = vunpack.c.l.b16 %v414
    %v1564 = vunpack.c.h.b16 %v414
    %v1565 = vunpack.c.l.b16 %v415
    %v1566 = vunpack.c.h.b16 %v415
    %v1567 = vunpack.c.l.b16 %v416
    %v1568 = vunpack.c.h.b16 %v416
    %v1569 = vunpack.c.l.b16 %v417
    %v1570 = vunpack.c.h.b16 %v417
    %v1571 = vunpack.c.l.b16 %v418
    %v1572 = vunpack.c.h.b16 %v418
    %v1573 = vunpack.c.l.b16 %v419
    %v1574 = vunpack.c.h.b16 %v419
    %v1575 = vunpack.c.l.b16 %v420
    %v1576 = vunpack.c.h.b16 %v420
    %v1577 = vunpack.c.l.b16 %v421
    %v1578 = vunpack.c.h.b16 %v421
    %v1579 = vunpack.c.l.b16 %v422
    %v1580 = vunpack.c.h.b16 %v422
    %v1581 = vunpack.c.l.b16 %v423
    %v1582 = vunpack.c.h.b16 %v423
    %v1583 = vunpack.c.l.b16 %v424
    %v1584 = vunpack.c.h.b16 %v424
    %v1585 = vunpack.c.l.b16 %v425
    %v1586 = vunpack.c.h.b16 %v425
    %v1587 = vunpack.c.l.b16 %v426
    %v1588 = vunpack.c.h.b16 %v426
    %v1589 = vunpack.c.l.b16 %v427
    %v1590 = vunpack.c.h.b16 %v427
    %v1591 = vunpack.c.l.b16 %v428
    %v1592 = vunpack.c.h.b16 %v428
    %v1593 = vunpack.c.l.b16 %v429
    %v1594 = vunpack.c.h.b16 %v429
    %v1595 = vunpack.c.l.b16 %v430
    %v1596 = vunpack.c.h.b16 %v430
    %v1597 = vunpack.c.l.b16 %v431
    %v1598 = vunpack.c.h.b16 %v431
    %v1599 = vunpack.c.l.b16 %v432
    %v1600 = vunpack.c.h.b16 %v432
    %v1601 = vunpack.c.l.b16 %v433
    %v1602 = vunpack.c.h.b16 %v433
    %v1603 = vunpack.c.l.b16 %v434
    %v1604 = vunpack.c.h.b16 %v434
    %v1605 = vunpack.c.l.b16 %v435
    %v1606 = vunpack.c.h.b16 %v435
    %v1607 = vunpack.c.l.b16 %v436
    %v1608 = vunpack.c.h.b16 %v436
    %v1609 = vunpack.c.l.b16 %v437
    %v1610 = vunpack.c.h.b16 %v437
    %v1611 = vunpack.c.l.b16 %v438
    %v1612 = vunpack.c.h.b16 %v438
    %v1613 = vunpack.c.l.b16 %v439
    %v1614 = vunpack.c.h.b16 %v439
    %v1615 = vunpack.c.l.b16 %v440
    %v1616 = vunpack.c.h.b16 %v440
    %v1617 = vunpack.c.l.b16 %v441
    %v1618 = vunpack.c.h.b16 %v441
    %v1619 = vunpack.c.l.b16 %v442
    %v1620 = vunpack.c.h.b16 %v442
    %v1621 = vunpack.c.l.b16 %v443
    %v1622 = vunpack.c.h.b16 %v443
    %v1623 = vunpack.c.l.b16 %v444
    %v1624 = vunpack.c.h.b16 %v444
    %v1625 = vunpack.c.l.b16 %v445
    %v1626 = vunpack.c.h.b16 %v445
    %v1627 = vunpack.c.l.b16 %v446
    %v1628 = vunpack.c.h.b16 %v446
    %v1629 = vunpack.c.l.b16 %v447
    %v1630 = vunpack.c.h.b16 %v447
    %v1631 = vunpack.c.l.b16 %v448
    %v1632 = vunpack.c.h.b16 %v448
    %v1633 = vunpack.c.l.b16 %v449
    %v1634 = vunpack.c.h.b16 %v449
    %v1635 = vunpack.c.l.b16 %v450
    %v1636 = vunpack.c.h.b16 %v450
    %v1637 = vunpack.c.l.b16 %v451
    %v1638 = vunpack.c.h.b16 %v451
    %v1639 = vunpack.c.l.b16 %v452
    %v1640 = vunpack.c.h.b16 %v452
    %v1641 = vunpack.c.l.b16 %v453
    %v1642 = vunpack.c.h.b16 %v453
    %v1643 = vunpack.c.l.b16 %v454
    %v1644 = vunpack.c.h.b16 %v454
    %v1645 = vunpack.c.l.b16 %v455
    %v1646 = vunpack.c.h.b16 %v455
    %v1647 = vunpack.c.l.b16 %v456
    %v1648 = vunpack.c.h.b16 %v456
    %v1649 = vunpack.c.l.b16 %v457
    %v1650 = vunpack.c.h.b16 %v457
    %v1651 = vunpack.c.l.b16 %v458
    %v1652 = vunpack.c.h.b16 %v458
    %v1653 = vunpack.c.l.b16 %v459
    %v1654 = vunpack.c.h.b16 %v459
    %v1655 = vunpack.c.l.b16 %v460
    %v1656 = vunpack.c.h.b16 %v460
    %v1657 = vunpack.c.l.b16 %v461
    %v1658 = vunpack.c.h.b16 %v461
    %v1659 = vunpack.c.l.b16 %v462
    %v1660 = vunpack.c.h.b16 %v462
    %v1661 = vunpack.c.l.b16 %v463
    %v1662 = vunpack.c.h.b16 %v463
    %v1663 = vunpack.c.l.b16 %v464
    %v1664 = vunpack.c.h.b16 %v464
    %v1665 = vunpack.c.l.b16 %v465
    %v1666 = vunpack.c.h.b16 %v465
    %v1667 = vunpack.c.l.b16 %v466
    %v1668 = vunpack.c.h.b16 %v466
    %v1669 = vunpack.c.l.b16 %v467
    %v1670 = vunpack.c.h.b16 %v467
    %v1671 = vunpack.c.l.b16 %v468
    %v1672 = vunpack.c.h.b16 %v468
    %v1673 = vunpack.c.l.b16 %v469
    %v1674 = vunpack.c.h.b16 %v469
    %v1675 = vunpack.c.l.b16 %v470
    %v1676 = vunpack.c.h.b16 %v470
    %v1677 = vunpack.c.l.b16 %v471
    %v1678 = vunpack.c.h.b16 %v471
    %v1679 = vunpack.c.l.b16 %v472
    %v1680 = vunpack.c.h.b16 %v472
    %v1681 = vunpack.c.l.b16 %v473
    %v1682 = vunpack.c.h.b16 %v473
    %v1683 = vunpack.c.l.b16 %v474
    %v1684 = vunpack.c.h.b16 %v474
    %v1685 = vunpack.c.l.b16 %v475
    %v1686 = vunpack.c.h.b16 %v475
    %v1687 = vunpack.c.l.b16 %v476
    %v1688 = vunpack.c.h.b16 %v476
    %v1689 = vunpack.c.l.b16 %v477
    %v1690 = vunpack.c.h.b16 %v477
    %v1691 = vunpack.c.l.b16 %v478
    %v1692 = vunpack.c.h.b16 %v478
    %v1693 = vunpack.c.l.b16 %v479
    %v1694 = vunpack.c.h.b16 %v479
    %v1695 = vunpack.c.l.b16 %v480
    %v1696 = vunpack.c.h.b16 %v480
    %v1697 = vunpack.c.l.b16 %v481
    %v1698 = vunpack.c.h.b16 %v481
    %v1699 = vunpack.c.l.b16 %v482
    %v1700 = vunpack.c.h.b16 %v482
    %v1701 = vpack.c.b16 %v925, %v917
    %v1702 = vpack.c.b16 %v926, %v918
    %v1703 = vpack.c.b16 %v927, %v919
    %v1704 = vpack.c.b16 %v928, %v920
    %v1705 = vpack.c.b16 %v929, %v921
    %v1706 = vpack.c.b16 %v930, %v922
    %v1707 = vpack.c.b16 %v931, %v923
    %v1708 = vpack.c.b16 %v932, %v924
    %v1709 = vpack.c.b16 %v941, %v933
    %v1710 = vpack.c.b16 %v942, %v934
    %v1711 = vpack.c.b16 %v943, %v935
    %v1712 = vpack.c.b16 %v944, %v936
    %v1713 = vpack.c.b16 %v945, %v937
    %v1714 = vpack.c.b16 %v946, %v938
    %v1715 = vpack.c.b16 %v947, %v939
    %v1716 = vpack.c.b16 %v948, %v940
    %v1717 = vpack.c.b16 %v957, %v949
    %v1718 = vpack.c.b16 %v958, %v950
    %v1719 = vpack.c.b16 %v959, %v951
    %v1720 = vpack.c.b16 %v960, %v952
    %v1721 = vpack.c.b16 %v961, %v953
    %v1722 = vpack.c.b16 %v962, %v954
    %v1723 = vpack.c.b16 %v963, %v955
    %v1724 = vpack.c.b16 %v964, %v956
    %v1725 = vpack.c.b16 %v973, %v965
    %v1726 = vpack.c.b16 %v974, %v966
    %v1727 = vpack.c.b16 %v975, %v967
    %v1728 = vpack.c.b16 %v976, %v968
    %v1729 = vpack.c.b16 %v977, %v969
    %v1730 = vpack.c.b16 %v978, %v970
    %v1731 = vpack.c.b16 %v979, %v971
    %v1732 = vpack.c.b16 %v980, %v972
    %v1733 = vpack.c.b16 %v989, %v981
    %v1734 = vpack.c.b16 %v990, %v982
    %v1735 = vpack.c.b16 %v991, %v983
    %v1736 = vpack.c.b16 %v992, %v984
    %v1737 = vpack.c.b16 %v993, %v985
    %v1738 = vpack.c.b16 %v994, %v986
    %v1739 = vpack.c.b16 %v995, %v987
    %v1740 = vpack.c.b16 %v996, %v988
    %v1741 = vpack.c.b16 %v1005, %v997
    %v1742 = vpack.c.b16 %v1006, %v998
    %v1743 = vpack.c.b16 %v1007, %v999
    %v1744 = vpack.c.b16 %v1008, %v1000
    %v1745 = vpack.c.b16 %v1009, %v1001
    %v1746 = vpack.c.b16 %v1010, %v1002
    %v1747 = vpack.c.b16 %v1011, %v1003
    %v1748 = vpack.c.b16 %v1012, %v1004
    %v1749 = vpack.c.b16 %v1021, %v1013
    %v1750 = vpack.c.b16 %v1022, %v1014
    %v1751 = vpack.c.b16 %v1023, %v1015
    %v1752 = vpack.c.b16 %v1024, %v1016
    %v1753 = vpack.c.b16 %v1025, %v1017
    %v1754 = vpack.c.b16 %v1026, %v1018
    %v1755 = vpack.c.b16 %v1027, %v1019
    %v1756 = vpack.c.b16 %v1028, %v1020
    %v1757 = vpack.c.b16 %v1037, %v1029
    %v1758 = vpack.c.b16 %v1038, %v1030
    %v1759 = vpack.c.b16 %v1039, %v1031
    %v1760 = vpack.c.b16 %v1040, %v1032
    %v1761 = vpack.c.b16 %v1041, %v1033
    %v1762 = vpack.c.b16 %v1042, %v1034
    %v1763 = vpack.c.b16 %v1043, %v1035
    %v1764 = vpack.c.b16 %v1044, %v1036
    %v1765 = vpack.c.b16 %v1053, %v1045
    %v1766 = vpack.c.b16 %v1054, %v1046
    %v1767 = vpack.c.b16 %v1055, %v1047
    %v1768 = vpack.c.b16 %v1056, %v1048
    %v1769 = vpack.c.b16 %v1057, %v1049
    %v1770 = vpack.c.b16 %v1058, %v1050
    %v1771 = vpack.c.b16 %v1059, %v1051
    %v1772 = vpack.c.b16 %v1060, %v1052
    %v1773 = vpack.c.b16 %v1069, %v1061
    %v1774 = vpack.c.b16 %v1070, %v1062
    %v1775 = vpack.c.b16 %v1071, %v1063
    %v1776 = vpack.c.b16 %v1072, %v1064
    %v1777 = vpack.c.b16 %v1073, %v1065
    %v1778 = vpack.c.b16 %v1074, %v1066
    %v1779 = vpack.c.b16 %v1075, %v1067
    %v1780 = vpack.c.b16 %v1076, %v1068
    %v1781 = vpack.c.b16 %v1085, %v1077
    %v1782 = vpack.c.b16 %v1086, %v1078
    %v1783 = vpack.c.b16 %v1087, %v1079
    %v1784 = vpack.c.b16 %v1088, %v1080
    %v1785 = vpack.c.b16 %v1089, %v1081
    %v1786 = vpack.c.b16 %v1090, %v1082
    %v1787 = vpack.c.b16 %v1091, %v1083
    %v1788 = vpack.c.b16 %v1092, %v1084
    %v1789 = vpack.c.b16 %v1101, %v1093
    %v1790 = vpack.c.b16 %v1102, %v1094
    %v1791 = vpack.c.b16 %v1103, %v1095
    %v1792 = vpack.c.b16 %v1104, %v1096
    %v1793 = vpack.c.b16 %v1105, %v1097
    %v1794 = vpack.c.b16 %v1106, %v1098
    %v1795 = vpack.c.b16 %v1107, %v1099
    %v1796 = vpack.c.b16 %v1108, %v1100
    %v1797 = vpack.c.b16 %v1117, %v1109
    %v1798 = vpack.c.b16 %v1118, %v1110
    %v1799 = vpack.c.b16 %v1119, %v1111
    %v1800 = vpack.c.b16 %v1120, %v1112
    %v1801 = vpack.c.b16 %v1121, %v1113
    %v1802 = vpack.c.b16 %v1122, %v1114
    %v1803 = vpack.c.b16 %v1123, %v1115
    %v1804 = vpack.c.b16 %v1124, %v1116
    %v1805 = vpack.c.b16 %v1133, %v1125
    %v1806 = vpack.c.b16 %v1134, %v1126
    %v1807 = vpack.c.b16 %v1135, %v1127
    %v1808 = vpack.c.b16 %v1136, %v1128
    %v1809 = vpack.c.b16 %v1137, %v1129
    %v1810 = vpack.c.b16 %v1138, %v1130
    %v1811 = vpack.c.b16 %v1139, %v1131
    %v1812 = vpack.c.b16 %v1140, %v1132
    %v1813 = vpack.c.b16 %v1149, %v1141
    %v1814 = vpack.c.b16 %v1150, %v1142
    %v1815 = vpack.c.b16 %v1151, %v1143
    %v1816 = vpack.c.b16 %v1152, %v1144
    %v1817 = vpack.c.b16 %v1153, %v1145
    %v1818 = vpack.c.b16 %v1154, %v1146
    %v1819 = vpack.c.b16 %v1155, %v1147
    %v1820 = vpack.c.b16 %v1156, %v1148
    %v1821 = vpack.c.b16 %v1165, %v1157
    %v1822 = vpack.c.b16 %v1166, %v1158
    %v1823 = vpack.c.b16 %v1167, %v1159
    %v1824 = vpack.c.b16 %v1168, %v1160
    %v1825 = vpack.c.b16 %v1169, %v1161
    %v1826 = vpack.c.b16 %v1170, %v1162
    %v1827 = vpack.c.b16 %v1171, %v1163
    %v1828 = vpack.c.b16 %v1172, %v1164
    %v1829 = vpack.c.b16 %v1181, %v1173
    %v1830 = vpack.c.b16 %v1182, %v1174
    %v1831 = vpack.c.b16 %v1183, %v1175
    %v1832 = vpack.c.b16 %v1184, %v1176
    %v1833 = vpack.c.b16 %v1185, %v1177
    %v1834 = vpack.c.b16 %v1186, %v1178
    %v1835 = vpack.c.b16 %v1187, %v1179
    %v1836 = vpack.c.b16 %v1188, %v1180
    %v1837 = vpack.c.b16 %v1197, %v1189
    %v1838 = vpack.c.b16 %v1198, %v1190
    %v1839 = vpack.c.b16 %v1199, %v1191
    %v1840 = vpack.c.b16 %v1200, %v1192
    %v1841 = vpack.c.b16 %v1201, %v1193
    %v1842 = vpack.c.b16 %v1202, %v1194
    %v1843 = vpack.c.b16 %v1203, %v1195
    %v1844 = vpack.c.b16 %v1204, %v1196
    %v1845 = vpack.c.b16 %v1213, %v1205
    %v1846 = vpack.c.b16 %v1214, %v1206
    %v1847 = vpack.c.b16 %v1215, %v1207
    %v1848 = vpack.c.b16 %v1216, %v1208
    %v1849 = vpack.c.b16 %v1217, %v1209
    %v1850 = vpack.c.b16 %v1218, %v1210
    %v1851 = vpack.c.b16 %v1219, %v1211
    %v1852 = vpack.c.b16 %v1220, %v1212
    %v1853 = vpack.c.b16 %v1229, %v1221
    %v1854 = vpack.c.b16 %v1230, %v1222
    %v1855 = vpack.c.b16 %v1231, %v1223
    %v1856 = vpack.c.b16 %v1232, %v1224
    %v1857 = vpack.c.b16 %v1233, %v1225
    %v1858 = vpack.c.b16 %v1234, %v1226
    %v1859 = vpack.c.b16 %v1235, %v1227
    %v1860 = vpack.c.b16 %v1236, %v1228
    %v1861 = vpack.c.b16 %v1245, %v1237
    %v1862 = vpack.c.b16 %v1246, %v1238
    %v1863 = vpack.c.b16 %v1247, %v1239
    %v1864 = vpack.c.b16 %v1248, %v1240
    %v1865 = vpack.c.b16 %v1249, %v1241
    %v1866 = vpack.c.b16 %v1250, %v1242
    %v1867 = vpack.c.b16 %v1251, %v1243
    %v1868 = vpack.c.b16 %v1252, %v1244
    %v1869 = vpack.c.b16 %v1261, %v1253
    %v1870 = vpack.c.b16 %v1262, %v1254
    %v1871 = vpack.c.b16 %v1263, %v1255
    %v1872 = vpack.c.b16 %v1264, %v1256
    %v1873 = vpack.c.b16 %v1265, %v1257
    %v1874 = vpack.c.b16 %v1266, %v1258
    %v1875 = vpack.c.b16 %v1267, %v1259
    %v1876 = vpack.c.b16 %v1268, %v1260
    %v1877 = vpack.c.b16 %v1277, %v1269
    %v1878 = vpack.c.b16 %v1278, %v1270
    %v1879 = vpack.c.b16 %v1279, %v1271
    %v1880 = vpack.c.b16 %v1280, %v1272
    %v1881 = vpack.c.b16 %v1281, %v1273
    %v1882 = vpack.c.b16 %v1282, %v1274
    %v1883 = vpack.c.b16 %v1283, %v1275
    %v1884 = vpack.c.b16 %v1284, %v1276
    %v1885 = vpack.c.b16 %v1293, %v1285
    %v1886 = vpack.c.b16 %v1294, %v1286
    %v1887 = vpack.c.b16 %v1295, %v1287
    %v1888 = vpack.c.b16 %v1296, %v1288
    %v1889 = vpack.c.b16 %v1297, %v1289
    %v1890 = vpack.c.b16 %v1298, %v1290
    %v1891 = vpack.c.b16 %v1299, %v1291
    %v1892 = vpack.c.b16 %v1300, %v1292
    %v1893 = vpack.c.b16 %v1309, %v1301
    %v1894 = vpack.c.b16 %v1310, %v1302
    %v1895 = vpack.c.b16 %v1311, %v1303
    %v1896 = vpack.c.b16 %v1312, %v1304
    %v1897 = vpack.c.b16 %v1313, %v1305
    %v1898 = vpack.c.b16 %v1314, %v1306
    %v1899 = vpack.c.b16 %v1315, %v1307
    %v1900 = vpack.c.b16 %v1316, %v1308
    %v1901 = vpack.c.b16 %v1325, %v1317
    %v1902 = vpack.c.b16 %v1326, %v1318
    %v1903 = vpack.c.b16 %v1327, %v1319
    %v1904 = vpack.c.b16 %v1328, %v1320
    %v1905 = vpack.c.b16 %v1329, %v1321
    %v1906 = vpack.c.b16 %v1330, %v1322
    %v1907 = vpack.c.b16 %v1331, %v1323
    %v1908 = vpack.c.b16 %v1332, %v1324
    %v1909 = vpack.c.b16 %v1341, %v1333
    %v1910 = vpack.c.b16 %v1342, %v1334
    %v1911 = vpack.c.b16 %v1343, %v1335
    %v1912 = vpack.c.b16 %v1344, %v1336
    %v1913 = vpack.c.b16 %v1345, %v1337
    %v1914 = vpack.c.b16 %v1346, %v1338
    %v1915 = vpack.c.b16 %v1347, %v1339
    %v1916 = vpack.c.b16 %v1348, %v1340
    %v1917 = vpack.c.b16 %v1357, %v1349
    %v1918 = vpack.c.b16 %v1358, %v1350
    %v1919 = vpack.c.b16 %v1359, %v1351
    %v1920 = vpack.c.b16 %v1360, %v1352
    %v1921 = vpack.c.b16 %v1361, %v1353
    %v1922 = vpack.c.b16 %v1362, %v1354
    %v1923 = vpack.c.b16 %v1363, %v1355
    %v1924 = vpack.c.b16 %v1364, %v1356
    %v1925 = vpack.c.b16 %v1373, %v1365
    %v1926 = vpack.c.b16 %v1374, %v1366
    %v1927 = vpack.c.b16 %v1375, %v1367
    %v1928 = vpack.c.b16 %v1376, %v1368
    %v1929 = vpack.c.b16 %v1377, %v1369
    %v1930 = vpack.c.b16 %v1378, %v1370
    %v1931 = vpack.c.b16 %v1379, %v1371
    %v1932 = vpack.c.b16 %v1380, %v1372
    %v1933 = vpack.c.b16 %v1389, %v1381
    %v1934 = vpack.c.b16 %v1390, %v1382
    %v1935 = vpack.c.b16 %v1391, %v1383
    %v1936 = vpack.c.b16 %v1392, %v1384
    %v1937 = vpack.c.b16 %v1393, %v1385
    %v1938 = vpack.c.b16 %v1394, %v1386
    %v1939 = vpack.c.b16 %v1395, %v1387
    %v1940 = vpack.c.b16 %v1396, %v1388
    %v1941 = vpack.c.b16 %v1405, %v1397
    %v1942 = vpack.c.b16 %v1406, %v1398
    %v1943 = vpack.c.b16 %v1407, %v1399
    %v1944 = vpack.c.b16 %v1408, %v1400
    %v1945 = vpack.c.b16 %v1409, %v1401
    %v1946 = vpack.c.b16 %v1410, %v1402
    %v1947 = vpack.c.b16 %v1411, %v1403
    %v1948 = vpack.c.b16 %v1412, %v1404
    %v1949 = vpack.c.b16 %v1421, %v1413
    %v1950 = vpack.c.b16 %v1422, %v1414
    %v1951 = vpack.c.b16 %v1423, %v1415
    %v1952 = vpack.c.b16 %v1424, %v1416
    %v1953 = vpack.c.b16 %v1425, %v1417
    %v1954 = vpack.c.b16 %v1426, %v1418
    %v1955 = vpack.c.b16 %v1427, %v1419
    %v1956 = vpack.c.b16 %v1428, %v1420
    %v1957 = vpack.c.b16 %v1437, %v1429
    %v1958 = vpack.c.b16 %v1438, %v1430
    %v1959 = vpack.c.b16 %v1439, %v1431
    %v1960 = vpack.c.b16 %v1440, %v1432
    %v1961 = vpack.c.b16 %v1441, %v1433
    %v1962 = vpack.c.b16 %v1442, %v1434
    %v1963 = vpack.c.b16 %v1443, %v1435
    %v1964 = vpack.c.b16 %v1444, %v1436
    %v1965 = vpack.c.b16 %v1453, %v1445
    %v1966 = vpack.c.b16 %v1454, %v1446
    %v1967 = vpack.c.b16 %v1455, %v1447
    %v1968 = vpack.c.b16 %v1456, %v1448
    %v1969 = vpack.c.b16 %v1457, %v1449
    %v1970 = vpack.c.b16 %v1458, %v1450
    %v1971 = vpack.c.b16 %v1459, %v1451
    %v1972 = vpack.c.b16 %v1460, %v1452
    %v1973 = vpack.c.b16 %v1469, %v1461
    %v1974 = vpack.c.b16 %v1470, %v1462
    %v1975 = vpack.c.b16 %v1471, %v1463
    %v1976 = vpack.c.b16 %v1472, %v1464
    %v1977 = vpack.c.b16 %v1473, %v1465
    %v1978 = vpack.c.b16 %v1474, %v1466
    %v1979 = vpack.c.b16 %v1475, %v1467
    %v1980 = vpack.c.b16 %v1476, %v1468
    %v1981 = vpack.c.b16 %v1485, %v1477
    %v1982 = vpack.c.b16 %v1486, %v1478
    %v1983 = vpack.c.b16 %v1487, %v1479
    %v1984 = vpack.c.b16 %v1488, %v1480
    %v1985 = vpack.c.b16 %v1489, %v1481
    %v1986 = vpack.c.b16 %v1490, %v1482
    %v1987 = vpack.c.b16 %v1491, %v1483
    %v1988 = vpack.c.b16 %v1492, %v1484
    %v1989 = vpack.c.b16 %v1501, %v1493
    %v1990 = vpack.c.b16 %v1502, %v1494
    %v1991 = vpack.c.b16 %v1503, %v1495
    %v1992 = vpack.c.b16 %v1504, %v1496
    %v1993 = vpack.c.b16 %v1505, %v1497
    %v1994 = vpack.c.b16 %v1506, %v1498
    %v1995 = vpack.c.b16 %v1507, %v1499
    %v1996 = vpack.c.b16 %v1508, %v1500
    %v1997 = vpack.c.b16 %v1517, %v1509
    %v1998 = vpack.c.b16 %v1518, %v1510
    %v1999 = vpack.c.b16 %v1519, %v1511
    %v2000 = vpack.c.b16 %v1520, %v1512
    %v2001 = vpack.c.b16 %v1521, %v1513
    %v2002 = vpack.c.b16 %v1522, %v1514
    %v2003 = vpack.c.b16 %v1523, %v1515
    %v2004 = vpack.c.b16 %v1524, %v1516
    %v2005 = vpack.c.b16 %v1533, %v1525
    %v2006 = vpack.c.b16 %v1534, %v1526
    %v2007 = vpack.c.b16 %v1535, %v1527
    %v2008 = vpack.c.b16 %v1536, %v1528
    %v2009 = vpack.c.b16 %v1537, %v1529
    %v2010 = vpack.c.b16 %v1538, %v1530
    %v2011 = vpack.c.b16 %v1539, %v1531
    %v2012 = vpack.c.b16 %v1540, %v1532
    %v2013 = vpack.c.b16 %v1549, %v1541
    %v2014 = vpack.c.b16 %v1550, %v1542
    %v2015 = vpack.c.b16 %v1551, %v1543
    %v2016 = vpack.c.b16 %v1552, %v1544
    %v2017 = vpack.c.b16 %v1553, %v1545
    %v2018 = vpack.c.b16 %v1554, %v1546
    %v2019 = vpack.c.b16 %v1555, %v1547
    %v2020 = vpack.c.b16 %v1556, %v1548
    %v2021 = vpack.c.b16 %v1565, %v1557
    %v2022 = vpack.c.b16 %v1566, %v1558
    %v2023 = vpack.c.b16 %v1567, %v1559
    %v2024 = vpack.c.b16 %v1568, %v1560
    %v2025 = vpack.c.b16 %v1569, %v1561
    %v2026 = vpack.c.b16 %v1570, %v1562
    %v2027 = vpack.c.b16 %v1571, %v1563
    %v2028 = vpack.c.b16 %v1572, %v1564
    %v2029 = vpack.c.b16 %v1581, %v1573
    %v2030 = vpack.c.b16 %v1582, %v1574
    %v2031 = vpack.c.b16 %v1583, %v1575
    %v2032 = vpack.c.b16 %v1584, %v1576
    %v2033 = vpack.c.b16 %v1585, %v1577
    %v2034 = vpack.c.b16 %v1586, %v1578
    %v2035 = vpack.c.b16 %v1587, %v1579
    %v2036 = vpack.c.b16 %v1588, %v1580
    %v2037 = vpack.c.b16 %v1597, %v1589
    %v2038 = vpack.c.b16 %v1598, %v1590
    %v2039 = vpack.c.b16 %v1599, %v1591
    %v2040 = vpack.c.b16 %v1600, %v1592
    %v2041 = vpack.c.b16 %v1601, %v1593
    %v2042 = vpack.c.b16 %v1602, %v1594
    %v2043 = vpack.c.b16 %v1603, %v1595
    %v2044 = vpack.c.b16 %v1604, %v1596
    %v2045 = vpack.c.b16 %v1613, %v1605
    %v2046 = vpack.c.b16 %v1614, %v1606
    %v2047 = vpack.c.b16 %v1615, %v1607
    %v2048 = vpack.c.b16 %v1616, %v1608
    %v2049 = vpack.c.b16 %v1617, %v1609
    %v2050 = vpack.c.b16 %v1618, %v1610
    %v2051 = vpack.c.b16 %v1619, %v1611
    %v2052 = vpack.c.b16 %v1620, %v1612
    %v2053 = vpack.c.b16 %v1629, %v1621
    %v2054 = vpack.c.b16 %v1630, %v1622
    %v2055 = vpack.c.b16 %v1631, %v1623
    %v2056 = vpack.c.b16 %v1632, %v1624
    %v2057 = vpack.c.b16 %v1633, %v1625
    %v2058 = vpack.c.b16 %v1634, %v1626
    %v2059 = vpack.c.b16 %v1635, %v1627
    %v2060 = vpack.c.b16 %v1636, %v1628
    %v2061 = vpack.c.b16 %v1645, %v1637
    %v2062 = vpack.c.b16 %v1646, %v1638
    %v2063 = vpack.c.b16 %v1647, %v1639
    %v2064 = vpack.c.b16 %v1648, %v1640
    %v2065 = vpack.c.b16 %v1649, %v1641
    %v2066 = vpack.c.b16 %v1650, %v1642
    %v2067 = vpack.c.b16 %v1651, %v1643
    %v2068 = vpack.c.b16 %v1652, %v1644
    %v2069 = vpack.c.b16 %v1661, %v1653
    %v2070 = vpack.c.b16 %v1662, %v1654
    %v2071 = vpack.c.b16 %v1663, %v1655
    %v2072 = vpack.c.b16 %v1664, %v1656
    %v2073 = vpack.c.b16 %v1665, %v1657
    %v2074 = vpack.c.b16 %v1666, %v1658
    %v2075 = vpack.c.b16 %v1667, %v1659
    %v2076 = vpack.c.b16 %v1668, %v1660
    %v2077 = vpack.c.b16 %v1677, %v1669
    %v2078 = vpack.c.b16 %v1678, %v1670
    %v2079 = vpack.c.b16 %v1679, %v1671
    %v2080 = vpack.c.b16 %v1680, %v1672
    %v2081 = vpack.c.b16 %v1681, %v1673
    %v2082 = vpack.c.b16 %v1682, %v1674
    %v2083 = vpack.c.b16 %v1683, %v1675
    %v2084 = vpack.c.b16 %v1684, %v1676
    %v2085 = vpack.c.b16 %v1693, %v1685
    %v2086 = vpack.c.b16 %v1694, %v1686
    %v2087 = vpack.c.b16 %v1695, %v1687
    %v2088 = vpack.c.b16 %v1696, %v1688
    %v2089 = vpack.c.b16 %v1697, %v1689
    %v2090 = vpack.c.b16 %v1698, %v1690
    %v2091 = vpack.c.b16 %v1699, %v1691
    %v2092 = vpack.c.b16 %v1700, %v1692
    %vm2485 = vcmask 130048
    %v2487 = vsel %vm2485, %v90, 0
    %2489 = vmatprep.subr.bf16.mxu0 %v1702
    %2490 = vmatpush1.bf16.msra.mxu0 %v1701
    %2491 = vmatprep.subr.bf16.mxu0 %v1710
    %2492 = vmatpush1.bf16.msra.mxu0 %v1709
    %2493 = vmatprep.subr.bf16.mxu0 %v1718
    %2494 = vmatpush1.bf16.msra.mxu0 %v1717
    %2495 = vmatprep.subr.bf16.mxu0 %v1726
    %2496 = vmatpush1.bf16.msra.mxu0 %v1725
    %2497 = vmatprep.subr.bf16.mxu0 %v1734
    %2498 = vmatpush1.bf16.msra.mxu0 %v1733
    %2499 = vmatprep.subr.bf16.mxu0 %v1742
    %2500 = vmatpush1.bf16.msra.mxu0 %v1741
    %2501 = vmatprep.subr.bf16.mxu0 %v1750
    %2502 = vmatpush1.bf16.msra.mxu0 %v1749
    %2503 = vmatprep.subr.bf16.mxu0 %v1758
    %2504 = vmatpush1.bf16.msra.mxu0 %v1757
    %2505 = vmatprep.subr.bf16.mxu0 %v1766
    %2506 = vmatpush1.bf16.msra.mxu0 %v1765
    %2507 = vmatprep.subr.bf16.mxu0 %v1774
    %2508 = vmatpush1.bf16.msra.mxu0 %v1773
    %2509 = vmatprep.subr.bf16.mxu0 %v1782
    %2510 = vmatpush1.bf16.msra.mxu0 %v1781
    %2511 = vmatprep.subr.bf16.mxu0 %v1790
    %2512 = vmatpush1.bf16.msra.mxu0 %v1789
    %2513 = vmatprep.subr.bf16.mxu0 %v1798
    %2514 = vmatpush1.bf16.msra.mxu0 %v1797
    %2515 = vmatprep.subr.bf16.mxu0 %v1806
    %2516 = vmatpush1.bf16.msra.mxu0 %v1805
    %2517 = vmatprep.subr.bf16.mxu0 %v1814
    %2518 = vmatpush1.bf16.msra.mxu0 %v1813
    %2519 = vmatprep.subr.bf16.mxu0 %v1822
    %2520 = vmatpush1.bf16.msra.mxu0 %v1821
    %2521 = vmatprep.mubr.bf16.mxu0 %v85
    %2522 = vmatmul.mubr.bf16.gmra.mrb[0].mxu0 %v84
    %v2523 = vpop.f32.mrb[0].mxu0
    %v2524 = vadd.f32 %v488, %v2523
    %v2525 = vpop.f32.mrb[0].mxu0
    %v2526 = vadd.f32 %v492, %v2525
    %v2527 = vpop.f32.mrb[0].mxu0
    %v2528 = vpop.f32.mrb[0].mxu0
    %2529 = vdwg.mxu0
    %2530 = vmatprep.subr.bf16.mxu0 %v1830
    %2531 = vmatpush1.bf16.msra.mxu0 %v1829
    %2532 = vmatprep.subr.bf16.mxu0 %v1838
    %2533 = vmatpush1.bf16.msra.mxu0 %v1837
    %2534 = vmatprep.subr.bf16.mxu0 %v1846
    %2535 = vmatpush1.bf16.msra.mxu0 %v1845
    %2536 = vmatprep.subr.bf16.mxu0 %v1854
    %2537 = vmatpush1.bf16.msra.mxu0 %v1853
    %2538 = vmatprep.subr.bf16.mxu0 %v1862
    %2539 = vmatpush1.bf16.msra.mxu0 %v1861
    %2540 = vmatprep.subr.bf16.mxu0 %v1870
    %2541 = vmatpush1.bf16.msra.mxu0 %v1869
    %2542 = vmatprep.subr.bf16.mxu0 %v1878
    %2543 = vmatpush1.bf16.msra.mxu0 %v1877
    %2544 = vmatprep.subr.bf16.mxu0 %v1886
    %2545 = vmatpush1.bf16.msra.mxu0 %v1885
    %2546 = vmatprep.subr.bf16.mxu0 %v1894
    %2547 = vmatpush1.bf16.msra.mxu0 %v1893
    %2548 = vmatprep.subr.bf16.mxu0 %v1902
    %2549 = vmatpush1.bf16.msra.mxu0 %v1901
    %2550 = vmatprep.subr.bf16.mxu0 %v1910
    %2551 = vmatpush1.bf16.msra.mxu0 %v1909
    %2552 = vmatprep.subr.bf16.mxu0 %v1918
    %2553 = vmatpush1.bf16.msra.mxu0 %v1917
    %2554 = vmatprep.subr.bf16.mxu0 %v1926
    %2555 = vmatpush1.bf16.msra.mxu0 %v1925
    %2556 = vmatprep.subr.bf16.mxu0 %v1934
    %2557 = vmatpush1.bf16.msra.mxu0 %v1933
    %2558 = vmatprep.subr.bf16.mxu0 %v1942
    %2559 = vmatpush1.bf16.msra.mxu0 %v1941
    %2560 = vmatprep.subr.bf16.mxu0 %v1950
    %2561 = vmatpush1.bf16.msra.mxu0 %v1949
    %2562 = vmatprep.mubr.bf16.mxu0 %v87
    %2563 = vmatmul.mubr.bf16.gmra.mrb[0].mxu0 %v86
    %v2564 = vpop.f32.mrb[0].mxu0
    %v2565 = vadd.f32 %v2524, %v2564
    %v2566 = vpop.f32.mrb[0].mxu0
    %v2567 = vadd.f32 %v2526, %v2566
    %v2568 = vpop.f32.mrb[0].mxu0
    %v2569 = vpop.f32.mrb[0].mxu0
    %2570 = vdwg.mxu0
    %2571 = vmatprep.subr.bf16.mxu0 %v1958
    %2572 = vmatpush1.bf16.msra.mxu0 %v1957
    %2573 = vmatprep.subr.bf16.mxu0 %v1966
    %2574 = vmatpush1.bf16.msra.mxu0 %v1965
    %2575 = vmatprep.subr.bf16.mxu0 %v1974
    %2576 = vmatpush1.bf16.msra.mxu0 %v1973
    %2577 = vmatprep.subr.bf16.mxu0 %v1982
    %2578 = vmatpush1.bf16.msra.mxu0 %v1981
    %2579 = vmatprep.subr.bf16.mxu0 %v1990
    %2580 = vmatpush1.bf16.msra.mxu0 %v1989
    %2581 = vmatprep.subr.bf16.mxu0 %v1998
    %2582 = vmatpush1.bf16.msra.mxu0 %v1997
    %2583 = vmatprep.subr.bf16.mxu0 %v2006
    %2584 = vmatpush1.bf16.msra.mxu0 %v2005
    %2585 = vmatprep.subr.bf16.mxu0 %v2014
    %2586 = vmatpush1.bf16.msra.mxu0 %v2013
    %2587 = vmatprep.subr.bf16.mxu0 %v2022
    %2588 = vmatpush1.bf16.msra.mxu0 %v2021
    %2589 = vmatprep.subr.bf16.mxu0 %v2030
    %2590 = vmatpush1.bf16.msra.mxu0 %v2029
    %2591 = vmatprep.subr.bf16.mxu0 %v2038
    %2592 = vmatpush1.bf16.msra.mxu0 %v2037
    %2593 = vmatprep.subr.bf16.mxu0 %v2046
    %2594 = vmatpush1.bf16.msra.mxu0 %v2045
    %2595 = vmatprep.subr.bf16.mxu0 %v2054
    %2596 = vmatpush1.bf16.msra.mxu0 %v2053
    %2597 = vmatprep.subr.bf16.mxu0 %v2062
    %2598 = vmatpush1.bf16.msra.mxu0 %v2061
    %2599 = vmatprep.subr.bf16.mxu0 %v2070
    %2600 = vmatpush1.bf16.msra.mxu0 %v2069
    %2601 = vmatprep.subr.bf16.mxu0 %v2078
    %2602 = vmatpush1.bf16.msra.mxu0 %v2077
    %2603 = vmatprep.mubr.bf16.mxu0 %v89
    %2604 = vmatmul.mubr.bf16.gmra.mrb[0].mxu0 %v88
    %v2605 = vpop.f32.mrb[0].mxu0
    %v2606 = vadd.f32 %v2565, %v2605
    %v2607 = vpop.f32.mrb[0].mxu0
    %v2608 = vadd.f32 %v2567, %v2607
    %v2609 = vpop.f32.mrb[0].mxu0
    %v2610 = vpop.f32.mrb[0].mxu0
    %2611 = vdwg.mxu0
    %2612 = vmatprep.subr.bf16.mxu0 %v2086
    %2613 = vmatpush1.bf16.msra.mxu0 %v2085
    %2614 = vmatprep.subr.bf16.mxu0 0
    %2615 = vmatpush1.bf16.msra.mxu0 0
    %2616 = vmatprep.subr.bf16.mxu0 0
    %2617 = vmatpush1.bf16.msra.mxu0 0
    %2618 = vmatprep.subr.bf16.mxu0 0
    %2619 = vmatpush1.bf16.msra.mxu0 0
    %2620 = vmatprep.subr.bf16.mxu0 0
    %2621 = vmatpush1.bf16.msra.mxu0 0
    %2622 = vmatprep.subr.bf16.mxu0 0
    %2623 = vmatpush1.bf16.msra.mxu0 0
    %2624 = vmatprep.subr.bf16.mxu0 0
    %2625 = vmatpush1.bf16.msra.mxu0 0
    %2626 = vmatprep.subr.bf16.mxu0 0
    %2627 = vmatpush1.bf16.msra.mxu0 0
    %2628 = vmatprep.subr.bf16.mxu0 0
    %2629 = vmatpush1.bf16.msra.mxu0 0
    %2630 = vmatprep.subr.bf16.mxu0 0
    %2631 = vmatpush1.bf16.msra.mxu0 0
    %2632 = vmatprep.subr.bf16.mxu0 0
    %2633 = vmatpush1.bf16.msra.mxu0 0
    %2634 = vmatprep.subr.bf16.mxu0 0
    %2635 = vmatpush1.bf16.msra.mxu0 0
    %2636 = vmatprep.subr.bf16.mxu0 0
    %2637 = vmatpush1.bf16.msra.mxu0 0
    %2638 = vmatprep.subr.bf16.mxu0 0
    %2639 = vmatpush1.bf16.msra.mxu0 0
    %2640 = vmatprep.subr.bf16.mxu0 0
    %2641 = vmatpush1.bf16.msra.mxu0 0
    %2642 = vmatprep.subr.bf16.mxu0 0
    %2643 = vmatpush1.bf16.msra.mxu0 0
    %2644 = vmatprep.mubr.bf16.mxu0 0
    %2645 = vmatmul.mubr.bf16.gmra.mrb[0].mxu0 %v2487
    %v2646 = vpop.f32.mrb[0].mxu0
    %v2647 = vadd.f32 %v2606, %v2646
    %v2648 = vpop.f32.mrb[0].mxu0
    %v2649 = vadd.f32 %v2608, %v2648
    %v2650 = vpop.f32.mrb[0].mxu0
    %v2651 = vpop.f32.mrb[0].mxu0
    %2652 = vdwg.mxu0
    %2653 = vmatprep.subr.bf16.mxu0 %v1704
    %2654 = vmatpush1.bf16.msra.mxu0 %v1703
    %2655 = vmatprep.subr.bf16.mxu0 %v1712
    %2656 = vmatpush1.bf16.msra.mxu0 %v1711
    %2657 = vmatprep.subr.bf16.mxu0 %v1720
    %2658 = vmatpush1.bf16.msra.mxu0 %v1719
    %2659 = vmatprep.subr.bf16.mxu0 %v1728
    %2660 = vmatpush1.bf16.msra.mxu0 %v1727
    %2661 = vmatprep.subr.bf16.mxu0 %v1736
    %2662 = vmatpush1.bf16.msra.mxu0 %v1735
    %2663 = vmatprep.subr.bf16.mxu0 %v1744
    %2664 = vmatpush1.bf16.msra.mxu0 %v1743
    %2665 = vmatprep.subr.bf16.mxu0 %v1752
    %2666 = vmatpush1.bf16.msra.mxu0 %v1751
    %2667 = vmatprep.subr.bf16.mxu0 %v1760
    %2668 = vmatpush1.bf16.msra.mxu0 %v1759
    %2669 = vmatprep.subr.bf16.mxu0 %v1768
    %2670 = vmatpush1.bf16.msra.mxu0 %v1767
    %2671 = vmatprep.subr.bf16.mxu0 %v1776
    %2672 = vmatpush1.bf16.msra.mxu0 %v1775
    %2673 = vmatprep.subr.bf16.mxu0 %v1784
    %2674 = vmatpush1.bf16.msra.mxu0 %v1783
    %2675 = vmatprep.subr.bf16.mxu0 %v1792
    %2676 = vmatpush1.bf16.msra.mxu0 %v1791
    %2677 = vmatprep.subr.bf16.mxu0 %v1800
    %2678 = vmatpush1.bf16.msra.mxu0 %v1799
    %2679 = vmatprep.subr.bf16.mxu0 %v1808
    %2680 = vmatpush1.bf16.msra.mxu0 %v1807
    %2681 = vmatprep.subr.bf16.mxu0 %v1816
    %2682 = vmatpush1.bf16.msra.mxu0 %v1815
    %2683 = vmatprep.subr.bf16.mxu0 %v1824
    %2684 = vmatpush1.bf16.msra.mxu0 %v1823
    %2685 = vmatprep.mubr.bf16.mxu0 %v85
    %2686 = vmatmul.mubr.bf16.gmra.mrb[0].mxu0 %v84
    %v2687 = vpop.f32.mrb[0].mxu0
    %v2688 = vadd.f32 %v496, %v2687
    %v2689 = vpop.f32.mrb[0].mxu0
    %v2690 = vadd.f32 %v500, %v2689
    %v2691 = vpop.f32.mrb[0].mxu0
    %v2692 = vpop.f32.mrb[0].mxu0
    %2693 = vdwg.mxu0
    %2694 = vmatprep.subr.bf16.mxu0 %v1832
    %2695 = vmatpush1.bf16.msra.mxu0 %v1831
    %2696 = vmatprep.subr.bf16.mxu0 %v1840
    %2697 = vmatpush1.bf16.msra.mxu0 %v1839
    %2698 = vmatprep.subr.bf16.mxu0 %v1848
    %2699 = vmatpush1.bf16.msra.mxu0 %v1847
    %2700 = vmatprep.subr.bf16.mxu0 %v1856
    %2701 = vmatpush1.bf16.msra.mxu0 %v1855
    %2702 = vmatprep.subr.bf16.mxu0 %v1864
    %2703 = vmatpush1.bf16.msra.mxu0 %v1863
    %2704 = vmatprep.subr.bf16.mxu0 %v1872
    %2705 = vmatpush1.bf16.msra.mxu0 %v1871
    %2706 = vmatprep.subr.bf16.mxu0 %v1880
    %2707 = vmatpush1.bf16.msra.mxu0 %v1879
    %2708 = vmatprep.subr.bf16.mxu0 %v1888
    %2709 = vmatpush1.bf16.msra.mxu0 %v1887
    %2710 = vmatprep.subr.bf16.mxu0 %v1896
    %2711 = vmatpush1.bf16.msra.mxu0 %v1895
    %2712 = vmatprep.subr.bf16.mxu0 %v1904
    %2713 = vmatpush1.bf16.msra.mxu0 %v1903
    %2714 = vmatprep.subr.bf16.mxu0 %v1912
    %2715 = vmatpush1.bf16.msra.mxu0 %v1911
    %2716 = vmatprep.subr.bf16.mxu0 %v1920
    %2717 = vmatpush1.bf16.msra.mxu0 %v1919
    %2718 = vmatprep.subr.bf16.mxu0 %v1928
    %2719 = vmatpush1.bf16.msra.mxu0 %v1927
    %2720 = vmatprep.subr.bf16.mxu0 %v1936
    %2721 = vmatpush1.bf16.msra.mxu0 %v1935
    %2722 = vmatprep.subr.bf16.mxu0 %v1944
    %2723 = vmatpush1.bf16.msra.mxu0 %v1943
    %2724 = vmatprep.subr.bf16.mxu0 %v1952
    %2725 = vmatpush1.bf16.msra.mxu0 %v1951
    %2726 = vmatprep.mubr.bf16.mxu0 %v87
    %2727 = vmatmul.mubr.bf16.gmra.mrb[0].mxu0 %v86
    %v2728 = vpop.f32.mrb[0].mxu0
    %v2729 = vadd.f32 %v2688, %v2728
    %v2730 = vpop.f32.mrb[0].mxu0
    %v2731 = vadd.f32 %v2690, %v2730
    %v2732 = vpop.f32.mrb[0].mxu0
    %v2733 = vpop.f32.mrb[0].mxu0
    %2734 = vdwg.mxu0
    %2735 = vmatprep.subr.bf16.mxu0 %v1960
    %2736 = vmatpush1.bf16.msra.mxu0 %v1959
    %2737 = vmatprep.subr.bf16.mxu0 %v1968
    %2738 = vmatpush1.bf16.msra.mxu0 %v1967
    %2739 = vmatprep.subr.bf16.mxu0 %v1976
    %2740 = vmatpush1.bf16.msra.mxu0 %v1975
    %2741 = vmatprep.subr.bf16.mxu0 %v1984
    %2742 = vmatpush1.bf16.msra.mxu0 %v1983
    %2743 = vmatprep.subr.bf16.mxu0 %v1992
    %2744 = vmatpush1.bf16.msra.mxu0 %v1991
    %2745 = vmatprep.subr.bf16.mxu0 %v2000
    %2746 = vmatpush1.bf16.msra.mxu0 %v1999
    %2747 = vmatprep.subr.bf16.mxu0 %v2008
    %2748 = vmatpush1.bf16.msra.mxu0 %v2007
    %2749 = vmatprep.subr.bf16.mxu0 %v2016
    %2750 = vmatpush1.bf16.msra.mxu0 %v2015
    %2751 = vmatprep.subr.bf16.mxu0 %v2024
    %2752 = vmatpush1.bf16.msra.mxu0 %v2023
    %2753 = vmatprep.subr.bf16.mxu0 %v2032
    %2754 = vmatpush1.bf16.msra.mxu0 %v2031
    %2755 = vmatprep.subr.bf16.mxu0 %v2040
    %2756 = vmatpush1.bf16.msra.mxu0 %v2039
    %2757 = vmatprep.subr.bf16.mxu0 %v2048
    %2758 = vmatpush1.bf16.msra.mxu0 %v2047
    %2759 = vmatprep.subr.bf16.mxu0 %v2056
    %2760 = vmatpush1.bf16.msra.mxu0 %v2055
    %2761 = vmatprep.subr.bf16.mxu0 %v2064
    %2762 = vmatpush1.bf16.msra.mxu0 %v2063
    %2763 = vmatprep.subr.bf16.mxu0 %v2072
    %2764 = vmatpush1.bf16.msra.mxu0 %v2071
    %2765 = vmatprep.subr.bf16.mxu0 %v2080
    %2766 = vmatpush1.bf16.msra.mxu0 %v2079
    %2767 = vmatprep.mubr.bf16.mxu0 %v89
    %2768 = vmatmul.mubr.bf16.gmra.mrb[0].mxu0 %v88
    %v2769 = vpop.f32.mrb[0].mxu0
    %v2770 = vadd.f32 %v2729, %v2769
    %v2771 = vpop.f32.mrb[0].mxu0
    %v2772 = vadd.f32 %v2731, %v2771
    %v2773 = vpop.f32.mrb[0].mxu0
    %v2774 = vpop.f32.mrb[0].mxu0
    %2775 = vdwg.mxu0
    %2776 = vmatprep.subr.bf16.mxu0 %v2088
    %2777 = vmatpush1.bf16.msra.mxu0 %v2087
    %2778 = vmatprep.subr.bf16.mxu0 0
    %2779 = vmatpush1.bf16.msra.mxu0 0
    %2780 = vmatprep.subr.bf16.mxu0 0
    %2781 = vmatpush1.bf16.msra.mxu0 0
    %2782 = vmatprep.subr.bf16.mxu0 0
    %2783 = vmatpush1.bf16.msra.mxu0 0
    %2784 = vmatprep.subr.bf16.mxu0 0
    %2785 = vmatpush1.bf16.msra.mxu0 0
    %2786 = vmatprep.subr.bf16.mxu0 0
    %2787 = vmatpush1.bf16.msra.mxu0 0
    %2788 = vmatprep.subr.bf16.mxu0 0
    %2789 = vmatpush1.bf16.msra.mxu0 0
    %2790 = vmatprep.subr.bf16.mxu0 0
    %2791 = vmatpush1.bf16.msra.mxu0 0
    %2792 = vmatprep.subr.bf16.mxu0 0
    %2793 = vmatpush1.bf16.msra.mxu0 0
    %2794 = vmatprep.subr.bf16.mxu0 0
    %2795 = vmatpush1.bf16.msra.mxu0 0
    %2796 = vmatprep.subr.bf16.mxu0 0
    %2797 = vmatpush1.bf16.msra.mxu0 0
    %2798 = vmatprep.subr.bf16.mxu0 0
    %2799 = vmatpush1.bf16.msra.mxu0 0
    %2800 = vmatprep.subr.bf16.mxu0 0
    %2801 = vmatpush1.bf16.msra.mxu0 0
    %2802 = vmatprep.subr.bf16.mxu0 0
    %2803 = vmatpush1.bf16.msra.mxu0 0
    %2804 = vmatprep.subr.bf16.mxu0 0
    %2805 = vmatpush1.bf16.msra.mxu0 0
    %2806 = vmatprep.subr.bf16.mxu0 0
    %2807 = vmatpush1.bf16.msra.mxu0 0
    %2808 = vmatprep.mubr.bf16.mxu0 0
    %2809 = vmatmul.mubr.bf16.gmra.mrb[0].mxu0 %v2487
    %v2810 = vpop.f32.mrb[0].mxu0
    %v2811 = vadd.f32 %v2770, %v2810
    %v2812 = vpop.f32.mrb[0].mxu0
    %v2813 = vadd.f32 %v2772, %v2812
    %v2814 = vpop.f32.mrb[0].mxu0
    %v2815 = vpop.f32.mrb[0].mxu0
    %2816 = vdwg.mxu0
    %2817 = vmatprep.subr.bf16.mxu0 %v1706
    %2818 = vmatpush1.bf16.msra.mxu0 %v1705
    %2819 = vmatprep.subr.bf16.mxu0 %v1714
    %2820 = vmatpush1.bf16.msra.mxu0 %v1713
    %2821 = vmatprep.subr.bf16.mxu0 %v1722
    %2822 = vmatpush1.bf16.msra.mxu0 %v1721
    %2823 = vmatprep.subr.bf16.mxu0 %v1730
    %2824 = vmatpush1.bf16.msra.mxu0 %v1729
    %2825 = vmatprep.subr.bf16.mxu0 %v1738
    %2826 = vmatpush1.bf16.msra.mxu0 %v1737
    %2827 = vmatprep.subr.bf16.mxu0 %v1746
    %2828 = vmatpush1.bf16.msra.mxu0 %v1745
    %2829 = vmatprep.subr.bf16.mxu0 %v1754
    %2830 = vmatpush1.bf16.msra.mxu0 %v1753
    %2831 = vmatprep.subr.bf16.mxu0 %v1762
    %2832 = vmatpush1.bf16.msra.mxu0 %v1761
    %2833 = vmatprep.subr.bf16.mxu0 %v1770
    %2834 = vmatpush1.bf16.msra.mxu0 %v1769
    %2835 = vmatprep.subr.bf16.mxu0 %v1778
    %2836 = vmatpush1.bf16.msra.mxu0 %v1777
    %2837 = vmatprep.subr.bf16.mxu0 %v1786
    %2838 = vmatpush1.bf16.msra.mxu0 %v1785
    %2839 = vmatprep.subr.bf16.mxu0 %v1794
    %2840 = vmatpush1.bf16.msra.mxu0 %v1793
    %2841 = vmatprep.subr.bf16.mxu0 %v1802
    %2842 = vmatpush1.bf16.msra.mxu0 %v1801
    %2843 = vmatprep.subr.bf16.mxu0 %v1810
    %2844 = vmatpush1.bf16.msra.mxu0 %v1809
    %2845 = vmatprep.subr.bf16.mxu0 %v1818
    %2846 = vmatpush1.bf16.msra.mxu0 %v1817
    %2847 = vmatprep.subr.bf16.mxu0 %v1826
    %2848 = vmatpush1.bf16.msra.mxu0 %v1825
    %2849 = vmatprep.mubr.bf16.mxu0 %v85
    %2850 = vmatmul.mubr.bf16.gmra.mrb[0].mxu0 %v84
    %v2851 = vpop.f32.mrb[0].mxu0
    %v2852 = vadd.f32 %v504, %v2851
    %v2853 = vpop.f32.mrb[0].mxu0
    %v2854 = vadd.f32 %v508, %v2853
    %v2855 = vpop.f32.mrb[0].mxu0
    %v2856 = vpop.f32.mrb[0].mxu0
    %2857 = vdwg.mxu0
    %2858 = vmatprep.subr.bf16.mxu0 %v1834
    %2859 = vmatpush1.bf16.msra.mxu0 %v1833
    %2860 = vmatprep.subr.bf16.mxu0 %v1842
    %2861 = vmatpush1.bf16.msra.mxu0 %v1841
    %2862 = vmatprep.subr.bf16.mxu0 %v1850
    %2863 = vmatpush1.bf16.msra.mxu0 %v1849
    %2864 = vmatprep.subr.bf16.mxu0 %v1858
    %2865 = vmatpush1.bf16.msra.mxu0 %v1857
    %2866 = vmatprep.subr.bf16.mxu0 %v1866
    %2867 = vmatpush1.bf16.msra.mxu0 %v1865
    %2868 = vmatprep.subr.bf16.mxu0 %v1874
    %2869 = vmatpush1.bf16.msra.mxu0 %v1873
    %2870 = vmatprep.subr.bf16.mxu0 %v1882
    %2871 = vmatpush1.bf16.msra.mxu0 %v1881
    %2872 = vmatprep.subr.bf16.mxu0 %v1890
    %2873 = vmatpush1.bf16.msra.mxu0 %v1889
    %2874 = vmatprep.subr.bf16.mxu0 %v1898
    %2875 = vmatpush1.bf16.msra.mxu0 %v1897
    %2876 = vmatprep.subr.bf16.mxu0 %v1906
    %2877 = vmatpush1.bf16.msra.mxu0 %v1905
    %2878 = vmatprep.subr.bf16.mxu0 %v1914
    %2879 = vmatpush1.bf16.msra.mxu0 %v1913
    %2880 = vmatprep.subr.bf16.mxu0 %v1922
    %2881 = vmatpush1.bf16.msra.mxu0 %v1921
    %2882 = vmatprep.subr.bf16.mxu0 %v1930
    %2883 = vmatpush1.bf16.msra.mxu0 %v1929
    %2884 = vmatprep.subr.bf16.mxu0 %v1938
    %2885 = vmatpush1.bf16.msra.mxu0 %v1937
    %2886 = vmatprep.subr.bf16.mxu0 %v1946
    %2887 = vmatpush1.bf16.msra.mxu0 %v1945
    %2888 = vmatprep.subr.bf16.mxu0 %v1954
    %2889 = vmatpush1.bf16.msra.mxu0 %v1953
    %2890 = vmatprep.mubr.bf16.mxu0 %v87
    %2891 = vmatmul.mubr.bf16.gmra.mrb[0].mxu0 %v86
    %v2892 = vpop.f32.mrb[0].mxu0
    %v2893 = vadd.f32 %v2852, %v2892
    %v2894 = vpop.f32.mrb[0].mxu0
    %v2895 = vadd.f32 %v2854, %v2894
    %v2896 = vpop.f32.mrb[0].mxu0
    %v2897 = vpop.f32.mrb[0].mxu0
    %2898 = vdwg.mxu0
    %2899 = vmatprep.subr.bf16.mxu0 %v1962
    %2900 = vmatpush1.bf16.msra.mxu0 %v1961
    %2901 = vmatprep.subr.bf16.mxu0 %v1970
    %2902 = vmatpush1.bf16.msra.mxu0 %v1969
    %2903 = vmatprep.subr.bf16.mxu0 %v1978
    %2904 = vmatpush1.bf16.msra.mxu0 %v1977
    %2905 = vmatprep.subr.bf16.mxu0 %v1986
    %2906 = vmatpush1.bf16.msra.mxu0 %v1985
    %2907 = vmatprep.subr.bf16.mxu0 %v1994
    %2908 = vmatpush1.bf16.msra.mxu0 %v1993
    %2909 = vmatprep.subr.bf16.mxu0 %v2002
    %2910 = vmatpush1.bf16.msra.mxu0 %v2001
    %2911 = vmatprep.subr.bf16.mxu0 %v2010
    %2912 = vmatpush1.bf16.msra.mxu0 %v2009
    %2913 = vmatprep.subr.bf16.mxu0 %v2018
    %2914 = vmatpush1.bf16.msra.mxu0 %v2017
    %2915 = vmatprep.subr.bf16.mxu0 %v2026
    %2916 = vmatpush1.bf16.msra.mxu0 %v2025
    %2917 = vmatprep.subr.bf16.mxu0 %v2034
    %2918 = vmatpush1.bf16.msra.mxu0 %v2033
    %2919 = vmatprep.subr.bf16.mxu0 %v2042
    %2920 = vmatpush1.bf16.msra.mxu0 %v2041
    %2921 = vmatprep.subr.bf16.mxu0 %v2050
    %2922 = vmatpush1.bf16.msra.mxu0 %v2049
    %2923 = vmatprep.subr.bf16.mxu0 %v2058
    %2924 = vmatpush1.bf16.msra.mxu0 %v2057
    %2925 = vmatprep.subr.bf16.mxu0 %v2066
    %2926 = vmatpush1.bf16.msra.mxu0 %v2065
    %2927 = vmatprep.subr.bf16.mxu0 %v2074
    %2928 = vmatpush1.bf16.msra.mxu0 %v2073
    %2929 = vmatprep.subr.bf16.mxu0 %v2082
    %2930 = vmatpush1.bf16.msra.mxu0 %v2081
    %2931 = vmatprep.mubr.bf16.mxu0 %v89
    %2932 = vmatmul.mubr.bf16.gmra.mrb[0].mxu0 %v88
    %v2933 = vpop.f32.mrb[0].mxu0
    %v2934 = vadd.f32 %v2893, %v2933
    %v2935 = vpop.f32.mrb[0].mxu0
    %v2936 = vadd.f32 %v2895, %v2935
    %v2937 = vpop.f32.mrb[0].mxu0
    %v2938 = vpop.f32.mrb[0].mxu0
    %2939 = vdwg.mxu0
    %2940 = vmatprep.subr.bf16.mxu0 %v2090
    %2941 = vmatpush1.bf16.msra.mxu0 %v2089
    %2942 = vmatprep.subr.bf16.mxu0 0
    %2943 = vmatpush1.bf16.msra.mxu0 0
    %2944 = vmatprep.subr.bf16.mxu0 0
    %2945 = vmatpush1.bf16.msra.mxu0 0
    %2946 = vmatprep.subr.bf16.mxu0 0
    %2947 = vmatpush1.bf16.msra.mxu0 0
    %2948 = vmatprep.subr.bf16.mxu0 0
    %2949 = vmatpush1.bf16.msra.mxu0 0
    %2950 = vmatprep.subr.bf16.mxu0 0
    %2951 = vmatpush1.bf16.msra.mxu0 0
    %2952 = vmatprep.subr.bf16.mxu0 0
    %2953 = vmatpush1.bf16.msra.mxu0 0
    %2954 = vmatprep.subr.bf16.mxu0 0
    %2955 = vmatpush1.bf16.msra.mxu0 0
    %2956 = vmatprep.subr.bf16.mxu0 0
    %2957 = vmatpush1.bf16.msra.mxu0 0
    %2958 = vmatprep.subr.bf16.mxu0 0
    %2959 = vmatpush1.bf16.msra.mxu0 0
    %2960 = vmatprep.subr.bf16.mxu0 0
    %2961 = vmatpush1.bf16.msra.mxu0 0
    %2962 = vmatprep.subr.bf16.mxu0 0
    %2963 = vmatpush1.bf16.msra.mxu0 0
    %2964 = vmatprep.subr.bf16.mxu0 0
    %2965 = vmatpush1.bf16.msra.mxu0 0
    %2966 = vmatprep.subr.bf16.mxu0 0
    %2967 = vmatpush1.bf16.msra.mxu0 0
    %2968 = vmatprep.subr.bf16.mxu0 0
    %2969 = vmatpush1.bf16.msra.mxu0 0
    %2970 = vmatprep.subr.bf16.mxu0 0
    %2971 = vmatpush1.bf16.msra.mxu0 0
    %2972 = vmatprep.mubr.bf16.mxu0 0
    %2973 = vmatmul.mubr.bf16.gmra.mrb[0].mxu0 %v2487
    %v2974 = vpop.f32.mrb[0].mxu0
    %v2975 = vadd.f32 %v2934, %v2974
    %v2976 = vpop.f32.mrb[0].mxu0
    %v2977 = vadd.f32 %v2936, %v2976
    %v2978 = vpop.f32.mrb[0].mxu0
    %v2979 = vpop.f32.mrb[0].mxu0
    %2980 = vdwg.mxu0
    %2981 = vmatprep.subr.bf16.mxu0 %v1708
    %2982 = vmatpush1.bf16.msra.mxu0 %v1707
    %2983 = vmatprep.subr.bf16.mxu0 %v1716
    %2984 = vmatpush1.bf16.msra.mxu0 %v1715
    %2985 = vmatprep.subr.bf16.mxu0 %v1724
    %2986 = vmatpush1.bf16.msra.mxu0 %v1723
    %2987 = vmatprep.subr.bf16.mxu0 %v1732
    %2988 = vmatpush1.bf16.msra.mxu0 %v1731
    %2989 = vmatprep.subr.bf16.mxu0 %v1740
    %2990 = vmatpush1.bf16.msra.mxu0 %v1739
    %2991 = vmatprep.subr.bf16.mxu0 %v1748
    %2992 = vmatpush1.bf16.msra.mxu0 %v1747
    %2993 = vmatprep.subr.bf16.mxu0 %v1756
    %2994 = vmatpush1.bf16.msra.mxu0 %v1755
    %2995 = vmatprep.subr.bf16.mxu0 %v1764
    %2996 = vmatpush1.bf16.msra.mxu0 %v1763
    %2997 = vmatprep.subr.bf16.mxu0 %v1772
    %2998 = vmatpush1.bf16.msra.mxu0 %v1771
    %2999 = vmatprep.subr.bf16.mxu0 %v1780
    %3000 = vmatpush1.bf16.msra.mxu0 %v1779
    %3001 = vmatprep.subr.bf16.mxu0 %v1788
    %3002 = vmatpush1.bf16.msra.mxu0 %v1787
    %3003 = vmatprep.subr.bf16.mxu0 %v1796
    %3004 = vmatpush1.bf16.msra.mxu0 %v1795
    %3005 = vmatprep.subr.bf16.mxu0 %v1804
    %3006 = vmatpush1.bf16.msra.mxu0 %v1803
    %3007 = vmatprep.subr.bf16.mxu0 %v1812
    %3008 = vmatpush1.bf16.msra.mxu0 %v1811
    %3009 = vmatprep.subr.bf16.mxu0 %v1820
    %3010 = vmatpush1.bf16.msra.mxu0 %v1819
    %3011 = vmatprep.subr.bf16.mxu0 %v1828
    %3012 = vmatpush1.bf16.msra.mxu0 %v1827
    %3013 = vmatprep.mubr.bf16.mxu0 %v85
    %3014 = vmatmul.mubr.bf16.gmra.mrb[0].mxu0 %v84
    %v3015 = vpop.f32.mrb[0].mxu0
    %v3016 = vadd.f32 %v512, %v3015
    %v3017 = vpop.f32.mrb[0].mxu0
    %v3018 = vadd.f32 %v516, %v3017
    %v3019 = vpop.f32.mrb[0].mxu0
    %v3020 = vpop.f32.mrb[0].mxu0
    %3021 = vdwg.mxu0
    %3022 = vmatprep.subr.bf16.mxu0 %v1836
    %3023 = vmatpush1.bf16.msra.mxu0 %v1835
    %3024 = vmatprep.subr.bf16.mxu0 %v1844
    %3025 = vmatpush1.bf16.msra.mxu0 %v1843
    %3026 = vmatprep.subr.bf16.mxu0 %v1852
    %3027 = vmatpush1.bf16.msra.mxu0 %v1851
    %3028 = vmatprep.subr.bf16.mxu0 %v1860
    %3029 = vmatpush1.bf16.msra.mxu0 %v1859
    %3030 = vmatprep.subr.bf16.mxu0 %v1868
    %3031 = vmatpush1.bf16.msra.mxu0 %v1867
    %3032 = vmatprep.subr.bf16.mxu0 %v1876
    %3033 = vmatpush1.bf16.msra.mxu0 %v1875
    %3034 = vmatprep.subr.bf16.mxu0 %v1884
    %3035 = vmatpush1.bf16.msra.mxu0 %v1883
    %3036 = vmatprep.subr.bf16.mxu0 %v1892
    %3037 = vmatpush1.bf16.msra.mxu0 %v1891
    %3038 = vmatprep.subr.bf16.mxu0 %v1900
    %3039 = vmatpush1.bf16.msra.mxu0 %v1899
    %3040 = vmatprep.subr.bf16.mxu0 %v1908
    %3041 = vmatpush1.bf16.msra.mxu0 %v1907
    %3042 = vmatprep.subr.bf16.mxu0 %v1916
    %3043 = vmatpush1.bf16.msra.mxu0 %v1915
    %3044 = vmatprep.subr.bf16.mxu0 %v1924
    %3045 = vmatpush1.bf16.msra.mxu0 %v1923
    %3046 = vmatprep.subr.bf16.mxu0 %v1932
    %3047 = vmatpush1.bf16.msra.mxu0 %v1931
    %3048 = vmatprep.subr.bf16.mxu0 %v1940
    %3049 = vmatpush1.bf16.msra.mxu0 %v1939
    %3050 = vmatprep.subr.bf16.mxu0 %v1948
    %3051 = vmatpush1.bf16.msra.mxu0 %v1947
    %3052 = vmatprep.subr.bf16.mxu0 %v1956
    %3053 = vmatpush1.bf16.msra.mxu0 %v1955
    %3054 = vmatprep.mubr.bf16.mxu0 %v87
    %3055 = vmatmul.mubr.bf16.gmra.mrb[0].mxu0 %v86
    %v3056 = vpop.f32.mrb[0].mxu0
    %v3057 = vadd.f32 %v3016, %v3056
    %v3058 = vpop.f32.mrb[0].mxu0
    %v3059 = vadd.f32 %v3018, %v3058
    %v3060 = vpop.f32.mrb[0].mxu0
    %v3061 = vpop.f32.mrb[0].mxu0
    %3062 = vdwg.mxu0
    %3063 = vmatprep.subr.bf16.mxu0 %v1964
    %3064 = vmatpush1.bf16.msra.mxu0 %v1963
    %3065 = vmatprep.subr.bf16.mxu0 %v1972
    %3066 = vmatpush1.bf16.msra.mxu0 %v1971
    %3067 = vmatprep.subr.bf16.mxu0 %v1980
    %3068 = vmatpush1.bf16.msra.mxu0 %v1979
    %3069 = vmatprep.subr.bf16.mxu0 %v1988
    %3070 = vmatpush1.bf16.msra.mxu0 %v1987
    %3071 = vmatprep.subr.bf16.mxu0 %v1996
    %3072 = vmatpush1.bf16.msra.mxu0 %v1995
    %3073 = vmatprep.subr.bf16.mxu0 %v2004
    %3074 = vmatpush1.bf16.msra.mxu0 %v2003
    %3075 = vmatprep.subr.bf16.mxu0 %v2012
    %3076 = vmatpush1.bf16.msra.mxu0 %v2011
    %3077 = vmatprep.subr.bf16.mxu0 %v2020
    %3078 = vmatpush1.bf16.msra.mxu0 %v2019
    %3079 = vmatprep.subr.bf16.mxu0 %v2028
    %3080 = vmatpush1.bf16.msra.mxu0 %v2027
    %3081 = vmatprep.subr.bf16.mxu0 %v2036
    %3082 = vmatpush1.bf16.msra.mxu0 %v2035
    %3083 = vmatprep.subr.bf16.mxu0 %v2044
    %3084 = vmatpush1.bf16.msra.mxu0 %v2043
    %3085 = vmatprep.subr.bf16.mxu0 %v2052
    %3086 = vmatpush1.bf16.msra.mxu0 %v2051
    %3087 = vmatprep.subr.bf16.mxu0 %v2060
    %3088 = vmatpush1.bf16.msra.mxu0 %v2059
    %3089 = vmatprep.subr.bf16.mxu0 %v2068
    %3090 = vmatpush1.bf16.msra.mxu0 %v2067
    %3091 = vmatprep.subr.bf16.mxu0 %v2076
    %3092 = vmatpush1.bf16.msra.mxu0 %v2075
    %3093 = vmatprep.subr.bf16.mxu0 %v2084
    %3094 = vmatpush1.bf16.msra.mxu0 %v2083
    %3095 = vmatprep.mubr.bf16.mxu0 %v89
    %3096 = vmatmul.mubr.bf16.gmra.mrb[0].mxu0 %v88
    %v3097 = vpop.f32.mrb[0].mxu0
    %v3098 = vadd.f32 %v3057, %v3097
    %v3099 = vpop.f32.mrb[0].mxu0
    %v3100 = vadd.f32 %v3059, %v3099
    %v3101 = vpop.f32.mrb[0].mxu0
    %v3102 = vpop.f32.mrb[0].mxu0
    %3103 = vdwg.mxu0
    %3104 = vmatprep.subr.bf16.mxu0 %v2092
    %3105 = vmatpush1.bf16.msra.mxu0 %v2091
    %3106 = vmatprep.subr.bf16.mxu0 0
    %3107 = vmatpush1.bf16.msra.mxu0 0
    %3108 = vmatprep.subr.bf16.mxu0 0
    %3109 = vmatpush1.bf16.msra.mxu0 0
    %3110 = vmatprep.subr.bf16.mxu0 0
    %3111 = vmatpush1.bf16.msra.mxu0 0
    %3112 = vmatprep.subr.bf16.mxu0 0
    %3113 = vmatpush1.bf16.msra.mxu0 0
    %3114 = vmatprep.subr.bf16.mxu0 0
    %3115 = vmatpush1.bf16.msra.mxu0 0
    %3116 = vmatprep.subr.bf16.mxu0 0
    %3117 = vmatpush1.bf16.msra.mxu0 0
    %3118 = vmatprep.subr.bf16.mxu0 0
    %3119 = vmatpush1.bf16.msra.mxu0 0
    %3120 = vmatprep.subr.bf16.mxu0 0
    %3121 = vmatpush1.bf16.msra.mxu0 0
    %3122 = vmatprep.subr.bf16.mxu0 0
    %3123 = vmatpush1.bf16.msra.mxu0 0
    %3124 = vmatprep.subr.bf16.mxu0 0
    %3125 = vmatpush1.bf16.msra.mxu0 0
    %3126 = vmatprep.subr.bf16.mxu0 0
    %3127 = vmatpush1.bf16.msra.mxu0 0
    %3128 = vmatprep.subr.bf16.mxu0 0
    %3129 = vmatpush1.bf16.msra.mxu0 0
    %3130 = vmatprep.subr.bf16.mxu0 0
    %3131 = vmatpush1.bf16.msra.mxu0 0
    %3132 = vmatprep.subr.bf16.mxu0 0
    %3133 = vmatpush1.bf16.msra.mxu0 0
    %3134 = vmatprep.subr.bf16.mxu0 0
    %3135 = vmatpush1.bf16.msra.mxu0 0
    %3136 = vmatprep.mubr.bf16.mxu0 0
    %3137 = vmatmul.mubr.bf16.gmra.mrb[0].mxu0 %v2487
    %v3138 = vpop.f32.mrb[0].mxu0
    %v3139 = vadd.f32 %v3098, %v3138
    %v3140 = vpop.f32.mrb[0].mxu0
    %v3141 = vadd.f32 %v3100, %v3140
    %v3142 = vpop.f32.mrb[0].mxu0
    %v3143 = vpop.f32.mrb[0].mxu0
    %3144 = vdwg.mxu0
    %v3145 = vmax.f32 %v2647, 0.0
    %v3146 = vmax.f32 %v2649, 0.0
    %v3147 = vmax.f32 %v2811, 0.0
    %v3148 = vmax.f32 %v2813, 0.0
    %v3149 = vmax.f32 %v2975, 0.0
    %v3150 = vmax.f32 %v2977, 0.0
    %v3151 = vmax.f32 %v3139, 0.0
    %v3152 = vmax.f32 %v3141, 0.0
    %v3153 = vpack.c.bf16 %v3145, %v3145
    %v3154 = vpack.c.bf16 %v3146, %v3146
    %v3155 = vpack.c.bf16 %v3147, %v3147
    %v3156 = vpack.c.bf16 %v3148, %v3148
    %v3157 = vpack.c.bf16 %v3149, %v3149
    %v3158 = vpack.c.bf16 %v3150, %v3150
    %v3159 = vpack.c.bf16 %v3151, %v3151
    %v3160 = vpack.c.bf16 %v3152, %v3152
    %v3161 = vld [vmem:[%s3] sm:$0xf]
    %v3162 = vld [vmem:[%s3 + $0x4] sm:$0xf]
    %v3163 = vld [vmem:[%s3 + $0x8] sm:$0xf]
    %v3164 = vld [vmem:[%s3 + $0xc] sm:$0xf]
    %v3165 = vld [vmem:[%s3 + $0x10] sm:$0xf]
    %v3166 = vld [vmem:[%s3 + $0x14] sm:$0xf]
    %v3167 = vld [vmem:[%s3 + $0x18] sm:$0xf]
    %v3168 = vld [vmem:[%s3 + $0x1c] sm:$0xf]
    %v3169 = vld [vmem:[%s3 + $0x20] sm:$0xf]
    %v3170 = vld [vmem:[%s3 + $0x24] sm:$0xf]
    %v3171 = vld [vmem:[%s3 + $0x28] sm:$0xf]
    %v3172 = vld [vmem:[%s3 + $0x2c] sm:$0xf]
    %v3173 = vld [vmem:[%s3 + $0x30] sm:$0xf]
    %v3174 = vld [vmem:[%s3 + $0x34] sm:$0xf]
    %v3175 = vld [vmem:[%s3 + $0x38] sm:$0xf]
    %v3176 = vld [vmem:[%s3 + $0x3c] sm:$0xf]
    %v3177 = vld [vmem:[%s3 + $0x40] sm:$0xf]
    %v3178 = vld [vmem:[%s3 + $0x44] sm:$0xf]
    %v3179 = vld [vmem:[%s3 + $0x48] sm:$0xf]
    %v3180 = vld [vmem:[%s3 + $0x4c] sm:$0xf]
    %v3181 = vld [vmem:[%s3 + $0x50] sm:$0xf]
    %v3182 = vld [vmem:[%s3 + $0x54] sm:$0xf]
    %v3183 = vld [vmem:[%s3 + $0x58] sm:$0xf]
    %v3184 = vld [vmem:[%s3 + $0x5c] sm:$0xf]
    %v3185 = vld [vmem:[%s3 + $0x60] sm:$0xf]
    %v3186 = vld [vmem:[%s3 + $0x64] sm:$0xf]
    %v3187 = vld [vmem:[%s3 + $0x68] sm:$0xf]
    %v3188 = vld [vmem:[%s3 + $0x6c] sm:$0xf]
    %v3189 = vld [vmem:[%s3 + $0x70] sm:$0xf]
    %v3190 = vld [vmem:[%s3 + $0x74] sm:$0xf]
    %v3191 = vld [vmem:[%s3 + $0x78] sm:$0xf]
    %v3192 = vld [vmem:[%s3 + $0x7c] sm:$0xf]
    %v3193 = vld [vmem:[%s3 + $0x80] sm:$0xf]
    %v3194 = vld [vmem:[%s3 + $0x84] sm:$0xf]
    %v3195 = vld [vmem:[%s3 + $0x88] sm:$0xf]
    %v3196 = vld [vmem:[%s3 + $0x8c] sm:$0xf]
    %v3197 = vld [vmem:[%s3 + $0x90] sm:$0xf]
    %v3198 = vld [vmem:[%s3 + $0x94] sm:$0xf]
    %v3199 = vld [vmem:[%s3 + $0x98] sm:$0xf]
    %v3200 = vld [vmem:[%s3 + $0x9c] sm:$0xf]
    %v3201 = vld [vmem:[%s3 + $0xa0] sm:$0xf]
    %v3202 = vld [vmem:[%s3 + $0xa4] sm:$0xf]
    %v3203 = vld [vmem:[%s3 + $0xa8] sm:$0xf]
    %v3204 = vld [vmem:[%s3 + $0xac] sm:$0xf]
    %v3205 = vld [vmem:[%s3 + $0xb0] sm:$0xf]
    %v3206 = vld [vmem:[%s3 + $0xb4] sm:$0xf]
    %v3207 = vld [vmem:[%s3 + $0xb8] sm:$0xf]
    %v3208 = vld [vmem:[%s3 + $0xbc] sm:$0xf]
    %v3209 = vld [vmem:[%s3 + $0xc0] sm:$0xf]
    %v3210 = vld [vmem:[%s3 + $0xc4] sm:$0xf]
    %v3211 = vld [vmem:[%s3 + $0xc8] sm:$0xf]
    %v3212 = vld [vmem:[%s3 + $0xcc] sm:$0xf]
    %v3213 = vld [vmem:[%s3 + $0xd0] sm:$0xf]
    %v3214 = vld [vmem:[%s3 + $0xd4] sm:$0xf]
    %v3215 = vld [vmem:[%s3 + $0xd8] sm:$0xf]
    %v3216 = vld [vmem:[%s3 + $0xdc] sm:$0xf]
    %v3217 = vld [vmem:[%s3 + $0xe0] sm:$0xf]
    %v3218 = vld [vmem:[%s3 + $0xe4] sm:$0xf]
    %v3219 = vld [vmem:[%s3 + $0xe8] sm:$0xf]
    %v3220 = vld [vmem:[%s3 + $0xec] sm:$0xf]
    %v3221 = vld [vmem:[%s3 + $0xf0] sm:$0xf]
    %v3222 = vld [vmem:[%s3 + $0xf4] sm:$0xf]
    %v3223 = vld [vmem:[%s3 + $0xf8] sm:$0xf]
    %v3224 = vld [vmem:[%s3 + $0xfc] sm:$0xf]
    %v3225 = vld [vmem:[%s3 + $0x100] sm:$0xf]
    %v3226 = vld [vmem:[%s3 + $0x104] sm:$0xf]
    %v3227 = vld [vmem:[%s3 + $0x108] sm:$0xf]
    %v3228 = vld [vmem:[%s3 + $0x10c] sm:$0xf]
    %v3229 = vld [vmem:[%s3 + $0x110] sm:$0xf]
    %v3230 = vld [vmem:[%s3 + $0x114] sm:$0xf]
    %v3231 = vld [vmem:[%s3 + $0x118] sm:$0xf]
    %v3232 = vld [vmem:[%s3 + $0x11c] sm:$0xf]
    %v3233 = vld [vmem:[%s3 + $0x120] sm:$0xf]
    %v3234 = vld [vmem:[%s3 + $0x124] sm:$0xf]
    %v3235 = vld [vmem:[%s3 + $0x128] sm:$0xf]
    %v3236 = vld [vmem:[%s3 + $0x12c] sm:$0xf]
    %v3237 = vld [vmem:[%s3 + $0x130] sm:$0xf]
    %v3238 = vld [vmem:[%s3 + $0x134] sm:$0xf]
    %v3239 = vld [vmem:[%s3 + $0x138] sm:$0xf]
    %v3240 = vld [vmem:[%s3 + $0x13c] sm:$0xf]
    %v3241 = vld [vmem:[%s3 + $0x140] sm:$0xf]
    %v3242 = vld [vmem:[%s3 + $0x144] sm:$0xf]
    %v3243 = vld [vmem:[%s3 + $0x148] sm:$0xf]
    %v3244 = vld [vmem:[%s3 + $0x14c] sm:$0xf]
    %v3245 = vld [vmem:[%s3 + $0x150] sm:$0xf]
    %v3246 = vld [vmem:[%s3 + $0x154] sm:$0xf]
    %v3247 = vld [vmem:[%s3 + $0x158] sm:$0xf]
    %v3248 = vld [vmem:[%s3 + $0x15c] sm:$0xf]
    %v3249 = vld [vmem:[%s3 + $0x160] sm:$0xf]
    %v3250 = vld [vmem:[%s3 + $0x164] sm:$0xf]
    %v3251 = vld [vmem:[%s3 + $0x168] sm:$0xf]
    %v3252 = vld [vmem:[%s3 + $0x16c] sm:$0xf]
    %v3253 = vld [vmem:[%s3 + $0x170] sm:$0xf]
    %v3254 = vld [vmem:[%s3 + $0x174] sm:$0xf]
    %v3255 = vld [vmem:[%s3 + $0x178] sm:$0xf]
    %v3256 = vld [vmem:[%s3 + $0x17c] sm:$0xf]
    %v3257 = vld [vmem:[%s3 + $0x180] sm:$0xf]
    %v3258 = vld [vmem:[%s3 + $0x184] sm:$0xf]
    %v3259 = vld [vmem:[%s3 + $0x188] sm:$0xf]
    %v3260 = vld [vmem:[%s3 + $0x18c] sm:$0xf]
    %v3261 = vld [vmem:[%s3 + $0x190] sm:$0xf]
    %v3262 = vld [vmem:[%s3 + $0x194] sm:$0xf]
    %v3263 = vld [vmem:[%s3 + $0x198] sm:$0xf]
    %v3264 = vld [vmem:[%s3 + $0x19c] sm:$0xf]
    %v3265 = vld [vmem:[%s3 + $0x1a0] sm:$0xf]
    %v3266 = vld [vmem:[%s3 + $0x1a4] sm:$0xf]
    %v3267 = vld [vmem:[%s3 + $0x1a8] sm:$0xf]
    %v3268 = vld [vmem:[%s3 + $0x1ac] sm:$0xf]
    %v3269 = vld [vmem:[%s3 + $0x1b0] sm:$0xf]
    %v3270 = vld [vmem:[%s3 + $0x1b4] sm:$0xf]
    %v3271 = vld [vmem:[%s3 + $0x1b8] sm:$0xf]
    %v3272 = vld [vmem:[%s3 + $0x1bc] sm:$0xf]
    %v3273 = vld [vmem:[%s3 + $0x1c0] sm:$0xf]
    %v3274 = vld [vmem:[%s3 + $0x1c4] sm:$0xf]
    %v3275 = vld [vmem:[%s3 + $0x1c8] sm:$0xf]
    %v3276 = vld [vmem:[%s3 + $0x1cc] sm:$0xf]
    %v3277 = vld [vmem:[%s3 + $0x1d0] sm:$0xf]
    %v3278 = vld [vmem:[%s3 + $0x1d4] sm:$0xf]
    %v3279 = vld [vmem:[%s3 + $0x1d8] sm:$0xf]
    %v3280 = vld [vmem:[%s3 + $0x1dc] sm:$0xf]
    %v3281 = vld [vmem:[%s3 + $0x1e0] sm:$0xf]
    %v3282 = vld [vmem:[%s3 + $0x1e4] sm:$0xf]
    %v3283 = vld [vmem:[%s3 + $0x1e8] sm:$0xf]
    %v3284 = vld [vmem:[%s3 + $0x1ec] sm:$0xf]
    %v3285 = vld [vmem:[%s3 + $0x1f0] sm:$0xf]
    %v3286 = vld [vmem:[%s3 + $0x1f4] sm:$0xf]
    %v3287 = vld [vmem:[%s3 + $0x1f8] sm:$0xf]
    %v3288 = vld [vmem:[%s3 + $0x1fc] sm:$0xf]
    %v3289 = vld [vmem:[#allocation7] sm:$0x1]
    %v3291 = vlaneseq
    %v3292 = vshrl.u32 %v3291, 7
    %v3293 = vsub.s32 0, %v3292
    %v3294 = vrot.slane %v3289, %v3293
    %v3424 = vunpack.c.l.b16 %v3161
    %v3425 = vunpack.c.l.b16 %v3162
    %v3426 = vunpack.c.l.b16 %v3163
    %v3427 = vunpack.c.l.b16 %v3164
    %v3428 = vunpack.c.l.b16 %v3165
    %v3429 = vunpack.c.l.b16 %v3166
    %v3430 = vunpack.c.l.b16 %v3167
    %v3431 = vunpack.c.l.b16 %v3168
    %v3432 = vunpack.c.l.b16 %v3169
    %v3433 = vunpack.c.l.b16 %v3170
    %v3434 = vunpack.c.l.b16 %v3171
    %v3435 = vunpack.c.l.b16 %v3172
    %v3436 = vunpack.c.l.b16 %v3173
    %v3437 = vunpack.c.l.b16 %v3174
    %v3438 = vunpack.c.l.b16 %v3175
    %v3439 = vunpack.c.l.b16 %v3176
    %v3440 = vunpack.c.l.b16 %v3177
    %v3441 = vunpack.c.l.b16 %v3178
    %v3442 = vunpack.c.l.b16 %v3179
    %v3443 = vunpack.c.l.b16 %v3180
    %v3444 = vunpack.c.l.b16 %v3181
    %v3445 = vunpack.c.l.b16 %v3182
    %v3446 = vunpack.c.l.b16 %v3183
    %v3447 = vunpack.c.l.b16 %v3184
    %v3448 = vunpack.c.l.b16 %v3185
    %v3449 = vunpack.c.l.b16 %v3186
    %v3450 = vunpack.c.l.b16 %v3187
    %v3451 = vunpack.c.l.b16 %v3188
    %v3452 = vunpack.c.l.b16 %v3189
    %v3453 = vunpack.c.l.b16 %v3190
    %v3454 = vunpack.c.l.b16 %v3191
    %v3455 = vunpack.c.l.b16 %v3192
    %v3456 = vunpack.c.l.b16 %v3193
    %v3457 = vunpack.c.l.b16 %v3194
    %v3458 = vunpack.c.l.b16 %v3195
    %v3459 = vunpack.c.l.b16 %v3196
    %v3460 = vunpack.c.l.b16 %v3197
    %v3461 = vunpack.c.l.b16 %v3198
    %v3462 = vunpack.c.l.b16 %v3199
    %v3463 = vunpack.c.l.b16 %v3200
    %v3464 = vunpack.c.l.b16 %v3201
    %v3465 = vunpack.c.l.b16 %v3202
    %v3466 = vunpack.c.l.b16 %v3203
    %v3467 = vunpack.c.l.b16 %v3204
    %v3468 = vunpack.c.l.b16 %v3205
    %v3469 = vunpack.c.l.b16 %v3206
    %v3470 = vunpack.c.l.b16 %v3207
    %v3471 = vunpack.c.l.b16 %v3208
    %v3472 = vunpack.c.l.b16 %v3209
    %v3473 = vunpack.c.l.b16 %v3210
    %v3474 = vunpack.c.l.b16 %v3211
    %v3475 = vunpack.c.l.b16 %v3212
    %v3476 = vunpack.c.l.b16 %v3213
    %v3477 = vunpack.c.l.b16 %v3214
    %v3478 = vunpack.c.l.b16 %v3215
    %v3479 = vunpack.c.l.b16 %v3216
    %v3480 = vunpack.c.l.b16 %v3217
    %v3481 = vunpack.c.l.b16 %v3218
    %v3482 = vunpack.c.l.b16 %v3219
    %v3483 = vunpack.c.l.b16 %v3220
    %v3484 = vunpack.c.l.b16 %v3221
    %v3485 = vunpack.c.l.b16 %v3222
    %v3486 = vunpack.c.l.b16 %v3223
    %v3487 = vunpack.c.l.b16 %v3224
    %v3488 = vunpack.c.l.b16 %v3225
    %v3489 = vunpack.c.l.b16 %v3226
    %v3490 = vunpack.c.l.b16 %v3227
    %v3491 = vunpack.c.l.b16 %v3228
    %v3492 = vunpack.c.l.b16 %v3229
    %v3493 = vunpack.c.l.b16 %v3230
    %v3494 = vunpack.c.l.b16 %v3231
    %v3495 = vunpack.c.l.b16 %v3232
    %v3496 = vunpack.c.l.b16 %v3233
    %v3497 = vunpack.c.l.b16 %v3234
    %v3498 = vunpack.c.l.b16 %v3235
    %v3499 = vunpack.c.l.b16 %v3236
    %v3500 = vunpack.c.l.b16 %v3237
    %v3501 = vunpack.c.l.b16 %v3238
    %v3502 = vunpack.c.l.b16 %v3239
    %v3503 = vunpack.c.l.b16 %v3240
    %v3504 = vunpack.c.l.b16 %v3241
    %v3505 = vunpack.c.l.b16 %v3242
    %v3506 = vunpack.c.l.b16 %v3243
    %v3507 = vunpack.c.l.b16 %v3244
    %v3508 = vunpack.c.l.b16 %v3245
    %v3509 = vunpack.c.l.b16 %v3246
    %v3510 = vunpack.c.l.b16 %v3247
    %v3511 = vunpack.c.l.b16 %v3248
    %v3512 = vunpack.c.l.b16 %v3249
    %v3513 = vunpack.c.l.b16 %v3250
    %v3514 = vunpack.c.l.b16 %v3251
    %v3515 = vunpack.c.l.b16 %v3252
    %v3516 = vunpack.c.l.b16 %v3253
    %v3517 = vunpack.c.l.b16 %v3254
    %v3518 = vunpack.c.l.b16 %v3255
    %v3519 = vunpack.c.l.b16 %v3256
    %v3520 = vunpack.c.l.b16 %v3257
    %v3521 = vunpack.c.l.b16 %v3258
    %v3522 = vunpack.c.l.b16 %v3259
    %v3523 = vunpack.c.l.b16 %v3260
    %v3524 = vunpack.c.l.b16 %v3261
    %v3525 = vunpack.c.l.b16 %v3262
    %v3526 = vunpack.c.l.b16 %v3263
    %v3527 = vunpack.c.l.b16 %v3264
    %v3528 = vunpack.c.l.b16 %v3265
    %v3529 = vunpack.c.l.b16 %v3266
    %v3530 = vunpack.c.l.b16 %v3267
    %v3531 = vunpack.c.l.b16 %v3268
    %v3532 = vunpack.c.l.b16 %v3269
    %v3533 = vunpack.c.l.b16 %v3270
    %v3534 = vunpack.c.l.b16 %v3271
    %v3535 = vunpack.c.l.b16 %v3272
    %v3536 = vunpack.c.l.b16 %v3273
    %v3537 = vunpack.c.l.b16 %v3274
    %v3538 = vunpack.c.l.b16 %v3275
    %v3539 = vunpack.c.l.b16 %v3276
    %v3540 = vunpack.c.l.b16 %v3277
    %v3541 = vunpack.c.l.b16 %v3278
    %v3542 = vunpack.c.l.b16 %v3279
    %v3543 = vunpack.c.l.b16 %v3280
    %v3544 = vunpack.c.l.b16 %v3281
    %v3545 = vunpack.c.l.b16 %v3282
    %v3546 = vunpack.c.l.b16 %v3283
    %v3547 = vunpack.c.l.b16 %v3284
    %v3548 = vunpack.c.l.b16 %v3285
    %v3549 = vunpack.c.l.b16 %v3286
    %v3550 = vunpack.c.l.b16 %v3287
    %v3551 = vunpack.c.l.b16 %v3288
    %v3552 = vpack.c.b16 %v3425, %v3424
    %v3553 = vpack.c.b16 %v3427, %v3426
    %v3554 = vpack.c.b16 %v3429, %v3428
    %v3555 = vpack.c.b16 %v3431, %v3430
    %v3556 = vpack.c.b16 %v3433, %v3432
    %v3557 = vpack.c.b16 %v3435, %v3434
    %v3558 = vpack.c.b16 %v3437, %v3436
    %v3559 = vpack.c.b16 %v3439, %v3438
    %v3560 = vpack.c.b16 %v3441, %v3440
    %v3561 = vpack.c.b16 %v3443, %v3442
    %v3562 = vpack.c.b16 %v3445, %v3444
    %v3563 = vpack.c.b16 %v3447, %v3446
    %v3564 = vpack.c.b16 %v3449, %v3448
    %v3565 = vpack.c.b16 %v3451, %v3450
    %v3566 = vpack.c.b16 %v3453, %v3452
    %v3567 = vpack.c.b16 %v3455, %v3454
    %v3568 = vpack.c.b16 %v3457, %v3456
    %v3569 = vpack.c.b16 %v3459, %v3458
    %v3570 = vpack.c.b16 %v3461, %v3460
    %v3571 = vpack.c.b16 %v3463, %v3462
    %v3572 = vpack.c.b16 %v3465, %v3464
    %v3573 = vpack.c.b16 %v3467, %v3466
    %v3574 = vpack.c.b16 %v3469, %v3468
    %v3575 = vpack.c.b16 %v3471, %v3470
    %v3576 = vpack.c.b16 %v3473, %v3472
    %v3577 = vpack.c.b16 %v3475, %v3474
    %v3578 = vpack.c.b16 %v3477, %v3476
    %v3579 = vpack.c.b16 %v3479, %v3478
    %v3580 = vpack.c.b16 %v3481, %v3480
    %v3581 = vpack.c.b16 %v3483, %v3482
    %v3582 = vpack.c.b16 %v3485, %v3484
    %v3583 = vpack.c.b16 %v3487, %v3486
    %v3584 = vpack.c.b16 %v3489, %v3488
    %v3585 = vpack.c.b16 %v3491, %v3490
    %v3586 = vpack.c.b16 %v3493, %v3492
    %v3587 = vpack.c.b16 %v3495, %v3494
    %v3588 = vpack.c.b16 %v3497, %v3496
    %v3589 = vpack.c.b16 %v3499, %v3498
    %v3590 = vpack.c.b16 %v3501, %v3500
    %v3591 = vpack.c.b16 %v3503, %v3502
    %v3592 = vpack.c.b16 %v3505, %v3504
    %v3593 = vpack.c.b16 %v3507, %v3506
    %v3594 = vpack.c.b16 %v3509, %v3508
    %v3595 = vpack.c.b16 %v3511, %v3510
    %v3596 = vpack.c.b16 %v3513, %v3512
    %v3597 = vpack.c.b16 %v3515, %v3514
    %v3598 = vpack.c.b16 %v3517, %v3516
    %v3599 = vpack.c.b16 %v3519, %v3518
    %v3600 = vpack.c.b16 %v3521, %v3520
    %v3601 = vpack.c.b16 %v3523, %v3522
    %v3602 = vpack.c.b16 %v3525, %v3524
    %v3603 = vpack.c.b16 %v3527, %v3526
    %v3604 = vpack.c.b16 %v3529, %v3528
    %v3605 = vpack.c.b16 %v3531, %v3530
    %v3606 = vpack.c.b16 %v3533, %v3532
    %v3607 = vpack.c.b16 %v3535, %v3534
    %v3608 = vpack.c.b16 %v3537, %v3536
    %v3609 = vpack.c.b16 %v3539, %v3538
    %v3610 = vpack.c.b16 %v3541, %v3540
    %v3611 = vpack.c.b16 %v3543, %v3542
    %v3612 = vpack.c.b16 %v3545, %v3544
    %v3613 = vpack.c.b16 %v3547, %v3546
    %v3614 = vpack.c.b16 %v3549, %v3548
    %v3615 = vpack.c.b16 %v3551, %v3550
    %3680 = vmatprep.subr.bf16.mxu0 0
    %3681 = vmatpush1.bf16.msra.mxu0 %v3552
    %3682 = vmatprep.subr.bf16.mxu0 0
    %3683 = vmatpush1.bf16.msra.mxu0 %v3553
    %3684 = vmatprep.subr.bf16.mxu0 0
    %3685 = vmatpush1.bf16.msra.mxu0 %v3554
    %3686 = vmatprep.subr.bf16.mxu0 0
    %3687 = vmatpush1.bf16.msra.mxu0 %v3555
    %3688 = vmatprep.subr.bf16.mxu0 0
    %3689 = vmatpush1.bf16.msra.mxu0 %v3556
    %3690 = vmatprep.subr.bf16.mxu0 0
    %3691 = vmatpush1.bf16.msra.mxu0 %v3557
    %3692 = vmatprep.subr.bf16.mxu0 0
    %3693 = vmatpush1.bf16.msra.mxu0 %v3558
    %3694 = vmatprep.subr.bf16.mxu0 0
    %3695 = vmatpush1.bf16.msra.mxu0 %v3559
    %3696 = vmatprep.subr.bf16.mxu0 0
    %3697 = vmatpush1.bf16.msra.mxu0 %v3560
    %3698 = vmatprep.subr.bf16.mxu0 0
    %3699 = vmatpush1.bf16.msra.mxu0 %v3561
    %3700 = vmatprep.subr.bf16.mxu0 0
    %3701 = vmatpush1.bf16.msra.mxu0 %v3562
    %3702 = vmatprep.subr.bf16.mxu0 0
    %3703 = vmatpush1.bf16.msra.mxu0 %v3563
    %3704 = vmatprep.subr.bf16.mxu0 0
    %3705 = vmatpush1.bf16.msra.mxu0 %v3564
    %3706 = vmatprep.subr.bf16.mxu0 0
    %3707 = vmatpush1.bf16.msra.mxu0 %v3565
    %3708 = vmatprep.subr.bf16.mxu0 0
    %3709 = vmatpush1.bf16.msra.mxu0 %v3566
    %3710 = vmatprep.subr.bf16.mxu0 0
    %3711 = vmatpush1.bf16.msra.mxu0 %v3567
    %3712 = vmatprep.mubr.bf16.mxu0 %v3154
    %3713 = vmatmul.mubr.bf16.gmra.mrb[0].mxu0 %v3153
    %v3714 = vpop.f32.mrb[0].mxu0
    %v3715 = vadd.f32 %v3294, %v3714
    %v3716 = vpop.f32.mrb[0].mxu0
    %v3717 = vpop.f32.mrb[0].mxu0
    %v3718 = vpop.f32.mrb[0].mxu0
    %3719 = vdwg.mxu0
    %3720 = vmatprep.subr.bf16.mxu0 0
    %3721 = vmatpush1.bf16.msra.mxu0 %v3568
    %3722 = vmatprep.subr.bf16.mxu0 0
    %3723 = vmatpush1.bf16.msra.mxu0 %v3569
    %3724 = vmatprep.subr.bf16.mxu0 0
    %3725 = vmatpush1.bf16.msra.mxu0 %v3570
    %3726 = vmatprep.subr.bf16.mxu0 0
    %3727 = vmatpush1.bf16.msra.mxu0 %v3571
    %3728 = vmatprep.subr.bf16.mxu0 0
    %3729 = vmatpush1.bf16.msra.mxu0 %v3572
    %3730 = vmatprep.subr.bf16.mxu0 0
    %3731 = vmatpush1.bf16.msra.mxu0 %v3573
    %3732 = vmatprep.subr.bf16.mxu0 0
    %3733 = vmatpush1.bf16.msra.mxu0 %v3574
    %3734 = vmatprep.subr.bf16.mxu0 0
    %3735 = vmatpush1.bf16.msra.mxu0 %v3575
    %3736 = vmatprep.subr.bf16.mxu0 0
    %3737 = vmatpush1.bf16.msra.mxu0 %v3576
    %3738 = vmatprep.subr.bf16.mxu0 0
    %3739 = vmatpush1.bf16.msra.mxu0 %v3577
    %3740 = vmatprep.subr.bf16.mxu0 0
    %3741 = vmatpush1.bf16.msra.mxu0 %v3578
    %3742 = vmatprep.subr.bf16.mxu0 0
    %3743 = vmatpush1.bf16.msra.mxu0 %v3579
    %3744 = vmatprep.subr.bf16.mxu0 0
    %3745 = vmatpush1.bf16.msra.mxu0 %v3580
    %3746 = vmatprep.subr.bf16.mxu0 0
    %3747 = vmatpush1.bf16.msra.mxu0 %v3581
    %3748 = vmatprep.subr.bf16.mxu0 0
    %3749 = vmatpush1.bf16.msra.mxu0 %v3582
    %3750 = vmatprep.subr.bf16.mxu0 0
    %3751 = vmatpush1.bf16.msra.mxu0 %v3583
    %3752 = vmatprep.mubr.bf16.mxu0 %v3156
    %3753 = vmatmul.mubr.bf16.gmra.mrb[0].mxu0 %v3155
    %v3754 = vpop.f32.mrb[0].mxu0
    %v3755 = vadd.f32 %v3715, %v3754
    %v3756 = vpop.f32.mrb[0].mxu0
    %v3757 = vpop.f32.mrb[0].mxu0
    %v3758 = vpop.f32.mrb[0].mxu0
    %3759 = vdwg.mxu0
    %3760 = vmatprep.subr.bf16.mxu0 0
    %3761 = vmatpush1.bf16.msra.mxu0 %v3584
    %3762 = vmatprep.subr.bf16.mxu0 0
    %3763 = vmatpush1.bf16.msra.mxu0 %v3585
    %3764 = vmatprep.subr.bf16.mxu0 0
    %3765 = vmatpush1.bf16.msra.mxu0 %v3586
    %3766 = vmatprep.subr.bf16.mxu0 0
    %3767 = vmatpush1.bf16.msra.mxu0 %v3587
    %3768 = vmatprep.subr.bf16.mxu0 0
    %3769 = vmatpush1.bf16.msra.mxu0 %v3588
    %3770 = vmatprep.subr.bf16.mxu0 0
    %3771 = vmatpush1.bf16.msra.mxu0 %v3589
    %3772 = vmatprep.subr.bf16.mxu0 0
    %3773 = vmatpush1.bf16.msra.mxu0 %v3590
    %3774 = vmatprep.subr.bf16.mxu0 0
    %3775 = vmatpush1.bf16.msra.mxu0 %v3591
    %3776 = vmatprep.subr.bf16.mxu0 0
    %3777 = vmatpush1.bf16.msra.mxu0 %v3592
    %3778 = vmatprep.subr.bf16.mxu0 0
    %3779 = vmatpush1.bf16.msra.mxu0 %v3593
    %3780 = vmatprep.subr.bf16.mxu0 0
    %3781 = vmatpush1.bf16.msra.mxu0 %v3594
    %3782 = vmatprep.subr.bf16.mxu0 0
    %3783 = vmatpush1.bf16.msra.mxu0 %v3595
    %3784 = vmatprep.subr.bf16.mxu0 0
    %3785 = vmatpush1.bf16.msra.mxu0 %v3596
    %3786 = vmatprep.subr.bf16.mxu0 0
    %3787 = vmatpush1.bf16.msra.mxu0 %v3597
    %3788 = vmatprep.subr.bf16.mxu0 0
    %3789 = vmatpush1.bf16.msra.mxu0 %v3598
    %3790 = vmatprep.subr.bf16.mxu0 0
    %3791 = vmatpush1.bf16.msra.mxu0 %v3599
    %3792 = vmatprep.mubr.bf16.mxu0 %v3158
    %3793 = vmatmul.mubr.bf16.gmra.mrb[0].mxu0 %v3157
    %v3794 = vpop.f32.mrb[0].mxu0
    %v3795 = vadd.f32 %v3755, %v3794
    %v3796 = vpop.f32.mrb[0].mxu0
    %v3797 = vpop.f32.mrb[0].mxu0
    %v3798 = vpop.f32.mrb[0].mxu0
    %3799 = vdwg.mxu0
    %3800 = vmatprep.subr.bf16.mxu0 0
    %3801 = vmatpush1.bf16.msra.mxu0 %v3600
    %3802 = vmatprep.subr.bf16.mxu0 0
    %3803 = vmatpush1.bf16.msra.mxu0 %v3601
    %3804 = vmatprep.subr.bf16.mxu0 0
    %3805 = vmatpush1.bf16.msra.mxu0 %v3602
    %3806 = vmatprep.subr.bf16.mxu0 0
    %3807 = vmatpush1.bf16.msra.mxu0 %v3603
    %3808 = vmatprep.subr.bf16.mxu0 0
    %3809 = vmatpush1.bf16.msra.mxu0 %v3604
    %3810 = vmatprep.subr.bf16.mxu0 0
    %3811 = vmatpush1.bf16.msra.mxu0 %v3605
    %3812 = vmatprep.subr.bf16.mxu0 0
    %3813 = vmatpush1.bf16.msra.mxu0 %v3606
    %3814 = vmatprep.subr.bf16.mxu0 0
    %3815 = vmatpush1.bf16.msra.mxu0 %v3607
    %3816 = vmatprep.subr.bf16.mxu0 0
    %3817 = vmatpush1.bf16.msra.mxu0 %v3608
    %3818 = vmatprep.subr.bf16.mxu0 0
    %3819 = vmatpush1.bf16.msra.mxu0 %v3609
    %3820 = vmatprep.subr.bf16.mxu0 0
    %3821 = vmatpush1.bf16.msra.mxu0 %v3610
    %3822 = vmatprep.subr.bf16.mxu0 0
    %3823 = vmatpush1.bf16.msra.mxu0 %v3611
    %3824 = vmatprep.subr.bf16.mxu0 0
    %3825 = vmatpush1.bf16.msra.mxu0 %v3612
    %3826 = vmatprep.subr.bf16.mxu0 0
    %3827 = vmatpush1.bf16.msra.mxu0 %v3613
    %3828 = vmatprep.subr.bf16.mxu0 0
    %3829 = vmatpush1.bf16.msra.mxu0 %v3614
    %3830 = vmatprep.subr.bf16.mxu0 0
    %3831 = vmatpush1.bf16.msra.mxu0 %v3615
    %3832 = vmatprep.mubr.bf16.mxu0 %v3160
    %3833 = vmatmul.mubr.bf16.gmra.mrb[0].mxu0 %v3159
    %v3834 = vpop.f32.mrb[0].mxu0
    %v3835 = vadd.f32 %v3795, %v3834
    %v3836 = vpop.f32.mrb[0].mxu0
    %v3837 = vpop.f32.mrb[0].mxu0
    %v3838 = vpop.f32.mrb[0].mxu0
    %3839 = vdwg.mxu0
    %v3840 = vmax.f32 %v3835, 0.0
    %v3841 = vpack.c.bf16 %v3840, %v3840
    %v3842 = vld [vmem:[%s5] sm:$0xf]
    %v3843 = vld [vmem:[%s5 + $0x4] sm:$0xf]
    %v3844 = vld [vmem:[%s5 + $0x8] sm:$0xf]
    %v3845 = vld [vmem:[%s5 + $0xc] sm:$0xf]
    %v3846 = vld [vmem:[%s5 + $0x10] sm:$0xf]
    %v3847 = vld [vmem:[%s5 + $0x14] sm:$0xf]
    %v3848 = vld [vmem:[%s5 + $0x18] sm:$0xf]
    %v3849 = vld [vmem:[%s5 + $0x1c] sm:$0xf]
    %v3850 = vld [vmem:[#allocation8] sm:$0x1]
    %v3852 = vlaneseq
    %v3853 = vshrl.u32 %v3852, 7
    %v3854 = vsub.s32 0, %v3853
    %v3855 = vrot.slane %v3850, %v3854
    %v3865 = vunpack.c.l.b16 %v3842
    %v3866 = vunpack.c.l.b16 %v3843
    %v3867 = vunpack.c.l.b16 %v3844
    %v3868 = vunpack.c.l.b16 %v3845
    %v3869 = vunpack.c.l.b16 %v3846
    %v3870 = vunpack.c.l.b16 %v3847
    %v3871 = vunpack.c.l.b16 %v3848
    %v3872 = vunpack.c.l.b16 %v3849
    %v3873 = vpack.c.b16 %v3866, %v3865
    %v3874 = vpack.c.b16 %v3868, %v3867
    %v3875 = vpack.c.b16 %v3870, %v3869
    %v3876 = vpack.c.b16 %v3872, %v3871
    %vm3881 = vcmask 523264
    %v3883 = vsel %vm3881, %v3841, 0
    %3885 = vmatprep.subr.bf16.mxu0 0
    %3886 = vmatpush1.bf16.msra.mxu0 %v3873
    %3887 = vmatprep.subr.bf16.mxu0 0
    %3888 = vmatpush1.bf16.msra.mxu0 %v3874
    %3889 = vmatprep.subr.bf16.mxu0 0
    %3890 = vmatpush1.bf16.msra.mxu0 %v3875
    %3891 = vmatprep.subr.bf16.mxu0 0
    %3892 = vmatpush1.bf16.msra.mxu0 %v3876
    %3893 = vmatprep.subr.bf16.mxu0 0
    %3894 = vmatpush1.bf16.msra.mxu0 0
    %3895 = vmatprep.subr.bf16.mxu0 0
    %3896 = vmatpush1.bf16.msra.mxu0 0
    %3897 = vmatprep.subr.bf16.mxu0 0
    %3898 = vmatpush1.bf16.msra.mxu0 0
    %3899 = vmatprep.subr.bf16.mxu0 0
    %3900 = vmatpush1.bf16.msra.mxu0 0
    %3901 = vmatprep.subr.bf16.mxu0 0
    %3902 = vmatpush1.bf16.msra.mxu0 0
    %3903 = vmatprep.subr.bf16.mxu0 0
    %3904 = vmatpush1.bf16.msra.mxu0 0
    %3905 = vmatprep.subr.bf16.mxu0 0
    %3906 = vmatpush1.bf16.msra.mxu0 0
    %3907 = vmatprep.subr.bf16.mxu0 0
    %3908 = vmatpush1.bf16.msra.mxu0 0
    %3909 = vmatprep.subr.bf16.mxu0 0
    %3910 = vmatpush1.bf16.msra.mxu0 0
    %3911 = vmatprep.subr.bf16.mxu0 0
    %3912 = vmatpush1.bf16.msra.mxu0 0
    %3913 = vmatprep.subr.bf16.mxu0 0
    %3914 = vmatpush1.bf16.msra.mxu0 0
    %3915 = vmatprep.subr.bf16.mxu0 0
    %3916 = vmatpush1.bf16.msra.mxu0 0
    %3917 = vmatprep.mubr.bf16.mxu0 0
    %3918 = vmatmul.mubr.bf16.gmra.mrb[0].mxu0 %v3883
    %v3919 = vpop.f32.mrb[0].mxu0
    %v3920 = vadd.f32 %v3855, %v3919
    %v3921 = vpop.f32.mrb[0].mxu0
    %v3922 = vpop.f32.mrb[0].mxu0
    %v3923 = vpop.f32.mrb[0].mxu0
    %3924 = vdwg.mxu0
    %vm3925 = vcmask 80896
    %3926 = vst.msk [vmem:[#allocation10] sm:$0xff] %vm3925, %v3920
    // Predicated region
    $region46: #{relu_network_forward.1} parent=1 // pred_check
      _
    $region47: #{relu_network_forward.1} parent=1 // pred_check_branch
      %3928 = sbr.rel (0) target = $region49
    $region48: #{relu_network_forward.1} parent=1 // pred_region
      %s3930 = ssub.s32 128, 128
      %3931 = vsyncadd [#allocation4], %s3930
      %s3933 = sshll.u32 [#allocation10], 4
      %s3934 = int_to_ptr.vmem [resolvable:$true] %s3933
      %3936 = dma.vmem_to_hbm [thread:$0]  %s3934, 128, %s7, [#allocation4]
    $region49: #{relu_network_forward.1} parent=1 // pred_fallthru
      _
    // Predicated region
    $region50: #{relu_network_forward.1} parent=1 // pred_check
      _
    $region51: #{relu_network_forward.1} parent=1 // pred_check_branch
      %3938 = sbr.rel (0) target = $region53
    $region52: #{relu_network_forward.1} parent=1 // pred_region
      %3939 = dma.done [#allocation4], 128
    $region53: #{relu_network_forward.1} parent=1 // pred_fallthru
      _
    %3940 = vsyncpa [#allocation3], 1
    %3941 = vsyncpa [#allocation6], 1
    %3942 = vsyncpa [#allocation9], 1
    %3943 = vsyncpa [#allocation4], 1

</llo_original>
